<compile_context>
chip_gen: v5e
topology: v5e:2x2
jax: 0.10.0
libtpu: 0.0.40
codegen_flags: <defaults>
</compile_context>

<pallas_src>
import functools

import jax
import jax.numpy as jnp
from jax.experimental import pallas as pl
from jax.experimental.pallas import tpu as pltpu


def _lstm_attn_chunk_kernel(gates_x_ref, h0_ref, c0_ref, ctx_proj_ref, ctx_out_ref,
                            w_hh_ref, w_outh_ref,
                            out_ref, hT_ref, cT_ref,
                            h_scr, c_scr, *, hidden_size, chunk):
    """One CHUNK of timesteps of one LSTMAttentionDot layer.

    Grid: (batch_blocks [parallel], time_chunks [arbitrary / sequential]).
    """
    t_idx = pl.program_id(1)
    H = hidden_size

    @pl.when(t_idx == 0)
    def _():
        h_scr[...] = h0_ref[...].astype(jnp.float32)
        c_scr[...] = c0_ref[...].astype(jnp.float32)

    # Time-invariant operands: load once per chunk, reused by every unrolled step.
    ctx_proj = ctx_proj_ref[...]    # (Bblk, S, H)  ctx @ W_in        (for scores)
    ctx_out = ctx_out_ref[...]      # (Bblk, S, H)  ctx @ W_out_c^T   (for output half)
    w_hh = w_hh_ref[...]            # (H, 4H)       pre-transposed recurrent weight
    w_outh = w_outh_ref[...]        # (H, H)        pre-transposed linear_out (hy half)

    def step(i, carry):
        h, c = carry                                            # f32 (Bblk, H)

        # LSTM cell: input half of the gates was precomputed outside the kernel.
        gates = gates_x_ref[i] + jnp.dot(h.astype(w_hh.dtype), w_hh,
                                         preferred_element_type=jnp.float32)  # (Bblk, 4H)
        ingate = jax.nn.sigmoid(gates[:, 0:H])
        forgetgate = jax.nn.sigmoid(gates[:, H:2 * H])
        cellgate = jnp.tanh(gates[:, 2 * H:3 * H])
        outgate = jax.nn.sigmoid(gates[:, 3 * H:4 * H])

        cy = forgetgate * c + ingate * cellgate                 # (Bblk, H)
        hy = outgate * jnp.tanh(cy)                             # (Bblk, H)

        # SoftDotAttention on the MXU (W_in folded into ctx_proj).
        hy_q = hy.astype(ctx_proj.dtype)[:, None, :]            # (Bblk, 1, H)
        scores = jnp.einsum('bqh,bsh->bqs', hy_q, ctx_proj,
                            preferred_element_type=jnp.float32)  # (Bblk, 1, S)
        attn = jax.nn.softmax(scores, axis=-1)                  # (Bblk, 1, S)

        # weighted @ W_out_c^T  ==  attn @ (ctx @ W_out_c^T)  ==  attn @ ctx_out
        wc = jnp.einsum('bqs,bsh->bqh', attn.astype(ctx_out.dtype), ctx_out,
                        preferred_element_type=jnp.float32)[:, 0, :]  # (Bblk, H)

        # h_tilde = tanh(weighted @ W_out_c^T + hy @ W_out_h^T)  (no concat needed)
        h_tilde = jnp.tanh(wc + jnp.dot(hy.astype(w_outh.dtype), w_outh,
                                        preferred_element_type=jnp.float32))  # (Bblk, H)

        out_ref[i] = h_tilde.astype(out_ref.dtype)
        return (h_tilde, cy)

    h_fin, c_fin = jax.lax.fori_loop(
        0, chunk, step, (h_scr[...], c_scr[...]), unroll=True)

    h_scr[...] = h_fin
    c_scr[...] = c_fin

    @pl.when(t_idx == pl.num_programs(1) - 1)
    def _():
        hT_ref[...] = h_fin.astype(hT_ref.dtype)
        cT_ref[...] = c_fin.astype(cT_ref.dtype)


def _pick_time_chunk(T, target):
    c = min(T, max(1, target))
    while T % c != 0:
        c -= 1
    return c


def _prepare_layer_params(params, compute_dtype):
    """Pre-transpose nn.Linear-style weights so the kernel never does `.T`."""
    w_ih_t = jnp.asarray(params["w_ih"]).T.astype(compute_dtype)               # (D, 4H)
    w_hh_t = jnp.asarray(params["w_hh"]).T.astype(compute_dtype)               # (H, 4H)
    bias = (jnp.asarray(params["b_ih"]) + jnp.asarray(params["b_hh"])).reshape(-1)  # (4H,)
    w_in = jnp.asarray(params["w_in"]).astype(compute_dtype)                   # (H, H)
    w_out_c_t = jnp.asarray(params["w_out_c"]).T.astype(compute_dtype)         # (H, H)
    w_out_h_t = jnp.asarray(params["w_out_h"]).T.astype(compute_dtype)         # (H, H)
    return dict(w_ih_t=w_ih_t, w_hh_t=w_hh_t, bias=bias,
                w_in=w_in, w_out_c_t=w_out_c_t, w_out_h_t=w_out_h_t)


def lstm_attention_dot_layer(x_tbd, h0, c0, ctx_bsh, prepped, *, time_chunk=8):
    """x_tbd: (T, B, D); h0/c0: (B, H); ctx_bsh: (B, S, H). Returns (out, hT, cT)."""
    T, B, D = x_tbd.shape
    H = h0.shape[-1]
    S = ctx_bsh.shape[1]
    compute_dtype = prepped["w_hh_t"].dtype

    # ---- hoisted, time-invariant precompute (big MXU-friendly matmuls in XLA) ----
    # Input projection for all T timesteps at once, both biases folded in.
    gates_x = (jnp.einsum('tbd,dg->tbg', x_tbd.astype(compute_dtype),
                          prepped["w_ih_t"], preferred_element_type=jnp.float32)
               + prepped["bias"][None, None, :])                       # (T, B, 4H) f32
    ctx_c = ctx_bsh.astype(compute_dtype)                              # (B, S, H)
    # Attention linear_in folded into the context (hy @ W_in^T commutes into ctx).
    ctx_proj = jnp.einsum('bsk,kh->bsh', ctx_c, prepped["w_in"],
                          preferred_element_type=jnp.float32).astype(compute_dtype)
    # linear_out's context half folded into the context:
    #   (attn @ ctx) @ W_out_c^T == attn @ (ctx @ W_out_c^T)
    ctx_out = jnp.einsum('bsh,hj->bsj', ctx_c, prepped["w_out_c_t"],
                         preferred_element_type=jnp.float32).astype(compute_dtype)

    chunk = _pick_time_chunk(T, time_chunk)
    nt = T // chunk
    # Batch-block axis: only split when each half keeps an (8,·)-aligned sublane count.
    b_blk = B // 2 if (B % 16 == 0) else B
    nb = B // b_blk

    kernel = functools.partial(_lstm_attn_chunk_kernel, hidden_size=H, chunk=chunk)

    # NOTE: at production sizes, set vmem_limit_bytes explicitly and tile ctx_proj /
    # ctx_out over S to stay within v7x's 64 MiB VMEM.
    out_seq, hT, cT = pl.pallas_call(
        kernel,
        out_shape=(jax.ShapeDtypeStruct((T, B, H), jnp.float32),
                   jax.ShapeDtypeStruct((B, H), jnp.float32),
                   jax.ShapeDtypeStruct((B, H), jnp.float32)),
        grid=(nb, nt),
        in_specs=[
            pl.BlockSpec((chunk, b_blk, 4 * H), lambda b, t: (t, b, 0)),  # gates_x
            pl.BlockSpec((b_blk, H), lambda b, t: (b, 0)),                # h0
            pl.BlockSpec((b_blk, H), lambda b, t: (b, 0)),                # c0
            pl.BlockSpec((b_blk, S, H), lambda b, t: (b, 0, 0)),          # ctx @ W_in
            pl.BlockSpec((b_blk, S, H), lambda b, t: (b, 0, 0)),          # ctx @ W_out_c^T
            pl.BlockSpec((H, 4 * H), lambda b, t: (0, 0)),                # W_hh^T
            pl.BlockSpec((H, H), lambda b, t: (0, 0)),                    # W_out_h^T
        ],
        out_specs=(pl.BlockSpec((chunk, b_blk, H), lambda b, t: (t, b, 0)),
                   pl.BlockSpec((b_blk, H), lambda b, t: (b, 0)),
                   pl.BlockSpec((b_blk, H), lambda b, t: (b, 0))),
        scratch_shapes=[pltpu.VMEM((b_blk, H), jnp.float32),
                        pltpu.VMEM((b_blk, H), jnp.float32)],
        compiler_params=pltpu.CompilerParams(
            dimension_semantics=("parallel", "arbitrary")),
    )(gates_x, h0, c0, ctx_proj, ctx_out, prepped["w_hh_t"], prepped["w_out_h_t"])
    return out_seq, hT, cT


def stacked_attention_lstm(x, hidden, ctx, layer_params, batch_first=True,
                           time_chunk=8, compute_dtype=jnp.float32):
    """Forward pass of StackedAttentionLSTM (dropout p=0.0 => identity)."""
    # TODO(synk): ctx_mask path of the PyTorch module is not implemented (the
    # reference forward only rebuilds the mask tensor and never applies it here;
    # default call uses ctx_mask=None).
    h0, c0 = hidden
    if batch_first:
        x = jnp.transpose(x, (1, 0, 2))            # (T, B, D)
    ctx_bsh = jnp.transpose(ctx, (1, 0, 2))        # (B, S, H)

    h_list, c_list = [], []
    inp = x
    for params in layer_params:
        prepped = _prepare_layer_params(params, compute_dtype)
        out_seq, hT, cT = lstm_attention_dot_layer(
            inp, h0, c0, ctx_bsh, prepped, time_chunk=time_chunk)
        # TODO(synk): fuse consecutive layers into one kernel to avoid the per-layer
        # HBM round trip of the (T,B,H) activations; kept per-layer because the
        # hoisted input projection consumes the full previous-layer output sequence.
        inp = out_seq                               # dropout(0.0) == identity
        h_list.append(hT)
        c_list.append(cT)

    out = inp
    if batch_first:
        out = jnp.transpose(out, (1, 0, 2))        # back to (B, T, H)
    return out, (jnp.stack(h_list), jnp.stack(c_list))


def reference_forward(x, hidden, ctx, layer_params):
    """Pure-JAX reference (same math as the PyTorch module, lax.scan)."""
    h0, c0 = hidden
    x_t = jnp.transpose(x, (1, 0, 2))
    ctx_b = jnp.transpose(ctx, (1, 0, 2))
    h_list, c_list = [], []
    inp = x_t
    for p in layer_params:
        def step(carry, x_i, p=p):
            h, c = carry
            H = h.shape[-1]
            gates = (x_i @ p["w_ih"].T + p["b_ih"][0]
                     + h @ p["w_hh"].T + p["b_hh"][0])
            i = jax.nn.sigmoid(gates[:, :H])
            f = jax.nn.sigmoid(gates[:, H:2 * H])
            g = jnp.tanh(gates[:, 2 * H:3 * H])
            o = jax.nn.sigmoid(gates[:, 3 * H:])
            cy = f * c + i * g
            hy = o * jnp.tanh(cy)
            target = hy @ p["w_in"].T
            attn = jax.nn.softmax(jnp.einsum('bsh,bh->bs', ctx_b, target), axis=-1)
            weighted = jnp.einsum('bs,bsh->bh', attn, ctx_b)
            h_tilde = jnp.tanh(weighted @ p["w_out_c"].T + hy @ p["w_out_h"].T)
            return (h_tilde, cy), h_tilde
        (hT, cT), outs = jax.lax.scan(step, (h0, c0), inp)
        inp = outs
        h_list.append(hT)
        c_list.append(cT)
    return jnp.transpose(inp, (1, 0, 2)), (jnp.stack(h_list), jnp.stack(c_list))


if __name__ == "__main__":
    B, T, S = 2, 8, 8
    input_size, rnn_size, num_layers = 16, 32, 2

    keys = iter(jax.random.split(jax.random.PRNGKey(0), 64))
    x = jax.random.normal(next(keys), (B, T, input_size), jnp.float32)
    h0 = jax.random.normal(next(keys), (B, rnn_size), jnp.float32)
    c0 = jax.random.normal(next(keys), (B, rnn_size), jnp.float32)
    ctx = jax.random.normal(next(keys), (S, B, rnn_size), jnp.float32)

    # Synthetic parameters in the native nn.Linear layout (W_ih (4H,D), W_hh (4H,H),
    # attention linear_in (H,H, no bias), linear_out (H,2H, no bias) as two halves).
    layer_params = []
    d = input_size
    for _ in range(num_layers):
        p = {
            "w_ih": 0.1 * jax.random.normal(next(keys), (4 * rnn_size, d), jnp.float32),
            "b_ih": 0.1 * jax.random.normal(next(keys), (1, 4 * rnn_size), jnp.float32),
            "w_hh": 0.1 * jax.random.normal(next(keys), (4 * rnn_size, rnn_size), jnp.float32),
            "b_hh": 0.1 * jax.random.normal(next(keys), (1, 4 * rnn_size), jnp.float32),
            "w_in": 0.1 * jax.random.normal(next(keys), (rnn_size, rnn_size), jnp.float32),
            "w_out_c": 0.1 * jax.random.normal(next(keys), (rnn_size, rnn_size), jnp.float32),
            "w_out_h": 0.1 * jax.random.normal(next(keys), (rnn_size, rnn_size), jnp.float32),
        }
        layer_params.append(p)
        d = rnn_size

    out, (h1, c1) = stacked_attention_lstm(x, (h0, c0), ctx, layer_params)
    jax.block_until_ready((out, h1, c1))

    assert out.shape == (B, T, rnn_size)
    assert h1.shape == (num_layers, B, rnn_size)
    assert c1.shape == (num_layers, B, rnn_size)

    ref_out, (ref_h1, ref_c1) = reference_forward(x, (h0, c0), ctx, layer_params)
    assert jnp.allclose(out, ref_out, atol=2e-3, rtol=2e-3)
    assert jnp.allclose(h1, ref_h1, atol=2e-3, rtol=2e-3)
    assert jnp.allclose(c1, ref_c1, atol=2e-3, rtol=2e-3)

    print("KERNEL_OK")
</pallas_src>

<mosaic_0001>
module attributes {stable_mosaic.version = 11 : i64} {
  func.func @_lstm_attn_chunk_kernel(%arg0: i32, %arg1: i32, %arg2: memref<8x2x128xf32, #tpu.memory_space<vmem>>, %arg3: memref<2x32xf32, #tpu.memory_space<vmem>>, %arg4: memref<2x32xf32, #tpu.memory_space<vmem>>, %arg5: memref<2x8x32xf32, #tpu.memory_space<vmem>>, %arg6: memref<2x8x32xf32, #tpu.memory_space<vmem>>, %arg7: memref<32x128xf32, #tpu.memory_space<vmem>>, %arg8: memref<32x32xf32, #tpu.memory_space<vmem>>, %arg9: memref<8x2x32xf32, #tpu.memory_space<vmem>>, %arg10: memref<2x32xf32, #tpu.memory_space<vmem>>, %arg11: memref<2x32xf32, #tpu.memory_space<vmem>>, %arg12: memref<2x32xf32, #tpu.memory_space<vmem>>, %arg13: memref<2x32xf32, #tpu.memory_space<vmem>>) attributes {dimension_semantics = [#tpu.dimension_semantics<parallel>, #tpu.dimension_semantics<arbitrary>], iteration_bounds = array<i64: 1, 1>, scalar_prefetch = 0 : i64, scratch_operands = 2 : i64, tpu.core_type = #tpu.core_type<tc>, window_params = [{transform_indices = @transform_0, window_bounds = array<i64: 8, 2, 128>}, {transform_indices = @transform_1, window_bounds = array<i64: 2, 32>}, {transform_indices = @transform_2, window_bounds = array<i64: 2, 32>}, {transform_indices = @transform_3, window_bounds = array<i64: 2, 8, 32>}, {transform_indices = @transform_4, window_bounds = array<i64: 2, 8, 32>}, {pipeline_mode = #tpu.pipeline_mode<synchronous>, transform_indices = @transform_5, window_bounds = array<i64: 32, 128>}, {pipeline_mode = #tpu.pipeline_mode<synchronous>, transform_indices = @transform_6, window_bounds = array<i64: 32, 32>}, {transform_indices = @transform_7, window_bounds = array<i64: 8, 2, 32>}, {transform_indices = @transform_8, window_bounds = array<i64: 2, 32>}, {transform_indices = @transform_9, window_bounds = array<i64: 2, 32>}]} {
    %c0_i32 = arith.constant 0 : i32
    %0 = arith.cmpi eq, %arg1, %c0_i32 : i32
    %1 = arith.extui %0 : i1 to i32
    %c0_i32_0 = arith.constant 0 : i32
    %2 = arith.cmpi ne, %1, %c0_i32_0 : i32
    scf.if %2 {
      %c0_132 = arith.constant 0 : index
      %c0_133 = arith.constant 0 : index
      %430 = vector.load %arg3[%c0_132, %c0_133] : memref<2x32xf32, #tpu.memory_space<vmem>>, vector<2x32xf32>
      %c0_134 = arith.constant 0 : index
      %c0_135 = arith.constant 0 : index
      %431 = vector.load %arg12[%c0_134, %c0_135] : memref<2x32xf32, #tpu.memory_space<vmem>>, vector<2x32xf32>
      tpu.vector_store %arg12[%c0_134, %c0_135], %430 {strides = array<i32>} : memref<2x32xf32, #tpu.memory_space<vmem>>, vector<2x32xf32>,
      %c0_136 = arith.constant 0 : index
      %c0_137 = arith.constant 0 : index
      %432 = vector.load %arg4[%c0_136, %c0_137] : memref<2x32xf32, #tpu.memory_space<vmem>>, vector<2x32xf32>
      %c0_138 = arith.constant 0 : index
      %c0_139 = arith.constant 0 : index
      %433 = vector.load %arg13[%c0_138, %c0_139] : memref<2x32xf32, #tpu.memory_space<vmem>>, vector<2x32xf32>
      tpu.vector_store %arg13[%c0_138, %c0_139], %432 {strides = array<i32>} : memref<2x32xf32, #tpu.memory_space<vmem>>, vector<2x32xf32>,
    } else {
    }
    %c0 = arith.constant 0 : index
    %c0_1 = arith.constant 0 : index
    %c0_2 = arith.constant 0 : index
    %3 = vector.load %arg5[%c0, %c0_1, %c0_2] : memref<2x8x32xf32, #tpu.memory_space<vmem>>, vector<2x8x32xf32>
    %c0_3 = arith.constant 0 : index
    %c0_4 = arith.constant 0 : index
    %c0_5 = arith.constant 0 : index
    %4 = vector.load %arg6[%c0_3, %c0_4, %c0_5] : memref<2x8x32xf32, #tpu.memory_space<vmem>>, vector<2x8x32xf32>
    %c0_6 = arith.constant 0 : index
    %c0_7 = arith.constant 0 : index
    %5 = vector.load %arg7[%c0_6, %c0_7] : memref<32x128xf32, #tpu.memory_space<vmem>>, vector<32x128xf32>
    %c0_8 = arith.constant 0 : index
    %c0_9 = arith.constant 0 : index
    %6 = vector.load %arg8[%c0_8, %c0_9] : memref<32x32xf32, #tpu.memory_space<vmem>>, vector<32x32xf32>
    %c0_10 = arith.constant 0 : index
    %c0_11 = arith.constant 0 : index
    %7 = vector.load %arg12[%c0_10, %c0_11] : memref<2x32xf32, #tpu.memory_space<vmem>>, vector<2x32xf32>
    %c0_12 = arith.constant 0 : index
    %c0_13 = arith.constant 0 : index
    %8 = vector.load %arg13[%c0_12, %c0_13] : memref<2x32xf32, #tpu.memory_space<vmem>>, vector<2x32xf32>
    %c0_i32_14 = arith.constant 0 : i32
    %9 = arith.index_cast %c0_i32_14 : i32 to index
    %c0_15 = arith.constant 0 : index
    %c0_16 = arith.constant 0 : index
    %10 = vector.load %arg2[%9, %c0_15, %c0_16] : memref<8x2x128xf32, #tpu.memory_space<vmem>>, vector<1x2x128xf32>
    %11 = vector.shape_cast %10 : vector<1x2x128xf32> to vector<2x128xf32>
    %cst = arith.constant dense<0.000000e+00> : vector<2x128xf32>
    %12 = tpu.matmul %7, %5, %cst {dimension_numbers = #tpu.dot_dimension_numbers<[1], [0], [0], [1], [0, 0, 1, 1], [], []>} : vector<2x32xf32>, vector<32x128xf32>, vector<2x128xf32> -> vector<2x128xf32>
    %13 = arith.addf %11, %12 : vector<2x128xf32>
    %14 = vector.extract_strided_slice %13 {offsets = [0, 0], sizes = [2, 32], strides = [1, 1]} : vector<2x128xf32> to vector<2x32xf32>
    %15 = arith.negf %14 : vector<2x32xf32>
    %16 = math.exp %15 : vector<2x32xf32>
    %cst_17 = arith.constant 1.000000e+00 : f32
    %17 = vector.broadcast %cst_17 : f32 to vector<2x32xf32>
    %18 = arith.addf %17, %16 : vector<2x32xf32>
    %19 = arith.divf %17, %18 : vector<2x32xf32>
    %20 = vector.extract_strided_slice %13 {offsets = [0, 32], sizes = [2, 32], strides = [1, 1]} : vector<2x128xf32> to vector<2x32xf32>
    %21 = arith.negf %20 : vector<2x32xf32>
    %22 = math.exp %21 : vector<2x32xf32>
    %cst_18 = arith.constant 1.000000e+00 : f32
    %23 = vector.broadcast %cst_18 : f32 to vector<2x32xf32>
    %24 = arith.addf %23, %22 : vector<2x32xf32>
    %25 = arith.divf %23, %24 : vector<2x32xf32>
    %26 = vector.extract_strided_slice %13 {offsets = [0, 64], sizes = [2, 32], strides = [1, 1]} : vector<2x128xf32> to vector<2x32xf32>
    %27 = math.tanh %26 : vector<2x32xf32>
    %28 = vector.extract_strided_slice %13 {offsets = [0, 96], sizes = [2, 32], strides = [1, 1]} : vector<2x128xf32> to vector<2x32xf32>
    %29 = arith.negf %28 : vector<2x32xf32>
    %30 = math.exp %29 : vector<2x32xf32>
    %cst_19 = arith.constant 1.000000e+00 : f32
    %31 = vector.broadcast %cst_19 : f32 to vector<2x32xf32>
    %32 = arith.addf %31, %30 : vector<2x32xf32>
    %33 = arith.divf %31, %32 : vector<2x32xf32>
    %34 = arith.mulf %25, %8 : vector<2x32xf32>
    %35 = arith.mulf %19, %27 : vector<2x32xf32>
    %36 = arith.addf %34, %35 : vector<2x32xf32>
    %37 = math.tanh %36 : vector<2x32xf32>
    %38 = arith.mulf %33, %37 : vector<2x32xf32>
    %39 = vector.shape_cast %38 : vector<2x32xf32> to vector<2x1x32xf32>
    "tpu.trace_start"() <{level = 10 : i32, message = "bqh,bsh->bqs"}> : () -> ()
    %cst_20 = arith.constant dense<0.000000e+00> : vector<2x1x8xf32>
    %40 = tpu.matmul %39, %3, %cst_20 {dimension_numbers = #tpu.dot_dimension_numbers<[2], [2], [1], [1], [0, 0, 0, 1, 1, 1], [0], [0]>} : vector<2x1x32xf32>, vector<2x8x32xf32>, vector<2x1x8xf32> -> vector<2x1x8xf32>
    "tpu.trace_stop"() : () -> ()
    %cst_21 = arith.constant dense<0xFF800000> : vector<2x1xf32>
    %41 = vector.multi_reduction <maximumf>, %40, %cst_21 [2] : vector<2x1x8xf32> to vector<2x1xf32>
    %cst_22 = arith.constant 0xFF800000 : f32
    %42 = vector.broadcast %cst_22 : f32 to vector<2x1xf32>
    %43 = arith.maximumf %42, %41 : vector<2x1xf32>
    %44 = vector.shape_cast %43 : vector<2x1xf32> to vector<2x1x1xf32>
    %45 = vector.broadcast %44 : vector<2x1x1xf32> to vector<2x1x8xf32>
    %46 = arith.subf %40, %45 : vector<2x1x8xf32>
    %47 = math.exp %46 : vector<2x1x8xf32>
    %cst_23 = arith.constant dense<0.000000e+00> : vector<2x1xf32>
    %48 = vector.multi_reduction <add>, %47, %cst_23 [2] : vector<2x1x8xf32> to vector<2x1xf32>
    %49 = vector.shape_cast %48 : vector<2x1xf32> to vector<2x1x1xf32>
    %50 = vector.broadcast %49 : vector<2x1x1xf32> to vector<2x1x8xf32>
    %51 = arith.divf %47, %50 : vector<2x1x8xf32>
    "tpu.trace_start"() <{level = 10 : i32, message = "bqs,bsh->bqh"}> : () -> ()
    %cst_24 = arith.constant dense<0.000000e+00> : vector<2x1x32xf32>
    %52 = tpu.matmul %51, %4, %cst_24 {dimension_numbers = #tpu.dot_dimension_numbers<[2], [1], [1], [2], [0, 0, 0, 1, 1, 2], [0], [0]>} : vector<2x1x8xf32>, vector<2x8x32xf32>, vector<2x1x32xf32> -> vector<2x1x32xf32>
    "tpu.trace_stop"() : () -> ()
    %53 = vector.shape_cast %52 : vector<2x1x32xf32> to vector<2x32xf32>
    %cst_25 = arith.constant dense<0.000000e+00> : vector<2x32xf32>
    %54 = tpu.matmul %38, %6, %cst_25 {dimension_numbers = #tpu.dot_dimension_numbers<[1], [0], [0], [1], [0, 0, 1, 1], [], []>} : vector<2x32xf32>, vector<32x32xf32>, vector<2x32xf32> -> vector<2x32xf32>
    %55 = arith.addf %53, %54 : vector<2x32xf32>
    %56 = math.tanh %55 : vector<2x32xf32>
    %57 = arith.index_cast %c0_i32_14 : i32 to index
    %c0_26 = arith.constant 0 : index
    %c0_27 = arith.constant 0 : index
    %58 = vector.load %arg9[%57, %c0_26, %c0_27] : memref<8x2x32xf32, #tpu.memory_space<vmem>>, vector<1x2x32xf32>
    %59 = vector.shape_cast %58 : vector<1x2x32xf32> to vector<2x32xf32>
    %60 = vector.shape_cast %56 : vector<2x32xf32> to vector<1x2x32xf32>
    tpu.vector_store %arg9[%57, %c0_26, %c0_27], %60 {strides = array<i32>} : memref<8x2x32xf32, #tpu.memory_space<vmem>>, vector<1x2x32xf32>,
    %c1_i32 = arith.constant 1 : i32
    %61 = arith.index_cast %c1_i32 : i32 to index
    %c0_28 = arith.constant 0 : index
    %c0_29 = arith.constant 0 : index
    %62 = vector.load %arg2[%61, %c0_28, %c0_29] : memref<8x2x128xf32, #tpu.memory_space<vmem>>, vector<1x2x128xf32>
    %63 = vector.shape_cast %62 : vector<1x2x128xf32> to vector<2x128xf32>
    %cst_30 = arith.constant dense<0.000000e+00> : vector<2x128xf32>
    %64 = tpu.matmul %56, %5, %cst_30 {dimension_numbers = #tpu.dot_dimension_numbers<[1], [0], [0], [1], [0, 0, 1, 1], [], []>} : vector<2x32xf32>, vector<32x128xf32>, vector<2x128xf32> -> vector<2x128xf32>
    %65 = arith.addf %63, %64 : vector<2x128xf32>
    %66 = vector.extract_strided_slice %65 {offsets = [0, 0], sizes = [2, 32], strides = [1, 1]} : vector<2x128xf32> to vector<2x32xf32>
    %67 = arith.negf %66 : vector<2x32xf32>
    %68 = math.exp %67 : vector<2x32xf32>
    %cst_31 = arith.constant 1.000000e+00 : f32
    %69 = vector.broadcast %cst_31 : f32 to vector<2x32xf32>
    %70 = arith.addf %69, %68 : vector<2x32xf32>
    %71 = arith.divf %69, %70 : vector<2x32xf32>
    %72 = vector.extract_strided_slice %65 {offsets = [0, 32], sizes = [2, 32], strides = [1, 1]} : vector<2x128xf32> to vector<2x32xf32>
    %73 = arith.negf %72 : vector<2x32xf32>
    %74 = math.exp %73 : vector<2x32xf32>
    %cst_32 = arith.constant 1.000000e+00 : f32
    %75 = vector.broadcast %cst_32 : f32 to vector<2x32xf32>
    %76 = arith.addf %75, %74 : vector<2x32xf32>
    %77 = arith.divf %75, %76 : vector<2x32xf32>
    %78 = vector.extract_strided_slice %65 {offsets = [0, 64], sizes = [2, 32], strides = [1, 1]} : vector<2x128xf32> to vector<2x32xf32>
    %79 = math.tanh %78 : vector<2x32xf32>
    %80 = vector.extract_strided_slice %65 {offsets = [0, 96], sizes = [2, 32], strides = [1, 1]} : vector<2x128xf32> to vector<2x32xf32>
    %81 = arith.negf %80 : vector<2x32xf32>
    %82 = math.exp %81 : vector<2x32xf32>
    %cst_33 = arith.constant 1.000000e+00 : f32
    %83 = vector.broadcast %cst_33 : f32 to vector<2x32xf32>
    %84 = arith.addf %83, %82 : vector<2x32xf32>
    %85 = arith.divf %83, %84 : vector<2x32xf32>
    %86 = arith.mulf %77, %36 : vector<2x32xf32>
    %87 = arith.mulf %71, %79 : vector<2x32xf32>
    %88 = arith.addf %86, %87 : vector<2x32xf32>
    %89 = math.tanh %88 : vector<2x32xf32>
    %90 = arith.mulf %85, %89 : vector<2x32xf32>
    %91 = vector.shape_cast %90 : vector<2x32xf32> to vector<2x1x32xf32>
    "tpu.trace_start"() <{level = 10 : i32, message = "bqh,bsh->bqs"}> : () -> ()
    %cst_34 = arith.constant dense<0.000000e+00> : vector<2x1x8xf32>
    %92 = tpu.matmul %91, %3, %cst_34 {dimension_numbers = #tpu.dot_dimension_numbers<[2], [2], [1], [1], [0, 0, 0, 1, 1, 1], [0], [0]>} : vector<2x1x32xf32>, vector<2x8x32xf32>, vector<2x1x8xf32> -> vector<2x1x8xf32>
    "tpu.trace_stop"() : () -> ()
    %cst_35 = arith.constant dense<0xFF800000> : vector<2x1xf32>
    %93 = vector.multi_reduction <maximumf>, %92, %cst_35 [2] : vector<2x1x8xf32> to vector<2x1xf32>
    %cst_36 = arith.constant 0xFF800000 : f32
    %94 = vector.broadcast %cst_36 : f32 to vector<2x1xf32>
    %95 = arith.maximumf %94, %93 : vector<2x1xf32>
    %96 = vector.shape_cast %95 : vector<2x1xf32> to vector<2x1x1xf32>
    %97 = vector.broadcast %96 : vector<2x1x1xf32> to vector<2x1x8xf32>
    %98 = arith.subf %92, %97 : vector<2x1x8xf32>
    %99 = math.exp %98 : vector<2x1x8xf32>
    %cst_37 = arith.constant dense<0.000000e+00> : vector<2x1xf32>
    %100 = vector.multi_reduction <add>, %99, %cst_37 [2] : vector<2x1x8xf32> to vector<2x1xf32>
    %101 = vector.shape_cast %100 : vector<2x1xf32> to vector<2x1x1xf32>
    %102 = vector.broadcast %101 : vector<2x1x1xf32> to vector<2x1x8xf32>
    %103 = arith.divf %99, %102 : vector<2x1x8xf32>
    "tpu.trace_start"() <{level = 10 : i32, message = "bqs,bsh->bqh"}> : () -> ()
    %cst_38 = arith.constant dense<0.000000e+00> : vector<2x1x32xf32>
    %104 = tpu.matmul %103, %4, %cst_38 {dimension_numbers = #tpu.dot_dimension_numbers<[2], [1], [1], [2], [0, 0, 0, 1, 1, 2], [0], [0]>} : vector<2x1x8xf32>, vector<2x8x32xf32>, vector<2x1x32xf32> -> vector<2x1x32xf32>
    "tpu.trace_stop"() : () -> ()
    %105 = vector.shape_cast %104 : vector<2x1x32xf32> to vector<2x32xf32>
    %cst_39 = arith.constant dense<0.000000e+00> : vector<2x32xf32>
    %106 = tpu.matmul %90, %6, %cst_39 {dimension_numbers = #tpu.dot_dimension_numbers<[1], [0], [0], [1], [0, 0, 1, 1], [], []>} : vector<2x32xf32>, vector<32x32xf32>, vector<2x32xf32> -> vector<2x32xf32>
    %107 = arith.addf %105, %106 : vector<2x32xf32>
    %108 = math.tanh %107 : vector<2x32xf32>
    %109 = arith.index_cast %c1_i32 : i32 to index
    %c0_40 = arith.constant 0 : index
    %c0_41 = arith.constant 0 : index
    %110 = vector.load %arg9[%109, %c0_40, %c0_41] : memref<8x2x32xf32, #tpu.memory_space<vmem>>, vector<1x2x32xf32>
    %111 = vector.shape_cast %110 : vector<1x2x32xf32> to vector<2x32xf32>
    %112 = vector.shape_cast %108 : vector<2x32xf32> to vector<1x2x32xf32>
    tpu.vector_store %arg9[%109, %c0_40, %c0_41], %112 {strides = array<i32>} : memref<8x2x32xf32, #tpu.memory_space<vmem>>, vector<1x2x32xf32>,
    %c2_i32 = arith.constant 2 : i32
    %113 = arith.index_cast %c2_i32 : i32 to index
    %c0_42 = arith.constant 0 : index
    %c0_43 = arith.constant 0 : index
    %114 = vector.load %arg2[%113, %c0_42, %c0_43] : memref<8x2x128xf32, #tpu.memory_space<vmem>>, vector<1x2x128xf32>
    %115 = vector.shape_cast %114 : vector<1x2x128xf32> to vector<2x128xf32>
    %cst_44 = arith.constant dense<0.000000e+00> : vector<2x128xf32>
    %116 = tpu.matmul %108, %5, %cst_44 {dimension_numbers = #tpu.dot_dimension_numbers<[1], [0], [0], [1], [0, 0, 1, 1], [], []>} : vector<2x32xf32>, vector<32x128xf32>, vector<2x128xf32> -> vector<2x128xf32>
    %117 = arith.addf %115, %116 : vector<2x128xf32>
    %118 = vector.extract_strided_slice %117 {offsets = [0, 0], sizes = [2, 32], strides = [1, 1]} : vector<2x128xf32> to vector<2x32xf32>
    %119 = arith.negf %118 : vector<2x32xf32>
    %120 = math.exp %119 : vector<2x32xf32>
    %cst_45 = arith.constant 1.000000e+00 : f32
    %121 = vector.broadcast %cst_45 : f32 to vector<2x32xf32>
    %122 = arith.addf %121, %120 : vector<2x32xf32>
    %123 = arith.divf %121, %122 : vector<2x32xf32>
    %124 = vector.extract_strided_slice %117 {offsets = [0, 32], sizes = [2, 32], strides = [1, 1]} : vector<2x128xf32> to vector<2x32xf32>
    %125 = arith.negf %124 : vector<2x32xf32>
    %126 = math.exp %125 : vector<2x32xf32>
    %cst_46 = arith.constant 1.000000e+00 : f32
    %127 = vector.broadcast %cst_46 : f32 to vector<2x32xf32>
    %128 = arith.addf %127, %126 : vector<2x32xf32>
    %129 = arith.divf %127, %128 : vector<2x32xf32>
    %130 = vector.extract_strided_slice %117 {offsets = [0, 64], sizes = [2, 32], strides = [1, 1]} : vector<2x128xf32> to vector<2x32xf32>
    %131 = math.tanh %130 : vector<2x32xf32>
    %132 = vector.extract_strided_slice %117 {offsets = [0, 96], sizes = [2, 32], strides = [1, 1]} : vector<2x128xf32> to vector<2x32xf32>
    %133 = arith.negf %132 : vector<2x32xf32>
    %134 = math.exp %133 : vector<2x32xf32>
    %cst_47 = arith.constant 1.000000e+00 : f32
    %135 = vector.broadcast %cst_47 : f32 to vector<2x32xf32>
    %136 = arith.addf %135, %134 : vector<2x32xf32>
    %137 = arith.divf %135, %136 : vector<2x32xf32>
    %138 = arith.mulf %129, %88 : vector<2x32xf32>
    %139 = arith.mulf %123, %131 : vector<2x32xf32>
    %140 = arith.addf %138, %139 : vector<2x32xf32>
    %141 = math.tanh %140 : vector<2x32xf32>
    %142 = arith.mulf %137, %141 : vector<2x32xf32>
    %143 = vector.shape_cast %142 : vector<2x32xf32> to vector<2x1x32xf32>
    "tpu.trace_start"() <{level = 10 : i32, message = "bqh,bsh->bqs"}> : () -> ()
    %cst_48 = arith.constant dense<0.000000e+00> : vector<2x1x8xf32>
    %144 = tpu.matmul %143, %3, %cst_48 {dimension_numbers = #tpu.dot_dimension_numbers<[2], [2], [1], [1], [0, 0, 0, 1, 1, 1], [0], [0]>} : vector<2x1x32xf32>, vector<2x8x32xf32>, vector<2x1x8xf32> -> vector<2x1x8xf32>
    "tpu.trace_stop"() : () -> ()
    %cst_49 = arith.constant dense<0xFF800000> : vector<2x1xf32>
    %145 = vector.multi_reduction <maximumf>, %144, %cst_49 [2] : vector<2x1x8xf32> to vector<2x1xf32>
    %cst_50 = arith.constant 0xFF800000 : f32
    %146 = vector.broadcast %cst_50 : f32 to vector<2x1xf32>
    %147 = arith.maximumf %146, %145 : vector<2x1xf32>
    %148 = vector.shape_cast %147 : vector<2x1xf32> to vector<2x1x1xf32>
    %149 = vector.broadcast %148 : vector<2x1x1xf32> to vector<2x1x8xf32>
    %150 = arith.subf %144, %149 : vector<2x1x8xf32>
    %151 = math.exp %150 : vector<2x1x8xf32>
    %cst_51 = arith.constant dense<0.000000e+00> : vector<2x1xf32>
    %152 = vector.multi_reduction <add>, %151, %cst_51 [2] : vector<2x1x8xf32> to vector<2x1xf32>
    %153 = vector.shape_cast %152 : vector<2x1xf32> to vector<2x1x1xf32>
    %154 = vector.broadcast %153 : vector<2x1x1xf32> to vector<2x1x8xf32>
    %155 = arith.divf %151, %154 : vector<2x1x8xf32>
    "tpu.trace_start"() <{level = 10 : i32, message = "bqs,bsh->bqh"}> : () -> ()
    %cst_52 = arith.constant dense<0.000000e+00> : vector<2x1x32xf32>
    %156 = tpu.matmul %155, %4, %cst_52 {dimension_numbers = #tpu.dot_dimension_numbers<[2], [1], [1], [2], [0, 0, 0, 1, 1, 2], [0], [0]>} : vector<2x1x8xf32>, vector<2x8x32xf32>, vector<2x1x32xf32> -> vector<2x1x32xf32>
    "tpu.trace_stop"() : () -> ()
    %157 = vector.shape_cast %156 : vector<2x1x32xf32> to vector<2x32xf32>
    %cst_53 = arith.constant dense<0.000000e+00> : vector<2x32xf32>
    %158 = tpu.matmul %142, %6, %cst_53 {dimension_numbers = #tpu.dot_dimension_numbers<[1], [0], [0], [1], [0, 0, 1, 1], [], []>} : vector<2x32xf32>, vector<32x32xf32>, vector<2x32xf32> -> vector<2x32xf32>
    %159 = arith.addf %157, %158 : vector<2x32xf32>
    %160 = math.tanh %159 : vector<2x32xf32>
    %161 = arith.index_cast %c2_i32 : i32 to index
    %c0_54 = arith.constant 0 : index
    %c0_55 = arith.constant 0 : index
    %162 = vector.load %arg9[%161, %c0_54, %c0_55] : memref<8x2x32xf32, #tpu.memory_space<vmem>>, vector<1x2x32xf32>
    %163 = vector.shape_cast %162 : vector<1x2x32xf32> to vector<2x32xf32>
    %164 = vector.shape_cast %160 : vector<2x32xf32> to vector<1x2x32xf32>
    tpu.vector_store %arg9[%161, %c0_54, %c0_55], %164 {strides = array<i32>} : memref<8x2x32xf32, #tpu.memory_space<vmem>>, vector<1x2x32xf32>,
    %c3_i32 = arith.constant 3 : i32
    %165 = arith.index_cast %c3_i32 : i32 to index
    %c0_56 = arith.constant 0 : index
    %c0_57 = arith.constant 0 : index
    %166 = vector.load %arg2[%165, %c0_56, %c0_57] : memref<8x2x128xf32, #tpu.memory_space<vmem>>, vector<1x2x128xf32>
    %167 = vector.shape_cast %166 : vector<1x2x128xf32> to vector<2x128xf32>
    %cst_58 = arith.constant dense<0.000000e+00> : vector<2x128xf32>
    %168 = tpu.matmul %160, %5, %cst_58 {dimension_numbers = #tpu.dot_dimension_numbers<[1], [0], [0], [1], [0, 0, 1, 1], [], []>} : vector<2x32xf32>, vector<32x128xf32>, vector<2x128xf32> -> vector<2x128xf32>
    %169 = arith.addf %167, %168 : vector<2x128xf32>
    %170 = vector.extract_strided_slice %169 {offsets = [0, 0], sizes = [2, 32], strides = [1, 1]} : vector<2x128xf32> to vector<2x32xf32>
    %171 = arith.negf %170 : vector<2x32xf32>
    %172 = math.exp %171 : vector<2x32xf32>
    %cst_59 = arith.constant 1.000000e+00 : f32
    %173 = vector.broadcast %cst_59 : f32 to vector<2x32xf32>
    %174 = arith.addf %173, %172 : vector<2x32xf32>
    %175 = arith.divf %173, %174 : vector<2x32xf32>
    %176 = vector.extract_strided_slice %169 {offsets = [0, 32], sizes = [2, 32], strides = [1, 1]} : vector<2x128xf32> to vector<2x32xf32>
    %177 = arith.negf %176 : vector<2x32xf32>
    %178 = math.exp %177 : vector<2x32xf32>
    %cst_60 = arith.constant 1.000000e+00 : f32
    %179 = vector.broadcast %cst_60 : f32 to vector<2x32xf32>
    %180 = arith.addf %179, %178 : vector<2x32xf32>
    %181 = arith.divf %179, %180 : vector<2x32xf32>
    %182 = vector.extract_strided_slice %169 {offsets = [0, 64], sizes = [2, 32], strides = [1, 1]} : vector<2x128xf32> to vector<2x32xf32>
    %183 = math.tanh %182 : vector<2x32xf32>
    %184 = vector.extract_strided_slice %169 {offsets = [0, 96], sizes = [2, 32], strides = [1, 1]} : vector<2x128xf32> to vector<2x32xf32>
    %185 = arith.negf %184 : vector<2x32xf32>
    %186 = math.exp %185 : vector<2x32xf32>
    %cst_61 = arith.constant 1.000000e+00 : f32
    %187 = vector.broadcast %cst_61 : f32 to vector<2x32xf32>
    %188 = arith.addf %187, %186 : vector<2x32xf32>
    %189 = arith.divf %187, %188 : vector<2x32xf32>
    %190 = arith.mulf %181, %140 : vector<2x32xf32>
    %191 = arith.mulf %175, %183 : vector<2x32xf32>
    %192 = arith.addf %190, %191 : vector<2x32xf32>
    %193 = math.tanh %192 : vector<2x32xf32>
    %194 = arith.mulf %189, %193 : vector<2x32xf32>
    %195 = vector.shape_cast %194 : vector<2x32xf32> to vector<2x1x32xf32>
    "tpu.trace_start"() <{level = 10 : i32, message = "bqh,bsh->bqs"}> : () -> ()
    %cst_62 = arith.constant dense<0.000000e+00> : vector<2x1x8xf32>
    %196 = tpu.matmul %195, %3, %cst_62 {dimension_numbers = #tpu.dot_dimension_numbers<[2], [2], [1], [1], [0, 0, 0, 1, 1, 1], [0], [0]>} : vector<2x1x32xf32>, vector<2x8x32xf32>, vector<2x1x8xf32> -> vector<2x1x8xf32>
    "tpu.trace_stop"() : () -> ()
    %cst_63 = arith.constant dense<0xFF800000> : vector<2x1xf32>
    %197 = vector.multi_reduction <maximumf>, %196, %cst_63 [2] : vector<2x1x8xf32> to vector<2x1xf32>
    %cst_64 = arith.constant 0xFF800000 : f32
    %198 = vector.broadcast %cst_64 : f32 to vector<2x1xf32>
    %199 = arith.maximumf %198, %197 : vector<2x1xf32>
    %200 = vector.shape_cast %199 : vector<2x1xf32> to vector<2x1x1xf32>
    %201 = vector.broadcast %200 : vector<2x1x1xf32> to vector<2x1x8xf32>
    %202 = arith.subf %196, %201 : vector<2x1x8xf32>
    %203 = math.exp %202 : vector<2x1x8xf32>
    %cst_65 = arith.constant dense<0.000000e+00> : vector<2x1xf32>
    %204 = vector.multi_reduction <add>, %203, %cst_65 [2] : vector<2x1x8xf32> to vector<2x1xf32>
    %205 = vector.shape_cast %204 : vector<2x1xf32> to vector<2x1x1xf32>
    %206 = vector.broadcast %205 : vector<2x1x1xf32> to vector<2x1x8xf32>
    %207 = arith.divf %203, %206 : vector<2x1x8xf32>
    "tpu.trace_start"() <{level = 10 : i32, message = "bqs,bsh->bqh"}> : () -> ()
    %cst_66 = arith.constant dense<0.000000e+00> : vector<2x1x32xf32>
    %208 = tpu.matmul %207, %4, %cst_66 {dimension_numbers = #tpu.dot_dimension_numbers<[2], [1], [1], [2], [0, 0, 0, 1, 1, 2], [0], [0]>} : vector<2x1x8xf32>, vector<2x8x32xf32>, vector<2x1x32xf32> -> vector<2x1x32xf32>
    "tpu.trace_stop"() : () -> ()
    %209 = vector.shape_cast %208 : vector<2x1x32xf32> to vector<2x32xf32>
    %cst_67 = arith.constant dense<0.000000e+00> : vector<2x32xf32>
    %210 = tpu.matmul %194, %6, %cst_67 {dimension_numbers = #tpu.dot_dimension_numbers<[1], [0], [0], [1], [0, 0, 1, 1], [], []>} : vector<2x32xf32>, vector<32x32xf32>, vector<2x32xf32> -> vector<2x32xf32>
    %211 = arith.addf %209, %210 : vector<2x32xf32>
    %212 = math.tanh %211 : vector<2x32xf32>
    %213 = arith.index_cast %c3_i32 : i32 to index
    %c0_68 = arith.constant 0 : index
    %c0_69 = arith.constant 0 : index
    %214 = vector.load %arg9[%213, %c0_68, %c0_69] : memref<8x2x32xf32, #tpu.memory_space<vmem>>, vector<1x2x32xf32>
    %215 = vector.shape_cast %214 : vector<1x2x32xf32> to vector<2x32xf32>
    %216 = vector.shape_cast %212 : vector<2x32xf32> to vector<1x2x32xf32>
    tpu.vector_store %arg9[%213, %c0_68, %c0_69], %216 {strides = array<i32>} : memref<8x2x32xf32, #tpu.memory_space<vmem>>, vector<1x2x32xf32>,
    %c4_i32 = arith.constant 4 : i32
    %217 = arith.index_cast %c4_i32 : i32 to index
    %c0_70 = arith.constant 0 : index
    %c0_71 = arith.constant 0 : index
    %218 = vector.load %arg2[%217, %c0_70, %c0_71] : memref<8x2x128xf32, #tpu.memory_space<vmem>>, vector<1x2x128xf32>
    %219 = vector.shape_cast %218 : vector<1x2x128xf32> to vector<2x128xf32>
    %cst_72 = arith.constant dense<0.000000e+00> : vector<2x128xf32>
    %220 = tpu.matmul %212, %5, %cst_72 {dimension_numbers = #tpu.dot_dimension_numbers<[1], [0], [0], [1], [0, 0, 1, 1], [], []>} : vector<2x32xf32>, vector<32x128xf32>, vector<2x128xf32> -> vector<2x128xf32>
    %221 = arith.addf %219, %220 : vector<2x128xf32>
    %222 = vector.extract_strided_slice %221 {offsets = [0, 0], sizes = [2, 32], strides = [1, 1]} : vector<2x128xf32> to vector<2x32xf32>
    %223 = arith.negf %222 : vector<2x32xf32>
    %224 = math.exp %223 : vector<2x32xf32>
    %cst_73 = arith.constant 1.000000e+00 : f32
    %225 = vector.broadcast %cst_73 : f32 to vector<2x32xf32>
    %226 = arith.addf %225, %224 : vector<2x32xf32>
    %227 = arith.divf %225, %226 : vector<2x32xf32>
    %228 = vector.extract_strided_slice %221 {offsets = [0, 32], sizes = [2, 32], strides = [1, 1]} : vector<2x128xf32> to vector<2x32xf32>
    %229 = arith.negf %228 : vector<2x32xf32>
    %230 = math.exp %229 : vector<2x32xf32>
    %cst_74 = arith.constant 1.000000e+00 : f32
    %231 = vector.broadcast %cst_74 : f32 to vector<2x32xf32>
    %232 = arith.addf %231, %230 : vector<2x32xf32>
    %233 = arith.divf %231, %232 : vector<2x32xf32>
    %234 = vector.extract_strided_slice %221 {offsets = [0, 64], sizes = [2, 32], strides = [1, 1]} : vector<2x128xf32> to vector<2x32xf32>
    %235 = math.tanh %234 : vector<2x32xf32>
    %236 = vector.extract_strided_slice %221 {offsets = [0, 96], sizes = [2, 32], strides = [1, 1]} : vector<2x128xf32> to vector<2x32xf32>
    %237 = arith.negf %236 : vector<2x32xf32>
    %238 = math.exp %237 : vector<2x32xf32>
    %cst_75 = arith.constant 1.000000e+00 : f32
    %239 = vector.broadcast %cst_75 : f32 to vector<2x32xf32>
    %240 = arith.addf %239, %238 : vector<2x32xf32>
    %241 = arith.divf %239, %240 : vector<2x32xf32>
    %242 = arith.mulf %233, %192 : vector<2x32xf32>
    %243 = arith.mulf %227, %235 : vector<2x32xf32>
    %244 = arith.addf %242, %243 : vector<2x32xf32>
    %245 = math.tanh %244 : vector<2x32xf32>
    %246 = arith.mulf %241, %245 : vector<2x32xf32>
    %247 = vector.shape_cast %246 : vector<2x32xf32> to vector<2x1x32xf32>
    "tpu.trace_start"() <{level = 10 : i32, message = "bqh,bsh->bqs"}> : () -> ()
    %cst_76 = arith.constant dense<0.000000e+00> : vector<2x1x8xf32>
    %248 = tpu.matmul %247, %3, %cst_76 {dimension_numbers = #tpu.dot_dimension_numbers<[2], [2], [1], [1], [0, 0, 0, 1, 1, 1], [0], [0]>} : vector<2x1x32xf32>, vector<2x8x32xf32>, vector<2x1x8xf32> -> vector<2x1x8xf32>
    "tpu.trace_stop"() : () -> ()
    %cst_77 = arith.constant dense<0xFF800000> : vector<2x1xf32>
    %249 = vector.multi_reduction <maximumf>, %248, %cst_77 [2] : vector<2x1x8xf32> to vector<2x1xf32>
    %cst_78 = arith.constant 0xFF800000 : f32
    %250 = vector.broadcast %cst_78 : f32 to vector<2x1xf32>
    %251 = arith.maximumf %250, %249 : vector<2x1xf32>
    %252 = vector.shape_cast %251 : vector<2x1xf32> to vector<2x1x1xf32>
    %253 = vector.broadcast %252 : vector<2x1x1xf32> to vector<2x1x8xf32>
    %254 = arith.subf %248, %253 : vector<2x1x8xf32>
    %255 = math.exp %254 : vector<2x1x8xf32>
    %cst_79 = arith.constant dense<0.000000e+00> : vector<2x1xf32>
    %256 = vector.multi_reduction <add>, %255, %cst_79 [2] : vector<2x1x8xf32> to vector<2x1xf32>
    %257 = vector.shape_cast %256 : vector<2x1xf32> to vector<2x1x1xf32>
    %258 = vector.broadcast %257 : vector<2x1x1xf32> to vector<2x1x8xf32>
    %259 = arith.divf %255, %258 : vector<2x1x8xf32>
    "tpu.trace_start"() <{level = 10 : i32, message = "bqs,bsh->bqh"}> : () -> ()
    %cst_80 = arith.constant dense<0.000000e+00> : vector<2x1x32xf32>
    %260 = tpu.matmul %259, %4, %cst_80 {dimension_numbers = #tpu.dot_dimension_numbers<[2], [1], [1], [2], [0, 0, 0, 1, 1, 2], [0], [0]>} : vector<2x1x8xf32>, vector<2x8x32xf32>, vector<2x1x32xf32> -> vector<2x1x32xf32>
    "tpu.trace_stop"() : () -> ()
    %261 = vector.shape_cast %260 : vector<2x1x32xf32> to vector<2x32xf32>
    %cst_81 = arith.constant dense<0.000000e+00> : vector<2x32xf32>
    %262 = tpu.matmul %246, %6, %cst_81 {dimension_numbers = #tpu.dot_dimension_numbers<[1], [0], [0], [1], [0, 0, 1, 1], [], []>} : vector<2x32xf32>, vector<32x32xf32>, vector<2x32xf32> -> vector<2x32xf32>
    %263 = arith.addf %261, %262 : vector<2x32xf32>
    %264 = math.tanh %263 : vector<2x32xf32>
    %265 = arith.index_cast %c4_i32 : i32 to index
    %c0_82 = arith.constant 0 : index
    %c0_83 = arith.constant 0 : index
    %266 = vector.load %arg9[%265, %c0_82, %c0_83] : memref<8x2x32xf32, #tpu.memory_space<vmem>>, vector<1x2x32xf32>
    %267 = vector.shape_cast %266 : vector<1x2x32xf32> to vector<2x32xf32>
    %268 = vector.shape_cast %264 : vector<2x32xf32> to vector<1x2x32xf32>
    tpu.vector_store %arg9[%265, %c0_82, %c0_83], %268 {strides = array<i32>} : memref<8x2x32xf32, #tpu.memory_space<vmem>>, vector<1x2x32xf32>,
    %c5_i32 = arith.constant 5 : i32
    %269 = arith.index_cast %c5_i32 : i32 to index
    %c0_84 = arith.constant 0 : index
    %c0_85 = arith.constant 0 : index
    %270 = vector.load %arg2[%269, %c0_84, %c0_85] : memref<8x2x128xf32, #tpu.memory_space<vmem>>, vector<1x2x128xf32>
    %271 = vector.shape_cast %270 : vector<1x2x128xf32> to vector<2x128xf32>
    %cst_86 = arith.constant dense<0.000000e+00> : vector<2x128xf32>
    %272 = tpu.matmul %264, %5, %cst_86 {dimension_numbers = #tpu.dot_dimension_numbers<[1], [0], [0], [1], [0, 0, 1, 1], [], []>} : vector<2x32xf32>, vector<32x128xf32>, vector<2x128xf32> -> vector<2x128xf32>
    %273 = arith.addf %271, %272 : vector<2x128xf32>
    %274 = vector.extract_strided_slice %273 {offsets = [0, 0], sizes = [2, 32], strides = [1, 1]} : vector<2x128xf32> to vector<2x32xf32>
    %275 = arith.negf %274 : vector<2x32xf32>
    %276 = math.exp %275 : vector<2x32xf32>
    %cst_87 = arith.constant 1.000000e+00 : f32
    %277 = vector.broadcast %cst_87 : f32 to vector<2x32xf32>
    %278 = arith.addf %277, %276 : vector<2x32xf32>
    %279 = arith.divf %277, %278 : vector<2x32xf32>
    %280 = vector.extract_strided_slice %273 {offsets = [0, 32], sizes = [2, 32], strides = [1, 1]} : vector<2x128xf32> to vector<2x32xf32>
    %281 = arith.negf %280 : vector<2x32xf32>
    %282 = math.exp %281 : vector<2x32xf32>
    %cst_88 = arith.constant 1.000000e+00 : f32
    %283 = vector.broadcast %cst_88 : f32 to vector<2x32xf32>
    %284 = arith.addf %283, %282 : vector<2x32xf32>
    %285 = arith.divf %283, %284 : vector<2x32xf32>
    %286 = vector.extract_strided_slice %273 {offsets = [0, 64], sizes = [2, 32], strides = [1, 1]} : vector<2x128xf32> to vector<2x32xf32>
    %287 = math.tanh %286 : vector<2x32xf32>
    %288 = vector.extract_strided_slice %273 {offsets = [0, 96], sizes = [2, 32], strides = [1, 1]} : vector<2x128xf32> to vector<2x32xf32>
    %289 = arith.negf %288 : vector<2x32xf32>
    %290 = math.exp %289 : vector<2x32xf32>
    %cst_89 = arith.constant 1.000000e+00 : f32
    %291 = vector.broadcast %cst_89 : f32 to vector<2x32xf32>
    %292 = arith.addf %291, %290 : vector<2x32xf32>
    %293 = arith.divf %291, %292 : vector<2x32xf32>
    %294 = arith.mulf %285, %244 : vector<2x32xf32>
    %295 = arith.mulf %279, %287 : vector<2x32xf32>
    %296 = arith.addf %294, %295 : vector<2x32xf32>
    %297 = math.tanh %296 : vector<2x32xf32>
    %298 = arith.mulf %293, %297 : vector<2x32xf32>
    %299 = vector.shape_cast %298 : vector<2x32xf32> to vector<2x1x32xf32>
    "tpu.trace_start"() <{level = 10 : i32, message = "bqh,bsh->bqs"}> : () -> ()
    %cst_90 = arith.constant dense<0.000000e+00> : vector<2x1x8xf32>
    %300 = tpu.matmul %299, %3, %cst_90 {dimension_numbers = #tpu.dot_dimension_numbers<[2], [2], [1], [1], [0, 0, 0, 1, 1, 1], [0], [0]>} : vector<2x1x32xf32>, vector<2x8x32xf32>, vector<2x1x8xf32> -> vector<2x1x8xf32>
    "tpu.trace_stop"() : () -> ()
    %cst_91 = arith.constant dense<0xFF800000> : vector<2x1xf32>
    %301 = vector.multi_reduction <maximumf>, %300, %cst_91 [2] : vector<2x1x8xf32> to vector<2x1xf32>
    %cst_92 = arith.constant 0xFF800000 : f32
    %302 = vector.broadcast %cst_92 : f32 to vector<2x1xf32>
    %303 = arith.maximumf %302, %301 : vector<2x1xf32>
    %304 = vector.shape_cast %303 : vector<2x1xf32> to vector<2x1x1xf32>
    %305 = vector.broadcast %304 : vector<2x1x1xf32> to vector<2x1x8xf32>
    %306 = arith.subf %300, %305 : vector<2x1x8xf32>
    %307 = math.exp %306 : vector<2x1x8xf32>
    %cst_93 = arith.constant dense<0.000000e+00> : vector<2x1xf32>
    %308 = vector.multi_reduction <add>, %307, %cst_93 [2] : vector<2x1x8xf32> to vector<2x1xf32>
    %309 = vector.shape_cast %308 : vector<2x1xf32> to vector<2x1x1xf32>
    %310 = vector.broadcast %309 : vector<2x1x1xf32> to vector<2x1x8xf32>
    %311 = arith.divf %307, %310 : vector<2x1x8xf32>
    "tpu.trace_start"() <{level = 10 : i32, message = "bqs,bsh->bqh"}> : () -> ()
    %cst_94 = arith.constant dense<0.000000e+00> : vector<2x1x32xf32>
    %312 = tpu.matmul %311, %4, %cst_94 {dimension_numbers = #tpu.dot_dimension_numbers<[2], [1], [1], [2], [0, 0, 0, 1, 1, 2], [0], [0]>} : vector<2x1x8xf32>, vector<2x8x32xf32>, vector<2x1x32xf32> -> vector<2x1x32xf32>
    "tpu.trace_stop"() : () -> ()
    %313 = vector.shape_cast %312 : vector<2x1x32xf32> to vector<2x32xf32>
    %cst_95 = arith.constant dense<0.000000e+00> : vector<2x32xf32>
    %314 = tpu.matmul %298, %6, %cst_95 {dimension_numbers = #tpu.dot_dimension_numbers<[1], [0], [0], [1], [0, 0, 1, 1], [], []>} : vector<2x32xf32>, vector<32x32xf32>, vector<2x32xf32> -> vector<2x32xf32>
    %315 = arith.addf %313, %314 : vector<2x32xf32>
    %316 = math.tanh %315 : vector<2x32xf32>
    %317 = arith.index_cast %c5_i32 : i32 to index
    %c0_96 = arith.constant 0 : index
    %c0_97 = arith.constant 0 : index
    %318 = vector.load %arg9[%317, %c0_96, %c0_97] : memref<8x2x32xf32, #tpu.memory_space<vmem>>, vector<1x2x32xf32>
    %319 = vector.shape_cast %318 : vector<1x2x32xf32> to vector<2x32xf32>
    %320 = vector.shape_cast %316 : vector<2x32xf32> to vector<1x2x32xf32>
    tpu.vector_store %arg9[%317, %c0_96, %c0_97], %320 {strides = array<i32>} : memref<8x2x32xf32, #tpu.memory_space<vmem>>, vector<1x2x32xf32>,
    %c6_i32 = arith.constant 6 : i32
    %321 = arith.index_cast %c6_i32 : i32 to index
    %c0_98 = arith.constant 0 : index
    %c0_99 = arith.constant 0 : index
    %322 = vector.load %arg2[%321, %c0_98, %c0_99] : memref<8x2x128xf32, #tpu.memory_space<vmem>>, vector<1x2x128xf32>
    %323 = vector.shape_cast %322 : vector<1x2x128xf32> to vector<2x128xf32>
    %cst_100 = arith.constant dense<0.000000e+00> : vector<2x128xf32>
    %324 = tpu.matmul %316, %5, %cst_100 {dimension_numbers = #tpu.dot_dimension_numbers<[1], [0], [0], [1], [0, 0, 1, 1], [], []>} : vector<2x32xf32>, vector<32x128xf32>, vector<2x128xf32> -> vector<2x128xf32>
    %325 = arith.addf %323, %324 : vector<2x128xf32>
    %326 = vector.extract_strided_slice %325 {offsets = [0, 0], sizes = [2, 32], strides = [1, 1]} : vector<2x128xf32> to vector<2x32xf32>
    %327 = arith.negf %326 : vector<2x32xf32>
    %328 = math.exp %327 : vector<2x32xf32>
    %cst_101 = arith.constant 1.000000e+00 : f32
    %329 = vector.broadcast %cst_101 : f32 to vector<2x32xf32>
    %330 = arith.addf %329, %328 : vector<2x32xf32>
    %331 = arith.divf %329, %330 : vector<2x32xf32>
    %332 = vector.extract_strided_slice %325 {offsets = [0, 32], sizes = [2, 32], strides = [1, 1]} : vector<2x128xf32> to vector<2x32xf32>
    %333 = arith.negf %332 : vector<2x32xf32>
    %334 = math.exp %333 : vector<2x32xf32>
    %cst_102 = arith.constant 1.000000e+00 : f32
    %335 = vector.broadcast %cst_102 : f32 to vector<2x32xf32>
    %336 = arith.addf %335, %334 : vector<2x32xf32>
    %337 = arith.divf %335, %336 : vector<2x32xf32>
    %338 = vector.extract_strided_slice %325 {offsets = [0, 64], sizes = [2, 32], strides = [1, 1]} : vector<2x128xf32> to vector<2x32xf32>
    %339 = math.tanh %338 : vector<2x32xf32>
    %340 = vector.extract_strided_slice %325 {offsets = [0, 96], sizes = [2, 32], strides = [1, 1]} : vector<2x128xf32> to vector<2x32xf32>
    %341 = arith.negf %340 : vector<2x32xf32>
    %342 = math.exp %341 : vector<2x32xf32>
    %cst_103 = arith.constant 1.000000e+00 : f32
    %343 = vector.broadcast %cst_103 : f32 to vector<2x32xf32>
    %344 = arith.addf %343, %342 : vector<2x32xf32>
    %345 = arith.divf %343, %344 : vector<2x32xf32>
    %346 = arith.mulf %337, %296 : vector<2x32xf32>
    %347 = arith.mulf %331, %339 : vector<2x32xf32>
    %348 = arith.addf %346, %347 : vector<2x32xf32>
    %349 = math.tanh %348 : vector<2x32xf32>
    %350 = arith.mulf %345, %349 : vector<2x32xf32>
    %351 = vector.shape_cast %350 : vector<2x32xf32> to vector<2x1x32xf32>
    "tpu.trace_start"() <{level = 10 : i32, message = "bqh,bsh->bqs"}> : () -> ()
    %cst_104 = arith.constant dense<0.000000e+00> : vector<2x1x8xf32>
    %352 = tpu.matmul %351, %3, %cst_104 {dimension_numbers = #tpu.dot_dimension_numbers<[2], [2], [1], [1], [0, 0, 0, 1, 1, 1], [0], [0]>} : vector<2x1x32xf32>, vector<2x8x32xf32>, vector<2x1x8xf32> -> vector<2x1x8xf32>
    "tpu.trace_stop"() : () -> ()
    %cst_105 = arith.constant dense<0xFF800000> : vector<2x1xf32>
    %353 = vector.multi_reduction <maximumf>, %352, %cst_105 [2] : vector<2x1x8xf32> to vector<2x1xf32>
    %cst_106 = arith.constant 0xFF800000 : f32
    %354 = vector.broadcast %cst_106 : f32 to vector<2x1xf32>
    %355 = arith.maximumf %354, %353 : vector<2x1xf32>
    %356 = vector.shape_cast %355 : vector<2x1xf32> to vector<2x1x1xf32>
    %357 = vector.broadcast %356 : vector<2x1x1xf32> to vector<2x1x8xf32>
    %358 = arith.subf %352, %357 : vector<2x1x8xf32>
    %359 = math.exp %358 : vector<2x1x8xf32>
    %cst_107 = arith.constant dense<0.000000e+00> : vector<2x1xf32>
    %360 = vector.multi_reduction <add>, %359, %cst_107 [2] : vector<2x1x8xf32> to vector<2x1xf32>
    %361 = vector.shape_cast %360 : vector<2x1xf32> to vector<2x1x1xf32>
    %362 = vector.broadcast %361 : vector<2x1x1xf32> to vector<2x1x8xf32>
    %363 = arith.divf %359, %362 : vector<2x1x8xf32>
    "tpu.trace_start"() <{level = 10 : i32, message = "bqs,bsh->bqh"}> : () -> ()
    %cst_108 = arith.constant dense<0.000000e+00> : vector<2x1x32xf32>
    %364 = tpu.matmul %363, %4, %cst_108 {dimension_numbers = #tpu.dot_dimension_numbers<[2], [1], [1], [2], [0, 0, 0, 1, 1, 2], [0], [0]>} : vector<2x1x8xf32>, vector<2x8x32xf32>, vector<2x1x32xf32> -> vector<2x1x32xf32>
    "tpu.trace_stop"() : () -> ()
    %365 = vector.shape_cast %364 : vector<2x1x32xf32> to vector<2x32xf32>
    %cst_109 = arith.constant dense<0.000000e+00> : vector<2x32xf32>
    %366 = tpu.matmul %350, %6, %cst_109 {dimension_numbers = #tpu.dot_dimension_numbers<[1], [0], [0], [1], [0, 0, 1, 1], [], []>} : vector<2x32xf32>, vector<32x32xf32>, vector<2x32xf32> -> vector<2x32xf32>
    %367 = arith.addf %365, %366 : vector<2x32xf32>
    %368 = math.tanh %367 : vector<2x32xf32>
    %369 = arith.index_cast %c6_i32 : i32 to index
    %c0_110 = arith.constant 0 : index
    %c0_111 = arith.constant 0 : index
    %370 = vector.load %arg9[%369, %c0_110, %c0_111] : memref<8x2x32xf32, #tpu.memory_space<vmem>>, vector<1x2x32xf32>
    %371 = vector.shape_cast %370 : vector<1x2x32xf32> to vector<2x32xf32>
    %372 = vector.shape_cast %368 : vector<2x32xf32> to vector<1x2x32xf32>
    tpu.vector_store %arg9[%369, %c0_110, %c0_111], %372 {strides = array<i32>} : memref<8x2x32xf32, #tpu.memory_space<vmem>>, vector<1x2x32xf32>,
    %c7_i32 = arith.constant 7 : i32
    %373 = arith.index_cast %c7_i32 : i32 to index
    %c0_112 = arith.constant 0 : index
    %c0_113 = arith.constant 0 : index
    %374 = vector.load %arg2[%373, %c0_112, %c0_113] : memref<8x2x128xf32, #tpu.memory_space<vmem>>, vector<1x2x128xf32>
    %375 = vector.shape_cast %374 : vector<1x2x128xf32> to vector<2x128xf32>
    %cst_114 = arith.constant dense<0.000000e+00> : vector<2x128xf32>
    %376 = tpu.matmul %368, %5, %cst_114 {dimension_numbers = #tpu.dot_dimension_numbers<[1], [0], [0], [1], [0, 0, 1, 1], [], []>} : vector<2x32xf32>, vector<32x128xf32>, vector<2x128xf32> -> vector<2x128xf32>
    %377 = arith.addf %375, %376 : vector<2x128xf32>
    %378 = vector.extract_strided_slice %377 {offsets = [0, 0], sizes = [2, 32], strides = [1, 1]} : vector<2x128xf32> to vector<2x32xf32>
    %379 = arith.negf %378 : vector<2x32xf32>
    %380 = math.exp %379 : vector<2x32xf32>
    %cst_115 = arith.constant 1.000000e+00 : f32
    %381 = vector.broadcast %cst_115 : f32 to vector<2x32xf32>
    %382 = arith.addf %381, %380 : vector<2x32xf32>
    %383 = arith.divf %381, %382 : vector<2x32xf32>
    %384 = vector.extract_strided_slice %377 {offsets = [0, 32], sizes = [2, 32], strides = [1, 1]} : vector<2x128xf32> to vector<2x32xf32>
    %385 = arith.negf %384 : vector<2x32xf32>
    %386 = math.exp %385 : vector<2x32xf32>
    %cst_116 = arith.constant 1.000000e+00 : f32
    %387 = vector.broadcast %cst_116 : f32 to vector<2x32xf32>
    %388 = arith.addf %387, %386 : vector<2x32xf32>
    %389 = arith.divf %387, %388 : vector<2x32xf32>
    %390 = vector.extract_strided_slice %377 {offsets = [0, 64], sizes = [2, 32], strides = [1, 1]} : vector<2x128xf32> to vector<2x32xf32>
    %391 = math.tanh %390 : vector<2x32xf32>
    %392 = vector.extract_strided_slice %377 {offsets = [0, 96], sizes = [2, 32], strides = [1, 1]} : vector<2x128xf32> to vector<2x32xf32>
    %393 = arith.negf %392 : vector<2x32xf32>
    %394 = math.exp %393 : vector<2x32xf32>
    %cst_117 = arith.constant 1.000000e+00 : f32
    %395 = vector.broadcast %cst_117 : f32 to vector<2x32xf32>
    %396 = arith.addf %395, %394 : vector<2x32xf32>
    %397 = arith.divf %395, %396 : vector<2x32xf32>
    %398 = arith.mulf %389, %348 : vector<2x32xf32>
    %399 = arith.mulf %383, %391 : vector<2x32xf32>
    %400 = arith.addf %398, %399 : vector<2x32xf32>
    %401 = math.tanh %400 : vector<2x32xf32>
    %402 = arith.mulf %397, %401 : vector<2x32xf32>
    %403 = vector.shape_cast %402 : vector<2x32xf32> to vector<2x1x32xf32>
    "tpu.trace_start"() <{level = 10 : i32, message = "bqh,bsh->bqs"}> : () -> ()
    %cst_118 = arith.constant dense<0.000000e+00> : vector<2x1x8xf32>
    %404 = tpu.matmul %403, %3, %cst_118 {dimension_numbers = #tpu.dot_dimension_numbers<[2], [2], [1], [1], [0, 0, 0, 1, 1, 1], [0], [0]>} : vector<2x1x32xf32>, vector<2x8x32xf32>, vector<2x1x8xf32> -> vector<2x1x8xf32>
    "tpu.trace_stop"() : () -> ()
    %cst_119 = arith.constant dense<0xFF800000> : vector<2x1xf32>
    %405 = vector.multi_reduction <maximumf>, %404, %cst_119 [2] : vector<2x1x8xf32> to vector<2x1xf32>
    %cst_120 = arith.constant 0xFF800000 : f32
    %406 = vector.broadcast %cst_120 : f32 to vector<2x1xf32>
    %407 = arith.maximumf %406, %405 : vector<2x1xf32>
    %408 = vector.shape_cast %407 : vector<2x1xf32> to vector<2x1x1xf32>
    %409 = vector.broadcast %408 : vector<2x1x1xf32> to vector<2x1x8xf32>
    %410 = arith.subf %404, %409 : vector<2x1x8xf32>
    %411 = math.exp %410 : vector<2x1x8xf32>
    %cst_121 = arith.constant dense<0.000000e+00> : vector<2x1xf32>
    %412 = vector.multi_reduction <add>, %411, %cst_121 [2] : vector<2x1x8xf32> to vector<2x1xf32>
    %413 = vector.shape_cast %412 : vector<2x1xf32> to vector<2x1x1xf32>
    %414 = vector.broadcast %413 : vector<2x1x1xf32> to vector<2x1x8xf32>
    %415 = arith.divf %411, %414 : vector<2x1x8xf32>
    "tpu.trace_start"() <{level = 10 : i32, message = "bqs,bsh->bqh"}> : () -> ()
    %cst_122 = arith.constant dense<0.000000e+00> : vector<2x1x32xf32>
    %416 = tpu.matmul %415, %4, %cst_122 {dimension_numbers = #tpu.dot_dimension_numbers<[2], [1], [1], [2], [0, 0, 0, 1, 1, 2], [0], [0]>} : vector<2x1x8xf32>, vector<2x8x32xf32>, vector<2x1x32xf32> -> vector<2x1x32xf32>
    "tpu.trace_stop"() : () -> ()
    %417 = vector.shape_cast %416 : vector<2x1x32xf32> to vector<2x32xf32>
    %cst_123 = arith.constant dense<0.000000e+00> : vector<2x32xf32>
    %418 = tpu.matmul %402, %6, %cst_123 {dimension_numbers = #tpu.dot_dimension_numbers<[1], [0], [0], [1], [0, 0, 1, 1], [], []>} : vector<2x32xf32>, vector<32x32xf32>, vector<2x32xf32> -> vector<2x32xf32>
    %419 = arith.addf %417, %418 : vector<2x32xf32>
    %420 = math.tanh %419 : vector<2x32xf32>
    %421 = arith.index_cast %c7_i32 : i32 to index
    %c0_124 = arith.constant 0 : index
    %c0_125 = arith.constant 0 : index
    %422 = vector.load %arg9[%421, %c0_124, %c0_125] : memref<8x2x32xf32, #tpu.memory_space<vmem>>, vector<1x2x32xf32>
    %423 = vector.shape_cast %422 : vector<1x2x32xf32> to vector<2x32xf32>
    %424 = vector.shape_cast %420 : vector<2x32xf32> to vector<1x2x32xf32>
    tpu.vector_store %arg9[%421, %c0_124, %c0_125], %424 {strides = array<i32>} : memref<8x2x32xf32, #tpu.memory_space<vmem>>, vector<1x2x32xf32>,
    %c8_i32 = arith.constant 8 : i32
    %c0_126 = arith.constant 0 : index
    %c0_127 = arith.constant 0 : index
    %425 = vector.load %arg12[%c0_126, %c0_127] : memref<2x32xf32, #tpu.memory_space<vmem>>, vector<2x32xf32>
    tpu.vector_store %arg12[%c0_126, %c0_127], %420 {strides = array<i32>} : memref<2x32xf32, #tpu.memory_space<vmem>>, vector<2x32xf32>,
    %c0_128 = arith.constant 0 : index
    %c0_129 = arith.constant 0 : index
    %426 = vector.load %arg13[%c0_128, %c0_129] : memref<2x32xf32, #tpu.memory_space<vmem>>, vector<2x32xf32>
    tpu.vector_store %arg13[%c0_128, %c0_129], %400 {strides = array<i32>} : memref<2x32xf32, #tpu.memory_space<vmem>>, vector<2x32xf32>,
    %c0_i32_130 = arith.constant 0 : i32
    %427 = arith.cmpi eq, %arg1, %c0_i32_130 : i32
    %428 = arith.extui %427 : i1 to i32
    %c0_i32_131 = arith.constant 0 : i32
    %429 = arith.cmpi ne, %428, %c0_i32_131 : i32
    scf.if %429 {
      %c0_132 = arith.constant 0 : index
      %c0_133 = arith.constant 0 : index
      %430 = vector.load %arg10[%c0_132, %c0_133] : memref<2x32xf32, #tpu.memory_space<vmem>>, vector<2x32xf32>
      tpu.vector_store %arg10[%c0_132, %c0_133], %420 {strides = array<i32>} : memref<2x32xf32, #tpu.memory_space<vmem>>, vector<2x32xf32>,
      %c0_134 = arith.constant 0 : index
      %c0_135 = arith.constant 0 : index
      %431 = vector.load %arg11[%c0_134, %c0_135] : memref<2x32xf32, #tpu.memory_space<vmem>>, vector<2x32xf32>
      tpu.vector_store %arg11[%c0_134, %c0_135], %400 {strides = array<i32>} : memref<2x32xf32, #tpu.memory_space<vmem>>, vector<2x32xf32>,
    } else {
    }
    return
  }
  func.func @transform_0(%arg0: i32, %arg1: i32) -> (i32, i32, i32) {
    %c0_i32 = arith.constant 0 : i32
    %c0_i32_0 = arith.constant 0 : i32
    return %arg1, %arg0, %c0_i32 : i32, i32, i32
  }
  func.func @transform_1(%arg0: i32, %arg1: i32) -> (i32, i32) {
    %c0_i32 = arith.constant 0 : i32
    %c0_i32_0 = arith.constant 0 : i32
    return %arg0, %c0_i32 : i32, i32
  }
  func.func @transform_2(%arg0: i32, %arg1: i32) -> (i32, i32) {
    %c0_i32 = arith.constant 0 : i32
    %c0_i32_0 = arith.constant 0 : i32
    return %arg0, %c0_i32 : i32, i32
  }
  func.func @transform_3(%arg0: i32, %arg1: i32) -> (i32, i32, i32) {
    %c0_i32 = arith.constant 0 : i32
    %c0_i32_0 = arith.constant 0 : i32
    %c0_i32_1 = arith.constant 0 : i32
    return %arg0, %c0_i32, %c0_i32_0 : i32, i32, i32
  }
  func.func @transform_4(%arg0: i32, %arg1: i32) -> (i32, i32, i32) {
    %c0_i32 = arith.constant 0 : i32
    %c0_i32_0 = arith.constant 0 : i32
    %c0_i32_1 = arith.constant 0 : i32
    return %arg0, %c0_i32, %c0_i32_0 : i32, i32, i32
  }
  func.func @transform_5(%arg0: i32, %arg1: i32) -> (i32, i32) {
    %c0_i32 = arith.constant 0 : i32
    %c0_i32_0 = arith.constant 0 : i32
    %c0_i32_1 = arith.constant 0 : i32
    return %c0_i32, %c0_i32_0 : i32, i32
  }
  func.func @transform_6(%arg0: i32, %arg1: i32) -> (i32, i32) {
    %c0_i32 = arith.constant 0 : i32
    %c0_i32_0 = arith.constant 0 : i32
    %c0_i32_1 = arith.constant 0 : i32
    return %c0_i32, %c0_i32_0 : i32, i32
  }
  func.func @transform_7(%arg0: i32, %arg1: i32) -> (i32, i32, i32) {
    %c0_i32 = arith.constant 0 : i32
    %c0_i32_0 = arith.constant 0 : i32
    return %arg1, %arg0, %c0_i32 : i32, i32, i32
  }
  func.func @transform_8(%arg0: i32, %arg1: i32) -> (i32, i32) {
    %c0_i32 = arith.constant 0 : i32
    %c0_i32_0 = arith.constant 0 : i32
    return %arg0, %c0_i32 : i32, i32
  }
  func.func @transform_9(%arg0: i32, %arg1: i32) -> (i32, i32) {
    %c0_i32 = arith.constant 0 : i32
    %c0_i32_0 = arith.constant 0 : i32
    return %arg0, %c0_i32 : i32, i32
  }
}

</mosaic_0001>

<llo_original>
// kernel: tpu_custom_call.1
$region0: #{tpu_custom_call.1}
  #allocation0 [shape = 'u32[]', space=smem, size = 0x4, offset = 0x4, fixed_abs, tag = 'smem constant byte address 0x4 - core index']
  #allocation1 [shape = 'u32[72,128]{1,0:T(1,128)}', space=vmem, size = 0x9000, scoped, tag = 'internal scratch']
  #allocation2 [shape = 'f32[2,32]{1,0:T(2,128)}', space=vmem, size = 0x400, scoped, tag = 'scratch operand']
  #allocation3 [shape = 'f32[2,32]{1,0:T(2,128)}', space=vmem, size = 0x400, scoped, tag = 'scratch operand']
  %s0 = inlined_call_operand.hbm [shape: f32[8,2,128], index: 0, kind: input, shape index: {}]
  %s1 = inlined_call_operand.hbm [shape: f32[2,32], index: 1, kind: input, shape index: {}]
  %s2 = inlined_call_operand.hbm [shape: f32[2,32], index: 2, kind: input, shape index: {}]
  %s3 = inlined_call_operand.hbm [shape: f32[2,8,32], index: 3, kind: input, shape index: {}]
  %s4 = inlined_call_operand.hbm [shape: f32[2,8,32], index: 4, kind: input, shape index: {}]
  %s5 = inlined_call_operand.hbm [shape: f32[32,128], index: 5, kind: input, shape index: {}]
  %s6 = inlined_call_operand.hbm [shape: f32[32,32], index: 6, kind: input, shape index: {}]
  %s7 = inlined_call_operand.hbm [shape: f32[8,2,32], index: 7, kind: output, shape index: {0}]
  %s8 = inlined_call_operand.hbm [shape: f32[2,32], index: 8, kind: output, shape index: {1}]
  %s9 = inlined_call_operand.hbm [shape: f32[2,32], index: 9, kind: output, shape index: {2}]
  %10 = xla_tuple %s7, %s8, %s9
  %s11 = sld [smem:[#allocation0]]
  $region90: #{tpu_custom_call.1} parent=0
    _
  %s13 = ssub.s32 1, %s11
  %s14 = scalar_select 0, %s13, %s11
  $region1: #{tpu_custom_call.1} parent=0
    #allocation4 [shape = 'u8[8192]{0}', space=vmem, size = 0x2000, scoped, tag = 'input window, operand 0, single buffered']
    #allocation5 [shape = 's32[1]{0}', space=sflag, size = 0x4, scoped, tag = 'scoped memory for tpu_custom_call.1']
    #allocation6 [shape = 's32[1]{0}', space=sflag, size = 0x4, scoped, tag = 'scoped memory for tpu_custom_call.1']
    #allocation7 [shape = 'u8[1024]{0}', space=vmem, size = 0x400, scoped, tag = 'input window, operand 1, single buffered']
    #allocation8 [shape = 's32[1]{0}', space=sflag, size = 0x4, scoped, tag = 'scoped memory for tpu_custom_call.1']
    #allocation9 [shape = 'u8[1024]{0}', space=vmem, size = 0x400, scoped, tag = 'input window, operand 2, single buffered']
    #allocation10 [shape = 'u8[8192]{0}', space=vmem, size = 0x2000, scoped, tag = 'input window, operand 3, single buffered']
    #allocation11 [shape = 's32[1]{0}', space=sflag, size = 0x4, scoped, tag = 'scoped memory for tpu_custom_call.1']
    #allocation12 [shape = 'u8[8192]{0}', space=vmem, size = 0x2000, scoped, tag = 'input window, operand 4, single buffered']
    #allocation13 [shape = 'u8[16384]{0}', space=vmem, size = 0x4000, scoped, tag = 'input window, operand 5, single buffered']
    #allocation14 [shape = 's32[1]{0}', space=sflag, size = 0x4, scoped, tag = 'scoped memory for tpu_custom_call.1']
    #allocation15 [shape = 'u8[16384]{0}', space=vmem, size = 0x4000, scoped, tag = 'input window, operand 6, single buffered']
    #allocation16 [shape = 'u8[8192]{0}', space=vmem, size = 0x2000, scoped, tag = 'output window, operand 0, single buffered']
    #allocation17 [shape = 'u8[1024]{0}', space=vmem, size = 0x400, scoped, tag = 'output window, operand 1, single buffered']
    #allocation18 [shape = 's32[1]{0}', space=sflag, size = 0x4, scoped, tag = 'scoped memory for tpu_custom_call.1']
    #allocation19 [shape = 'u8[1024]{0}', space=vmem, size = 0x400, scoped, tag = 'output window, operand 2, single buffered']
    %15 = vsyncpa [#allocation5], 0
    %16 = vsyncpa [#allocation8], 0
    %17 = vsyncpa [#allocation11], 0
    %18 = vsyncpa [#allocation14], 0
    %19 = vsyncpa [#allocation6], 0
    %20 = vsyncpa [#allocation18], 0
    // Predicated region
    $region2: #{tpu_custom_call.1} parent=1 // pred_check
      _
    $region3: #{tpu_custom_call.1} parent=1 // pred_check_branch
      %22 = sbr.rel (0) target = $region5
    $region4: #{tpu_custom_call.1} parent=1 // pred_region
      %24 = vsyncadd [#allocation5], 0
      %s25 = sshll.u32 %s0, 4
      %s26 = int_to_ptr.hbm [resolvable:$true] %s25
      %s27 = sshll.u32 [#allocation4], 4
      %s28 = int_to_ptr.vmem [resolvable:$true] %s27
      %33 = dma.hbm_to_vmem [thread:$0]  %s26, 256, %s28, [#allocation5], 32, 32, 2
    $region5: #{tpu_custom_call.1} parent=1 // pred_fallthru
      _
    // Predicated region
    $region6: #{tpu_custom_call.1} parent=1 // pred_check
      _
    $region7: #{tpu_custom_call.1} parent=1 // pred_check_branch
      %35 = sbr.rel (0) target = $region9
    $region8: #{tpu_custom_call.1} parent=1 // pred_region
      %37 = vsyncadd [#allocation8], 0
      %s39 = sshll.u32 %s1, 4
      %s40 = int_to_ptr.hbm [resolvable:$true] %s39
      %s41 = sshll.u32 [#allocation7], 4
      %s42 = int_to_ptr.vmem [resolvable:$true] %s41
      %44 = dma.hbm_to_vmem [thread:$0]  %s40, 32, %s42, [#allocation8]
    $region9: #{tpu_custom_call.1} parent=1 // pred_fallthru
      _
    // Predicated region
    $region10: #{tpu_custom_call.1} parent=1 // pred_check
      _
    $region11: #{tpu_custom_call.1} parent=1 // pred_check_branch
      %46 = sbr.rel (0) target = $region13
    $region12: #{tpu_custom_call.1} parent=1 // pred_region
      %48 = vsyncadd [#allocation8], 0
      %s50 = sshll.u32 %s2, 4
      %s51 = int_to_ptr.hbm [resolvable:$true] %s50
      %s52 = sshll.u32 [#allocation9], 4
      %s53 = int_to_ptr.vmem [resolvable:$true] %s52
      %55 = dma.hbm_to_vmem [thread:$0]  %s51, 32, %s53, [#allocation8]
    $region13: #{tpu_custom_call.1} parent=1 // pred_fallthru
      _
    // Predicated region
    $region14: #{tpu_custom_call.1} parent=1 // pred_check
      _
    $region15: #{tpu_custom_call.1} parent=1 // pred_check_branch
      %57 = sbr.rel (0) target = $region17
    $region16: #{tpu_custom_call.1} parent=1 // pred_region
      %59 = vsyncadd [#allocation11], 0
      %s60 = sshll.u32 %s3, 4
      %s61 = int_to_ptr.hbm [resolvable:$true] %s60
      %s62 = sshll.u32 [#allocation10], 4
      %s63 = int_to_ptr.vmem [resolvable:$true] %s62
      %68 = dma.hbm_to_vmem [thread:$0]  %s61, 256, %s63, [#allocation11], 128, 128, 8
    $region17: #{tpu_custom_call.1} parent=1 // pred_fallthru
      _
    // Predicated region
    $region18: #{tpu_custom_call.1} parent=1 // pred_check
      _
    $region19: #{tpu_custom_call.1} parent=1 // pred_check_branch
      %70 = sbr.rel (0) target = $region21
    $region20: #{tpu_custom_call.1} parent=1 // pred_region
      %72 = vsyncadd [#allocation11], 0
      %s73 = sshll.u32 %s4, 4
      %s74 = int_to_ptr.hbm [resolvable:$true] %s73
      %s75 = sshll.u32 [#allocation12], 4
      %s76 = int_to_ptr.vmem [resolvable:$true] %s75
      %81 = dma.hbm_to_vmem [thread:$0]  %s74, 256, %s76, [#allocation11], 128, 128, 8
    $region21: #{tpu_custom_call.1} parent=1 // pred_fallthru
      _
    // Predicated region
    $region22: #{tpu_custom_call.1} parent=1 // pred_check
      _
    $region23: #{tpu_custom_call.1} parent=1 // pred_check_branch
      %83 = sbr.rel (0) target = $region25
    $region24: #{tpu_custom_call.1} parent=1 // pred_region
      %85 = vsyncadd [#allocation14], 0
      %s86 = sshll.u32 %s5, 4
      %s87 = int_to_ptr.hbm [resolvable:$true] %s86
      %s88 = sshll.u32 [#allocation13], 4
      %s89 = int_to_ptr.vmem [resolvable:$true] %s88
      %94 = dma.hbm_to_vmem [thread:$0]  %s87, 512, %s89, [#allocation14], 128, 128, 8
    $region25: #{tpu_custom_call.1} parent=1 // pred_fallthru
      _
    // Predicated region
    $region26: #{tpu_custom_call.1} parent=1 // pred_check
      _
    $region27: #{tpu_custom_call.1} parent=1 // pred_check_branch
      %96 = sbr.rel (0) target = $region29
    $region28: #{tpu_custom_call.1} parent=1 // pred_region
      %98 = vsyncadd [#allocation14], 0
      %s99 = sshll.u32 %s6, 4
      %s100 = int_to_ptr.hbm [resolvable:$true] %s99
      %s101 = sshll.u32 [#allocation15], 4
      %s102 = int_to_ptr.vmem [resolvable:$true] %s101
      %107 = dma.hbm_to_vmem [thread:$0]  %s100, 512, %s102, [#allocation14], 128, 128, 8
    $region29: #{tpu_custom_call.1} parent=1 // pred_fallthru
      _
    // Predicated region
    $region30: #{tpu_custom_call.1} parent=1 // pred_check
      _
    $region31: #{tpu_custom_call.1} parent=1 // pred_check_branch
      %109 = sbr.rel (0) target = $region33
    $region32: #{tpu_custom_call.1} parent=1 // pred_region
      %111 = dma.done [#allocation5], 256
    $region33: #{tpu_custom_call.1} parent=1 // pred_fallthru
      _
    // Predicated region
    $region34: #{tpu_custom_call.1} parent=1 // pred_check
      _
    $region35: #{tpu_custom_call.1} parent=1 // pred_check_branch
      %113 = sbr.rel (0) target = $region37
    $region36: #{tpu_custom_call.1} parent=1 // pred_region
      %115 = dma.done [#allocation8], 32
    $region37: #{tpu_custom_call.1} parent=1 // pred_fallthru
      _
    // Predicated region
    $region38: #{tpu_custom_call.1} parent=1 // pred_check
      _
    $region39: #{tpu_custom_call.1} parent=1 // pred_check_branch
      %117 = sbr.rel (0) target = $region41
    $region40: #{tpu_custom_call.1} parent=1 // pred_region
      %119 = dma.done [#allocation8], 32
    $region41: #{tpu_custom_call.1} parent=1 // pred_fallthru
      _
    // Predicated region
    $region42: #{tpu_custom_call.1} parent=1 // pred_check
      _
    $region43: #{tpu_custom_call.1} parent=1 // pred_check_branch
      %121 = sbr.rel (0) target = $region45
    $region44: #{tpu_custom_call.1} parent=1 // pred_region
      %123 = dma.done [#allocation11], 256
    $region45: #{tpu_custom_call.1} parent=1 // pred_fallthru
      _
    // Predicated region
    $region46: #{tpu_custom_call.1} parent=1 // pred_check
      _
    $region47: #{tpu_custom_call.1} parent=1 // pred_check_branch
      %125 = sbr.rel (0) target = $region49
    $region48: #{tpu_custom_call.1} parent=1 // pred_region
      %127 = dma.done [#allocation11], 256
    $region49: #{tpu_custom_call.1} parent=1 // pred_fallthru
      _
    // Predicated region
    $region50: #{tpu_custom_call.1} parent=1 // pred_check
      _
    $region51: #{tpu_custom_call.1} parent=1 // pred_check_branch
      %129 = sbr.rel (0) target = $region53
    $region52: #{tpu_custom_call.1} parent=1 // pred_region
      %131 = dma.done [#allocation14], 512
    $region53: #{tpu_custom_call.1} parent=1 // pred_fallthru
      _
    // Predicated region
    $region54: #{tpu_custom_call.1} parent=1 // pred_check
      _
    $region55: #{tpu_custom_call.1} parent=1 // pred_check_branch
      %133 = sbr.rel (0) target = $region57
    $region56: #{tpu_custom_call.1} parent=1 // pred_region
      %135 = dma.done [#allocation14], 512
    $region57: #{tpu_custom_call.1} parent=1 // pred_fallthru
      _
    %p136 = scmp.eq.s32.totalorder 0, 0
    // Predicated region
    $region58: #{tpu_custom_call.1} parent=1 // pred_check
      %p137 = pneg %p136
    $region59: #{tpu_custom_call.1} parent=1 // pred_check_branch
      %139 = sbr.rel (%p137) target = $region61
    $region60: #{tpu_custom_call.1} parent=1 // pred_region
      %v140 = vld [vmem:[#allocation7] sm:$0x3]
      %vm141 = vcmask 254976
      %142 = vst.msk [vmem:[#allocation2] sm:$0x3] %vm141, %v140
      %v143 = vld [vmem:[#allocation9] sm:$0x3]
      %144 = vst.msk [vmem:[#allocation3] sm:$0x3] %vm141, %v143
    $region61: #{tpu_custom_call.1} parent=1 // pred_fallthru
      _
    %v145 = vld [vmem:[#allocation10] sm:$0xff]
    %v146 = vld [vmem:[#allocation10 + $0x8] sm:$0xff]
    %v147 = vld [vmem:[#allocation12] sm:$0xff]
    %v148 = vld [vmem:[#allocation12 + $0x8] sm:$0xff]
    %v149 = vld [vmem:[#allocation13] sm:$0xff]
    %v150 = vld [vmem:[#allocation13 + $0x8] sm:$0xff]
    %v151 = vld [vmem:[#allocation13 + $0x10] sm:$0xff]
    %v152 = vld [vmem:[#allocation13 + $0x18] sm:$0xff]
    %v153 = vld [vmem:[#allocation15] sm:$0xff]
    %v154 = vld [vmem:[#allocation15 + $0x8] sm:$0xff]
    %v155 = vld [vmem:[#allocation15 + $0x10] sm:$0xff]
    %v156 = vld [vmem:[#allocation15 + $0x18] sm:$0xff]
    %v157 = vld [vmem:[#allocation2] sm:$0x3]
    %v158 = vld [vmem:[#allocation3] sm:$0x3]
    %v159 = vld [vmem:[#allocation4] sm:$0x3]
    %vm160 = vcmask 261120
    %v162 = vsel %vm160, %v157, 0
    %164 = vmatpush.msra.mxu0 0.0
    %165 = vmatpush.msra.mxu0 0.0
    %166 = vmatpush.msra.mxu0 0.0
    %167 = vmatpush.msra.mxu0 0.0
    %168 = vmatpush.msra.mxu0 0.0
    %169 = vmatpush.msra.mxu0 0.0
    %170 = vmatpush.msra.mxu0 0.0
    %171 = vmatpush.msra.mxu0 0.0
    %172 = vmatpush.msra.mxu0 0.0
    %173 = vmatpush.msra.mxu0 0.0
    %174 = vmatpush.msra.mxu0 0.0
    %175 = vmatpush.msra.mxu0 0.0
    %176 = vmatpush.msra.mxu0 %v152
    %177 = vmatpush.msra.mxu0 %v151
    %178 = vmatpush.msra.mxu0 %v150
    %179 = vmatpush.msra.mxu0 %v149
    %180 = vmatmul.f32.gmra.mxu0 %v162
    %v181 = vpop.f32.mrf.mxu0
    %v182 = vadd.f32 0.0, %v181
    %183 = vdwg.mxu0
    %v184 = vadd.f32 %v159, %v182
    %v185 = vxor.u32 %v184, 2147483648
    %v186 = vmul.f32 %v185, 1.442695
    %v187 = vpow.pop %v186
    %v188 = vadd.f32 %v187, 1.0
    %v189 = vrcp.pop %v188
    %v190 = vmul.f32 %v188, %v189
    %v191 = vsub.f32 1.0, %v190
    %v192 = vmul.f32 %v189, %v191
    %v193 = vadd.f32 %v189, %v192
    %vm194 = vweird.f32 %v188
    %vm195 = vweird.f32 %v189
    %vm196 = vmor %vm194, %vm195
    %v197 = vsel %vm196, %v189, %v193
    %v198 = vand.u32 2147483647, %v188
    %vm199 = vcmp.eq.f32.partialorder %v198, 8.507059e+37
    %v200 = vand.u32 %v188, 2147483648
    %v201 = vor.u32 1.1754944e-38, %v200
    %v202 = vsel %vm199, %v201, %v197
    %v203 = vmul.f32 1.0, %v202
    %v204 = vtanh.pop %v184
    %206 = vrot.lane.b32.xlu0 %v158, 32
    %v207 = vpop.permute.xlu0 %206
    %v209 = vmul.f32 %v203, %v207
    %211 = vrot.lane.b32.xlu0 %v204, 64
    %v212 = vpop.permute.xlu0 %211
    %v214 = vmul.f32 %v203, %v212
    %216 = vrot.lane.b32.xlu0 %v214, 32
    %v217 = vpop.permute.xlu0 %216
    %v219 = vadd.f32 %v209, %v217
    %v220 = vtanh.pop %v219
    %222 = vrot.lane.b32.xlu0 %v220, 64
    %v223 = vpop.permute.xlu0 %222
    %v225 = vmul.f32 %v203, %v223
    %v227 = vrot.slane %v225, 1
    %v228 = vperm.slane %v225, 0
    %229 = vrot.lane.b32.xlu0 %v228, 32
    %v230 = vpop.permute.xlu0 %229
    %v231 = vsel %vm160, %v230, 0
    %v234 = vsel %vm160, %v145, 0
    %236 = vmatpush.xpose.msra.mxu0 0.0
    %237 = vmatpush.xpose.msra.mxu0 0.0
    %238 = vmatpush.xpose.msra.mxu0 0.0
    %239 = vmatpush.xpose.msra.mxu0 0.0
    %240 = vmatpush.xpose.msra.mxu0 0.0
    %241 = vmatpush.xpose.msra.mxu0 0.0
    %242 = vmatpush.xpose.msra.mxu0 0.0
    %243 = vmatpush.xpose.msra.mxu0 0.0
    %244 = vmatpush.xpose.msra.mxu0 0.0
    %245 = vmatpush.xpose.msra.mxu0 0.0
    %246 = vmatpush.xpose.msra.mxu0 0.0
    %247 = vmatpush.xpose.msra.mxu0 0.0
    %248 = vmatpush.xpose.msra.mxu0 0.0
    %249 = vmatpush.xpose.msra.mxu0 0.0
    %250 = vmatpush.xpose.msra.mxu0 0.0
    %251 = vmatpush.xpose.msra.mxu0 %v234
    %252 = vmatmul.f32.gmra.mxu0 %v231
    %v253 = vpop.f32.mrf.mxu0
    %v254 = vadd.f32 0.0, %v253
    %255 = vdwg.mxu0
    %v256 = vperm.slane %v227, 0
    %257 = vrot.lane.b32.xlu0 %v256, 32
    %v258 = vpop.permute.xlu0 %257
    %v259 = vsel %vm160, %v258, 0
    %v262 = vsel %vm160, %v146, 0
    %264 = vmatpush.xpose.msra.mxu0 0.0
    %265 = vmatpush.xpose.msra.mxu0 0.0
    %266 = vmatpush.xpose.msra.mxu0 0.0
    %267 = vmatpush.xpose.msra.mxu0 0.0
    %268 = vmatpush.xpose.msra.mxu0 0.0
    %269 = vmatpush.xpose.msra.mxu0 0.0
    %270 = vmatpush.xpose.msra.mxu0 0.0
    %271 = vmatpush.xpose.msra.mxu0 0.0
    %272 = vmatpush.xpose.msra.mxu0 0.0
    %273 = vmatpush.xpose.msra.mxu0 0.0
    %274 = vmatpush.xpose.msra.mxu0 0.0
    %275 = vmatpush.xpose.msra.mxu0 0.0
    %276 = vmatpush.xpose.msra.mxu0 0.0
    %277 = vmatpush.xpose.msra.mxu0 0.0
    %278 = vmatpush.xpose.msra.mxu0 0.0
    %279 = vmatpush.xpose.msra.mxu0 %v262
    %280 = vmatmul.f32.gmra.mxu0 %v259
    %v281 = vpop.f32.mrf.mxu0
    %v282 = vadd.f32 0.0, %v281
    %283 = vdwg.mxu0
    %vm284 = vcmask 57344
    %v285 = vsel %vm284, %v254, -inf
    %286 = vmax.xlane.f32.xlu0 %v285
    %v287 = vpop.xlane.xlu0 %286
    %v288 = vsel %vm284, %v282, -inf
    %289 = vmax.xlane.f32.xlu0 %v288
    %v290 = vpop.xlane.xlu0 %289
    %v291 = vsub.f32 %v254, %v287
    %v292 = vsub.f32 %v282, %v290
    %v293 = vmul.f32 %v291, 1.442695
    %v294 = vpow.pop %v293
    %v295 = vmul.f32 %v292, 1.442695
    %v296 = vpow.pop %v295
    %v297 = vsel %vm284, %v294, 0.0
    %298 = vadd.xlane.f32.xlu0 %v297
    %v299 = vpop.xlane.xlu0 %298
    %v300 = vsel %vm284, %v296, 0.0
    %301 = vadd.xlane.f32.xlu0 %v300
    %v302 = vpop.xlane.xlu0 %301
    %v303 = vrcp.pop %v299
    %v304 = vmul.f32 %v299, %v303
    %v305 = vsub.f32 1.0, %v304
    %v306 = vmul.f32 %v303, %v305
    %v307 = vadd.f32 %v303, %v306
    %vm308 = vweird.f32 %v299
    %vm309 = vweird.f32 %v303
    %vm310 = vmor %vm308, %vm309
    %v311 = vsel %vm310, %v303, %v307
    %v312 = vand.u32 2147483647, %v299
    %vm313 = vcmp.eq.f32.partialorder %v312, 8.507059e+37
    %v314 = vand.u32 %v299, 2147483648
    %v315 = vor.u32 1.1754944e-38, %v314
    %v316 = vsel %vm313, %v315, %v311
    %v317 = vmul.f32 %v294, %v316
    %v318 = vrcp.pop %v302
    %v319 = vmul.f32 %v302, %v318
    %v320 = vsub.f32 1.0, %v319
    %v321 = vmul.f32 %v318, %v320
    %v322 = vadd.f32 %v318, %v321
    %vm323 = vweird.f32 %v302
    %vm324 = vweird.f32 %v318
    %vm325 = vmor %vm323, %vm324
    %v326 = vsel %vm325, %v318, %v322
    %v327 = vand.u32 2147483647, %v302
    %vm328 = vcmp.eq.f32.partialorder %v327, 8.507059e+37
    %v329 = vand.u32 %v302, 2147483648
    %v330 = vor.u32 1.1754944e-38, %v329
    %v331 = vsel %vm328, %v330, %v326
    %v332 = vmul.f32 %v296, %v331
    %vm333 = vcmask 64512
    %v335 = vsel %vm333, %v317, 0
    %337 = vmatpush.msra.mxu0 0.0
    %338 = vmatpush.msra.mxu0 0.0
    %339 = vmatpush.msra.mxu0 0.0
    %340 = vmatpush.msra.mxu0 0.0
    %341 = vmatpush.msra.mxu0 0.0
    %342 = vmatpush.msra.mxu0 0.0
    %343 = vmatpush.msra.mxu0 0.0
    %344 = vmatpush.msra.mxu0 0.0
    %345 = vmatpush.msra.mxu0 0.0
    %346 = vmatpush.msra.mxu0 0.0
    %347 = vmatpush.msra.mxu0 0.0
    %348 = vmatpush.msra.mxu0 0.0
    %349 = vmatpush.msra.mxu0 0.0
    %350 = vmatpush.msra.mxu0 0.0
    %351 = vmatpush.msra.mxu0 0.0
    %352 = vmatpush.msra.mxu0 %v147
    %353 = vmatmul.f32.gmra.mxu0 %v335
    %v354 = vpop.f32.mrf.mxu0
    %v355 = vadd.f32 0.0, %v354
    %356 = vdwg.mxu0
    %v358 = vsel %vm333, %v332, 0
    %360 = vmatpush.msra.mxu0 0.0
    %361 = vmatpush.msra.mxu0 0.0
    %362 = vmatpush.msra.mxu0 0.0
    %363 = vmatpush.msra.mxu0 0.0
    %364 = vmatpush.msra.mxu0 0.0
    %365 = vmatpush.msra.mxu0 0.0
    %366 = vmatpush.msra.mxu0 0.0
    %367 = vmatpush.msra.mxu0 0.0
    %368 = vmatpush.msra.mxu0 0.0
    %369 = vmatpush.msra.mxu0 0.0
    %370 = vmatpush.msra.mxu0 0.0
    %371 = vmatpush.msra.mxu0 0.0
    %372 = vmatpush.msra.mxu0 0.0
    %373 = vmatpush.msra.mxu0 0.0
    %374 = vmatpush.msra.mxu0 0.0
    %375 = vmatpush.msra.mxu0 %v148
    %376 = vmatmul.f32.gmra.mxu0 %v358
    %v377 = vpop.f32.mrf.mxu0
    %v378 = vadd.f32 0.0, %v377
    %379 = vdwg.mxu0
    %380 = vrot.lane.b32.xlu0 %v225, 32
    %v381 = vpop.permute.xlu0 %380
    %v382 = vsel %vm160, %v381, 0
    %384 = vmatpush.msra.mxu0 0.0
    %385 = vmatpush.msra.mxu0 0.0
    %386 = vmatpush.msra.mxu0 0.0
    %387 = vmatpush.msra.mxu0 0.0
    %388 = vmatpush.msra.mxu0 0.0
    %389 = vmatpush.msra.mxu0 0.0
    %390 = vmatpush.msra.mxu0 0.0
    %391 = vmatpush.msra.mxu0 0.0
    %392 = vmatpush.msra.mxu0 0.0
    %393 = vmatpush.msra.mxu0 0.0
    %394 = vmatpush.msra.mxu0 0.0
    %395 = vmatpush.msra.mxu0 0.0
    %396 = vmatpush.msra.mxu0 %v156
    %397 = vmatpush.msra.mxu0 %v155
    %398 = vmatpush.msra.mxu0 %v154
    %399 = vmatpush.msra.mxu0 %v153
    %400 = vmatmul.f32.gmra.mxu0 %v382
    %v401 = vpop.f32.mrf.mxu0
    %v402 = vadd.f32 0.0, %v401
    %403 = vdwg.mxu0
    %v405 = vrot.slane %v402, 1
    %v408 = vadd.f32 %v355, %v402
    %v409 = vadd.f32 %v378, %v405
    %v410 = vtanh.pop %v408
    %v411 = vtanh.pop %v409
    %v414 = vrot.slane %v411, 7
    %vm415 = vcmask 1041409
    %v416 = vsel %vm415, %v414, %v410
    %vm418 = vcmask 254976
    %419 = vst.msk [vmem:[#allocation16] sm:$0x3] %vm418, %v416
    %s420 = scalar_lea.vmem [#allocation4], 2
    %v421 = vld [vmem:[%s420] sm:$0x3]
    %v422 = vsel %vm160, %v416, 0
    %424 = vmatpush.msra.mxu0 0.0
    %425 = vmatpush.msra.mxu0 0.0
    %426 = vmatpush.msra.mxu0 0.0
    %427 = vmatpush.msra.mxu0 0.0
    %428 = vmatpush.msra.mxu0 0.0
    %429 = vmatpush.msra.mxu0 0.0
    %430 = vmatpush.msra.mxu0 0.0
    %431 = vmatpush.msra.mxu0 0.0
    %432 = vmatpush.msra.mxu0 0.0
    %433 = vmatpush.msra.mxu0 0.0
    %434 = vmatpush.msra.mxu0 0.0
    %435 = vmatpush.msra.mxu0 0.0
    %436 = vmatpush.msra.mxu0 %v152
    %437 = vmatpush.msra.mxu0 %v151
    %438 = vmatpush.msra.mxu0 %v150
    %439 = vmatpush.msra.mxu0 %v149
    %440 = vmatmul.f32.gmra.mxu0 %v422
    %v441 = vpop.f32.mrf.mxu0
    %v442 = vadd.f32 0.0, %v441
    %443 = vdwg.mxu0
    %v444 = vadd.f32 %v421, %v442
    %v445 = vxor.u32 %v444, 2147483648
    %v446 = vmul.f32 %v445, 1.442695
    %v447 = vpow.pop %v446
    %v448 = vadd.f32 %v447, 1.0
    %v449 = vrcp.pop %v448
    %v450 = vmul.f32 %v448, %v449
    %v451 = vsub.f32 1.0, %v450
    %v452 = vmul.f32 %v449, %v451
    %v453 = vadd.f32 %v449, %v452
    %vm454 = vweird.f32 %v448
    %vm455 = vweird.f32 %v449
    %vm456 = vmor %vm454, %vm455
    %v457 = vsel %vm456, %v449, %v453
    %v458 = vand.u32 2147483647, %v448
    %vm459 = vcmp.eq.f32.partialorder %v458, 8.507059e+37
    %v460 = vand.u32 %v448, 2147483648
    %v461 = vor.u32 1.1754944e-38, %v460
    %v462 = vsel %vm459, %v461, %v457
    %v463 = vmul.f32 1.0, %v462
    %v464 = vtanh.pop %v444
    %v465 = vmul.f32 %v463, %v219
    %467 = vrot.lane.b32.xlu0 %v464, 64
    %v468 = vpop.permute.xlu0 %467
    %v470 = vmul.f32 %v463, %v468
    %472 = vrot.lane.b32.xlu0 %v470, 32
    %v473 = vpop.permute.xlu0 %472
    %v475 = vadd.f32 %v465, %v473
    %v476 = vtanh.pop %v475
    %478 = vrot.lane.b32.xlu0 %v476, 64
    %v479 = vpop.permute.xlu0 %478
    %v481 = vmul.f32 %v463, %v479
    %v483 = vrot.slane %v481, 1
    %v484 = vperm.slane %v481, 0
    %485 = vrot.lane.b32.xlu0 %v484, 32
    %v486 = vpop.permute.xlu0 %485
    %v487 = vsel %vm160, %v486, 0
    %489 = vmatpush.xpose.msra.mxu0 0.0
    %490 = vmatpush.xpose.msra.mxu0 0.0
    %491 = vmatpush.xpose.msra.mxu0 0.0
    %492 = vmatpush.xpose.msra.mxu0 0.0
    %493 = vmatpush.xpose.msra.mxu0 0.0
    %494 = vmatpush.xpose.msra.mxu0 0.0
    %495 = vmatpush.xpose.msra.mxu0 0.0
    %496 = vmatpush.xpose.msra.mxu0 0.0
    %497 = vmatpush.xpose.msra.mxu0 0.0
    %498 = vmatpush.xpose.msra.mxu0 0.0
    %499 = vmatpush.xpose.msra.mxu0 0.0
    %500 = vmatpush.xpose.msra.mxu0 0.0
    %501 = vmatpush.xpose.msra.mxu0 0.0
    %502 = vmatpush.xpose.msra.mxu0 0.0
    %503 = vmatpush.xpose.msra.mxu0 0.0
    %504 = vmatpush.xpose.msra.mxu0 %v234
    %505 = vmatmul.f32.gmra.mxu0 %v487
    %v506 = vpop.f32.mrf.mxu0
    %v507 = vadd.f32 0.0, %v506
    %508 = vdwg.mxu0
    %v509 = vperm.slane %v483, 0
    %510 = vrot.lane.b32.xlu0 %v509, 32
    %v511 = vpop.permute.xlu0 %510
    %v512 = vsel %vm160, %v511, 0
    %514 = vmatpush.xpose.msra.mxu0 0.0
    %515 = vmatpush.xpose.msra.mxu0 0.0
    %516 = vmatpush.xpose.msra.mxu0 0.0
    %517 = vmatpush.xpose.msra.mxu0 0.0
    %518 = vmatpush.xpose.msra.mxu0 0.0
    %519 = vmatpush.xpose.msra.mxu0 0.0
    %520 = vmatpush.xpose.msra.mxu0 0.0
    %521 = vmatpush.xpose.msra.mxu0 0.0
    %522 = vmatpush.xpose.msra.mxu0 0.0
    %523 = vmatpush.xpose.msra.mxu0 0.0
    %524 = vmatpush.xpose.msra.mxu0 0.0
    %525 = vmatpush.xpose.msra.mxu0 0.0
    %526 = vmatpush.xpose.msra.mxu0 0.0
    %527 = vmatpush.xpose.msra.mxu0 0.0
    %528 = vmatpush.xpose.msra.mxu0 0.0
    %529 = vmatpush.xpose.msra.mxu0 %v262
    %530 = vmatmul.f32.gmra.mxu0 %v512
    %v531 = vpop.f32.mrf.mxu0
    %v532 = vadd.f32 0.0, %v531
    %533 = vdwg.mxu0
    %v534 = vsel %vm284, %v507, -inf
    %535 = vmax.xlane.f32.xlu0 %v534
    %v536 = vpop.xlane.xlu0 %535
    %v537 = vsel %vm284, %v532, -inf
    %538 = vmax.xlane.f32.xlu0 %v537
    %v539 = vpop.xlane.xlu0 %538
    %v540 = vsub.f32 %v507, %v536
    %v541 = vsub.f32 %v532, %v539
    %v542 = vmul.f32 %v540, 1.442695
    %v543 = vpow.pop %v542
    %v544 = vmul.f32 %v541, 1.442695
    %v545 = vpow.pop %v544
    %v546 = vsel %vm284, %v543, 0.0
    %547 = vadd.xlane.f32.xlu0 %v546
    %v548 = vpop.xlane.xlu0 %547
    %v549 = vsel %vm284, %v545, 0.0
    %550 = vadd.xlane.f32.xlu0 %v549
    %v551 = vpop.xlane.xlu0 %550
    %v552 = vrcp.pop %v548
    %v553 = vmul.f32 %v548, %v552
    %v554 = vsub.f32 1.0, %v553
    %v555 = vmul.f32 %v552, %v554
    %v556 = vadd.f32 %v552, %v555
    %vm557 = vweird.f32 %v548
    %vm558 = vweird.f32 %v552
    %vm559 = vmor %vm557, %vm558
    %v560 = vsel %vm559, %v552, %v556
    %v561 = vand.u32 2147483647, %v548
    %vm562 = vcmp.eq.f32.partialorder %v561, 8.507059e+37
    %v563 = vand.u32 %v548, 2147483648
    %v564 = vor.u32 1.1754944e-38, %v563
    %v565 = vsel %vm562, %v564, %v560
    %v566 = vmul.f32 %v543, %v565
    %v567 = vrcp.pop %v551
    %v568 = vmul.f32 %v551, %v567
    %v569 = vsub.f32 1.0, %v568
    %v570 = vmul.f32 %v567, %v569
    %v571 = vadd.f32 %v567, %v570
    %vm572 = vweird.f32 %v551
    %vm573 = vweird.f32 %v567
    %vm574 = vmor %vm572, %vm573
    %v575 = vsel %vm574, %v567, %v571
    %v576 = vand.u32 2147483647, %v551
    %vm577 = vcmp.eq.f32.partialorder %v576, 8.507059e+37
    %v578 = vand.u32 %v551, 2147483648
    %v579 = vor.u32 1.1754944e-38, %v578
    %v580 = vsel %vm577, %v579, %v575
    %v581 = vmul.f32 %v545, %v580
    %v583 = vsel %vm333, %v566, 0
    %585 = vmatpush.msra.mxu0 0.0
    %586 = vmatpush.msra.mxu0 0.0
    %587 = vmatpush.msra.mxu0 0.0
    %588 = vmatpush.msra.mxu0 0.0
    %589 = vmatpush.msra.mxu0 0.0
    %590 = vmatpush.msra.mxu0 0.0
    %591 = vmatpush.msra.mxu0 0.0
    %592 = vmatpush.msra.mxu0 0.0
    %593 = vmatpush.msra.mxu0 0.0
    %594 = vmatpush.msra.mxu0 0.0
    %595 = vmatpush.msra.mxu0 0.0
    %596 = vmatpush.msra.mxu0 0.0
    %597 = vmatpush.msra.mxu0 0.0
    %598 = vmatpush.msra.mxu0 0.0
    %599 = vmatpush.msra.mxu0 0.0
    %600 = vmatpush.msra.mxu0 %v147
    %601 = vmatmul.f32.gmra.mxu0 %v583
    %v602 = vpop.f32.mrf.mxu0
    %v603 = vadd.f32 0.0, %v602
    %604 = vdwg.mxu0
    %v606 = vsel %vm333, %v581, 0
    %608 = vmatpush.msra.mxu0 0.0
    %609 = vmatpush.msra.mxu0 0.0
    %610 = vmatpush.msra.mxu0 0.0
    %611 = vmatpush.msra.mxu0 0.0
    %612 = vmatpush.msra.mxu0 0.0
    %613 = vmatpush.msra.mxu0 0.0
    %614 = vmatpush.msra.mxu0 0.0
    %615 = vmatpush.msra.mxu0 0.0
    %616 = vmatpush.msra.mxu0 0.0
    %617 = vmatpush.msra.mxu0 0.0
    %618 = vmatpush.msra.mxu0 0.0
    %619 = vmatpush.msra.mxu0 0.0
    %620 = vmatpush.msra.mxu0 0.0
    %621 = vmatpush.msra.mxu0 0.0
    %622 = vmatpush.msra.mxu0 0.0
    %623 = vmatpush.msra.mxu0 %v148
    %624 = vmatmul.f32.gmra.mxu0 %v606
    %v625 = vpop.f32.mrf.mxu0
    %v626 = vadd.f32 0.0, %v625
    %627 = vdwg.mxu0
    %628 = vrot.lane.b32.xlu0 %v481, 32
    %v629 = vpop.permute.xlu0 %628
    %v630 = vsel %vm160, %v629, 0
    %632 = vmatpush.msra.mxu0 0.0
    %633 = vmatpush.msra.mxu0 0.0
    %634 = vmatpush.msra.mxu0 0.0
    %635 = vmatpush.msra.mxu0 0.0
    %636 = vmatpush.msra.mxu0 0.0
    %637 = vmatpush.msra.mxu0 0.0
    %638 = vmatpush.msra.mxu0 0.0
    %639 = vmatpush.msra.mxu0 0.0
    %640 = vmatpush.msra.mxu0 0.0
    %641 = vmatpush.msra.mxu0 0.0
    %642 = vmatpush.msra.mxu0 0.0
    %643 = vmatpush.msra.mxu0 0.0
    %644 = vmatpush.msra.mxu0 %v156
    %645 = vmatpush.msra.mxu0 %v155
    %646 = vmatpush.msra.mxu0 %v154
    %647 = vmatpush.msra.mxu0 %v153
    %648 = vmatmul.f32.gmra.mxu0 %v630
    %v649 = vpop.f32.mrf.mxu0
    %v650 = vadd.f32 0.0, %v649
    %651 = vdwg.mxu0
    %v653 = vrot.slane %v650, 1
    %v656 = vadd.f32 %v603, %v650
    %v657 = vadd.f32 %v626, %v653
    %v658 = vtanh.pop %v656
    %v659 = vtanh.pop %v657
    %v662 = vrot.slane %v659, 7
    %v663 = vsel %vm415, %v662, %v658
    %s665 = scalar_lea.vmem [#allocation16], 2
    %666 = vst.msk [vmem:[%s665] sm:$0x3] %vm418, %v663
    %s667 = scalar_lea.vmem [#allocation4], 4
    %v668 = vld [vmem:[%s667] sm:$0x3]
    %v669 = vsel %vm160, %v663, 0
    %671 = vmatpush.msra.mxu0 0.0
    %672 = vmatpush.msra.mxu0 0.0
    %673 = vmatpush.msra.mxu0 0.0
    %674 = vmatpush.msra.mxu0 0.0
    %675 = vmatpush.msra.mxu0 0.0
    %676 = vmatpush.msra.mxu0 0.0
    %677 = vmatpush.msra.mxu0 0.0
    %678 = vmatpush.msra.mxu0 0.0
    %679 = vmatpush.msra.mxu0 0.0
    %680 = vmatpush.msra.mxu0 0.0
    %681 = vmatpush.msra.mxu0 0.0
    %682 = vmatpush.msra.mxu0 0.0
    %683 = vmatpush.msra.mxu0 %v152
    %684 = vmatpush.msra.mxu0 %v151
    %685 = vmatpush.msra.mxu0 %v150
    %686 = vmatpush.msra.mxu0 %v149
    %687 = vmatmul.f32.gmra.mxu0 %v669
    %v688 = vpop.f32.mrf.mxu0
    %v689 = vadd.f32 0.0, %v688
    %690 = vdwg.mxu0
    %v691 = vadd.f32 %v668, %v689
    %v692 = vxor.u32 %v691, 2147483648
    %v693 = vmul.f32 %v692, 1.442695
    %v694 = vpow.pop %v693
    %v695 = vadd.f32 %v694, 1.0
    %v696 = vrcp.pop %v695
    %v697 = vmul.f32 %v695, %v696
    %v698 = vsub.f32 1.0, %v697
    %v699 = vmul.f32 %v696, %v698
    %v700 = vadd.f32 %v696, %v699
    %vm701 = vweird.f32 %v695
    %vm702 = vweird.f32 %v696
    %vm703 = vmor %vm701, %vm702
    %v704 = vsel %vm703, %v696, %v700
    %v705 = vand.u32 2147483647, %v695
    %vm706 = vcmp.eq.f32.partialorder %v705, 8.507059e+37
    %v707 = vand.u32 %v695, 2147483648
    %v708 = vor.u32 1.1754944e-38, %v707
    %v709 = vsel %vm706, %v708, %v704
    %v710 = vmul.f32 1.0, %v709
    %v711 = vtanh.pop %v691
    %v712 = vmul.f32 %v710, %v475
    %714 = vrot.lane.b32.xlu0 %v711, 64
    %v715 = vpop.permute.xlu0 %714
    %v717 = vmul.f32 %v710, %v715
    %719 = vrot.lane.b32.xlu0 %v717, 32
    %v720 = vpop.permute.xlu0 %719
    %v722 = vadd.f32 %v712, %v720
    %v723 = vtanh.pop %v722
    %725 = vrot.lane.b32.xlu0 %v723, 64
    %v726 = vpop.permute.xlu0 %725
    %v728 = vmul.f32 %v710, %v726
    %v730 = vrot.slane %v728, 1
    %v731 = vperm.slane %v728, 0
    %732 = vrot.lane.b32.xlu0 %v731, 32
    %v733 = vpop.permute.xlu0 %732
    %v734 = vsel %vm160, %v733, 0
    %736 = vmatpush.xpose.msra.mxu0 0.0
    %737 = vmatpush.xpose.msra.mxu0 0.0
    %738 = vmatpush.xpose.msra.mxu0 0.0
    %739 = vmatpush.xpose.msra.mxu0 0.0
    %740 = vmatpush.xpose.msra.mxu0 0.0
    %741 = vmatpush.xpose.msra.mxu0 0.0
    %742 = vmatpush.xpose.msra.mxu0 0.0
    %743 = vmatpush.xpose.msra.mxu0 0.0
    %744 = vmatpush.xpose.msra.mxu0 0.0
    %745 = vmatpush.xpose.msra.mxu0 0.0
    %746 = vmatpush.xpose.msra.mxu0 0.0
    %747 = vmatpush.xpose.msra.mxu0 0.0
    %748 = vmatpush.xpose.msra.mxu0 0.0
    %749 = vmatpush.xpose.msra.mxu0 0.0
    %750 = vmatpush.xpose.msra.mxu0 0.0
    %751 = vmatpush.xpose.msra.mxu0 %v234
    %752 = vmatmul.f32.gmra.mxu0 %v734
    %v753 = vpop.f32.mrf.mxu0
    %v754 = vadd.f32 0.0, %v753
    %755 = vdwg.mxu0
    %v756 = vperm.slane %v730, 0
    %757 = vrot.lane.b32.xlu0 %v756, 32
    %v758 = vpop.permute.xlu0 %757
    %v759 = vsel %vm160, %v758, 0
    %761 = vmatpush.xpose.msra.mxu0 0.0
    %762 = vmatpush.xpose.msra.mxu0 0.0
    %763 = vmatpush.xpose.msra.mxu0 0.0
    %764 = vmatpush.xpose.msra.mxu0 0.0
    %765 = vmatpush.xpose.msra.mxu0 0.0
    %766 = vmatpush.xpose.msra.mxu0 0.0
    %767 = vmatpush.xpose.msra.mxu0 0.0
    %768 = vmatpush.xpose.msra.mxu0 0.0
    %769 = vmatpush.xpose.msra.mxu0 0.0
    %770 = vmatpush.xpose.msra.mxu0 0.0
    %771 = vmatpush.xpose.msra.mxu0 0.0
    %772 = vmatpush.xpose.msra.mxu0 0.0
    %773 = vmatpush.xpose.msra.mxu0 0.0
    %774 = vmatpush.xpose.msra.mxu0 0.0
    %775 = vmatpush.xpose.msra.mxu0 0.0
    %776 = vmatpush.xpose.msra.mxu0 %v262
    %777 = vmatmul.f32.gmra.mxu0 %v759
    %v778 = vpop.f32.mrf.mxu0
    %v779 = vadd.f32 0.0, %v778
    %780 = vdwg.mxu0
    %v781 = vsel %vm284, %v754, -inf
    %782 = vmax.xlane.f32.xlu0 %v781
    %v783 = vpop.xlane.xlu0 %782
    %v784 = vsel %vm284, %v779, -inf
    %785 = vmax.xlane.f32.xlu0 %v784
    %v786 = vpop.xlane.xlu0 %785
    %v787 = vsub.f32 %v754, %v783
    %v788 = vsub.f32 %v779, %v786
    %v789 = vmul.f32 %v787, 1.442695
    %v790 = vpow.pop %v789
    %v791 = vmul.f32 %v788, 1.442695
    %v792 = vpow.pop %v791
    %v793 = vsel %vm284, %v790, 0.0
    %794 = vadd.xlane.f32.xlu0 %v793
    %v795 = vpop.xlane.xlu0 %794
    %v796 = vsel %vm284, %v792, 0.0
    %797 = vadd.xlane.f32.xlu0 %v796
    %v798 = vpop.xlane.xlu0 %797
    %v799 = vrcp.pop %v795
    %v800 = vmul.f32 %v795, %v799
    %v801 = vsub.f32 1.0, %v800
    %v802 = vmul.f32 %v799, %v801
    %v803 = vadd.f32 %v799, %v802
    %vm804 = vweird.f32 %v795
    %vm805 = vweird.f32 %v799
    %vm806 = vmor %vm804, %vm805
    %v807 = vsel %vm806, %v799, %v803
    %v808 = vand.u32 2147483647, %v795
    %vm809 = vcmp.eq.f32.partialorder %v808, 8.507059e+37
    %v810 = vand.u32 %v795, 2147483648
    %v811 = vor.u32 1.1754944e-38, %v810
    %v812 = vsel %vm809, %v811, %v807
    %v813 = vmul.f32 %v790, %v812
    %v814 = vrcp.pop %v798
    %v815 = vmul.f32 %v798, %v814
    %v816 = vsub.f32 1.0, %v815
    %v817 = vmul.f32 %v814, %v816
    %v818 = vadd.f32 %v814, %v817
    %vm819 = vweird.f32 %v798
    %vm820 = vweird.f32 %v814
    %vm821 = vmor %vm819, %vm820
    %v822 = vsel %vm821, %v814, %v818
    %v823 = vand.u32 2147483647, %v798
    %vm824 = vcmp.eq.f32.partialorder %v823, 8.507059e+37
    %v825 = vand.u32 %v798, 2147483648
    %v826 = vor.u32 1.1754944e-38, %v825
    %v827 = vsel %vm824, %v826, %v822
    %v828 = vmul.f32 %v792, %v827
    %v830 = vsel %vm333, %v813, 0
    %832 = vmatpush.msra.mxu0 0.0
    %833 = vmatpush.msra.mxu0 0.0
    %834 = vmatpush.msra.mxu0 0.0
    %835 = vmatpush.msra.mxu0 0.0
    %836 = vmatpush.msra.mxu0 0.0
    %837 = vmatpush.msra.mxu0 0.0
    %838 = vmatpush.msra.mxu0 0.0
    %839 = vmatpush.msra.mxu0 0.0
    %840 = vmatpush.msra.mxu0 0.0
    %841 = vmatpush.msra.mxu0 0.0
    %842 = vmatpush.msra.mxu0 0.0
    %843 = vmatpush.msra.mxu0 0.0
    %844 = vmatpush.msra.mxu0 0.0
    %845 = vmatpush.msra.mxu0 0.0
    %846 = vmatpush.msra.mxu0 0.0
    %847 = vmatpush.msra.mxu0 %v147
    %848 = vmatmul.f32.gmra.mxu0 %v830
    %v849 = vpop.f32.mrf.mxu0
    %v850 = vadd.f32 0.0, %v849
    %851 = vdwg.mxu0
    %v853 = vsel %vm333, %v828, 0
    %855 = vmatpush.msra.mxu0 0.0
    %856 = vmatpush.msra.mxu0 0.0
    %857 = vmatpush.msra.mxu0 0.0
    %858 = vmatpush.msra.mxu0 0.0
    %859 = vmatpush.msra.mxu0 0.0
    %860 = vmatpush.msra.mxu0 0.0
    %861 = vmatpush.msra.mxu0 0.0
    %862 = vmatpush.msra.mxu0 0.0
    %863 = vmatpush.msra.mxu0 0.0
    %864 = vmatpush.msra.mxu0 0.0
    %865 = vmatpush.msra.mxu0 0.0
    %866 = vmatpush.msra.mxu0 0.0
    %867 = vmatpush.msra.mxu0 0.0
    %868 = vmatpush.msra.mxu0 0.0
    %869 = vmatpush.msra.mxu0 0.0
    %870 = vmatpush.msra.mxu0 %v148
    %871 = vmatmul.f32.gmra.mxu0 %v853
    %v872 = vpop.f32.mrf.mxu0
    %v873 = vadd.f32 0.0, %v872
    %874 = vdwg.mxu0
    %875 = vrot.lane.b32.xlu0 %v728, 32
    %v876 = vpop.permute.xlu0 %875
    %v877 = vsel %vm160, %v876, 0
    %879 = vmatpush.msra.mxu0 0.0
    %880 = vmatpush.msra.mxu0 0.0
    %881 = vmatpush.msra.mxu0 0.0
    %882 = vmatpush.msra.mxu0 0.0
    %883 = vmatpush.msra.mxu0 0.0
    %884 = vmatpush.msra.mxu0 0.0
    %885 = vmatpush.msra.mxu0 0.0
    %886 = vmatpush.msra.mxu0 0.0
    %887 = vmatpush.msra.mxu0 0.0
    %888 = vmatpush.msra.mxu0 0.0
    %889 = vmatpush.msra.mxu0 0.0
    %890 = vmatpush.msra.mxu0 0.0
    %891 = vmatpush.msra.mxu0 %v156
    %892 = vmatpush.msra.mxu0 %v155
    %893 = vmatpush.msra.mxu0 %v154
    %894 = vmatpush.msra.mxu0 %v153
    %895 = vmatmul.f32.gmra.mxu0 %v877
    %v896 = vpop.f32.mrf.mxu0
    %v897 = vadd.f32 0.0, %v896
    %898 = vdwg.mxu0
    %v900 = vrot.slane %v897, 1
    %v903 = vadd.f32 %v850, %v897
    %v904 = vadd.f32 %v873, %v900
    %v905 = vtanh.pop %v903
    %v906 = vtanh.pop %v904
    %v909 = vrot.slane %v906, 7
    %v910 = vsel %vm415, %v909, %v905
    %s912 = scalar_lea.vmem [#allocation16], 4
    %913 = vst.msk [vmem:[%s912] sm:$0x3] %vm418, %v910
    %s914 = scalar_lea.vmem [#allocation4], 6
    %v915 = vld [vmem:[%s914] sm:$0x3]
    %v916 = vsel %vm160, %v910, 0
    %918 = vmatpush.msra.mxu0 0.0
    %919 = vmatpush.msra.mxu0 0.0
    %920 = vmatpush.msra.mxu0 0.0
    %921 = vmatpush.msra.mxu0 0.0
    %922 = vmatpush.msra.mxu0 0.0
    %923 = vmatpush.msra.mxu0 0.0
    %924 = vmatpush.msra.mxu0 0.0
    %925 = vmatpush.msra.mxu0 0.0
    %926 = vmatpush.msra.mxu0 0.0
    %927 = vmatpush.msra.mxu0 0.0
    %928 = vmatpush.msra.mxu0 0.0
    %929 = vmatpush.msra.mxu0 0.0
    %930 = vmatpush.msra.mxu0 %v152
    %931 = vmatpush.msra.mxu0 %v151
    %932 = vmatpush.msra.mxu0 %v150
    %933 = vmatpush.msra.mxu0 %v149
    %934 = vmatmul.f32.gmra.mxu0 %v916
    %v935 = vpop.f32.mrf.mxu0
    %v936 = vadd.f32 0.0, %v935
    %937 = vdwg.mxu0
    %v938 = vadd.f32 %v915, %v936
    %v939 = vxor.u32 %v938, 2147483648
    %v940 = vmul.f32 %v939, 1.442695
    %v941 = vpow.pop %v940
    %v942 = vadd.f32 %v941, 1.0
    %v943 = vrcp.pop %v942
    %v944 = vmul.f32 %v942, %v943
    %v945 = vsub.f32 1.0, %v944
    %v946 = vmul.f32 %v943, %v945
    %v947 = vadd.f32 %v943, %v946
    %vm948 = vweird.f32 %v942
    %vm949 = vweird.f32 %v943
    %vm950 = vmor %vm948, %vm949
    %v951 = vsel %vm950, %v943, %v947
    %v952 = vand.u32 2147483647, %v942
    %vm953 = vcmp.eq.f32.partialorder %v952, 8.507059e+37
    %v954 = vand.u32 %v942, 2147483648
    %v955 = vor.u32 1.1754944e-38, %v954
    %v956 = vsel %vm953, %v955, %v951
    %v957 = vmul.f32 1.0, %v956
    %v958 = vtanh.pop %v938
    %v959 = vmul.f32 %v957, %v722
    %961 = vrot.lane.b32.xlu0 %v958, 64
    %v962 = vpop.permute.xlu0 %961
    %v964 = vmul.f32 %v957, %v962
    %966 = vrot.lane.b32.xlu0 %v964, 32
    %v967 = vpop.permute.xlu0 %966
    %v969 = vadd.f32 %v959, %v967
    %v970 = vtanh.pop %v969
    %972 = vrot.lane.b32.xlu0 %v970, 64
    %v973 = vpop.permute.xlu0 %972
    %v975 = vmul.f32 %v957, %v973
    %v977 = vrot.slane %v975, 1
    %v978 = vperm.slane %v975, 0
    %979 = vrot.lane.b32.xlu0 %v978, 32
    %v980 = vpop.permute.xlu0 %979
    %v981 = vsel %vm160, %v980, 0
    %983 = vmatpush.xpose.msra.mxu0 0.0
    %984 = vmatpush.xpose.msra.mxu0 0.0
    %985 = vmatpush.xpose.msra.mxu0 0.0
    %986 = vmatpush.xpose.msra.mxu0 0.0
    %987 = vmatpush.xpose.msra.mxu0 0.0
    %988 = vmatpush.xpose.msra.mxu0 0.0
    %989 = vmatpush.xpose.msra.mxu0 0.0
    %990 = vmatpush.xpose.msra.mxu0 0.0
    %991 = vmatpush.xpose.msra.mxu0 0.0
    %992 = vmatpush.xpose.msra.mxu0 0.0
    %993 = vmatpush.xpose.msra.mxu0 0.0
    %994 = vmatpush.xpose.msra.mxu0 0.0
    %995 = vmatpush.xpose.msra.mxu0 0.0
    %996 = vmatpush.xpose.msra.mxu0 0.0
    %997 = vmatpush.xpose.msra.mxu0 0.0
    %998 = vmatpush.xpose.msra.mxu0 %v234
    %999 = vmatmul.f32.gmra.mxu0 %v981
    %v1000 = vpop.f32.mrf.mxu0
    %v1001 = vadd.f32 0.0, %v1000
    %1002 = vdwg.mxu0
    %v1003 = vperm.slane %v977, 0
    %1004 = vrot.lane.b32.xlu0 %v1003, 32
    %v1005 = vpop.permute.xlu0 %1004
    %v1006 = vsel %vm160, %v1005, 0
    %1008 = vmatpush.xpose.msra.mxu0 0.0
    %1009 = vmatpush.xpose.msra.mxu0 0.0
    %1010 = vmatpush.xpose.msra.mxu0 0.0
    %1011 = vmatpush.xpose.msra.mxu0 0.0
    %1012 = vmatpush.xpose.msra.mxu0 0.0
    %1013 = vmatpush.xpose.msra.mxu0 0.0
    %1014 = vmatpush.xpose.msra.mxu0 0.0
    %1015 = vmatpush.xpose.msra.mxu0 0.0
    %1016 = vmatpush.xpose.msra.mxu0 0.0
    %1017 = vmatpush.xpose.msra.mxu0 0.0
    %1018 = vmatpush.xpose.msra.mxu0 0.0
    %1019 = vmatpush.xpose.msra.mxu0 0.0
    %1020 = vmatpush.xpose.msra.mxu0 0.0
    %1021 = vmatpush.xpose.msra.mxu0 0.0
    %1022 = vmatpush.xpose.msra.mxu0 0.0
    %1023 = vmatpush.xpose.msra.mxu0 %v262
    %1024 = vmatmul.f32.gmra.mxu0 %v1006
    %v1025 = vpop.f32.mrf.mxu0
    %v1026 = vadd.f32 0.0, %v1025
    %1027 = vdwg.mxu0
    %v1028 = vsel %vm284, %v1001, -inf
    %1029 = vmax.xlane.f32.xlu0 %v1028
    %v1030 = vpop.xlane.xlu0 %1029
    %v1031 = vsel %vm284, %v1026, -inf
    %1032 = vmax.xlane.f32.xlu0 %v1031
    %v1033 = vpop.xlane.xlu0 %1032
    %v1034 = vsub.f32 %v1001, %v1030
    %v1035 = vsub.f32 %v1026, %v1033
    %v1036 = vmul.f32 %v1034, 1.442695
    %v1037 = vpow.pop %v1036
    %v1038 = vmul.f32 %v1035, 1.442695
    %v1039 = vpow.pop %v1038
    %v1040 = vsel %vm284, %v1037, 0.0
    %1041 = vadd.xlane.f32.xlu0 %v1040
    %v1042 = vpop.xlane.xlu0 %1041
    %v1043 = vsel %vm284, %v1039, 0.0
    %1044 = vadd.xlane.f32.xlu0 %v1043
    %v1045 = vpop.xlane.xlu0 %1044
    %v1046 = vrcp.pop %v1042
    %v1047 = vmul.f32 %v1042, %v1046
    %v1048 = vsub.f32 1.0, %v1047
    %v1049 = vmul.f32 %v1046, %v1048
    %v1050 = vadd.f32 %v1046, %v1049
    %vm1051 = vweird.f32 %v1042
    %vm1052 = vweird.f32 %v1046
    %vm1053 = vmor %vm1051, %vm1052
    %v1054 = vsel %vm1053, %v1046, %v1050
    %v1055 = vand.u32 2147483647, %v1042
    %vm1056 = vcmp.eq.f32.partialorder %v1055, 8.507059e+37
    %v1057 = vand.u32 %v1042, 2147483648
    %v1058 = vor.u32 1.1754944e-38, %v1057
    %v1059 = vsel %vm1056, %v1058, %v1054
    %v1060 = vmul.f32 %v1037, %v1059
    %v1061 = vrcp.pop %v1045
    %v1062 = vmul.f32 %v1045, %v1061
    %v1063 = vsub.f32 1.0, %v1062
    %v1064 = vmul.f32 %v1061, %v1063
    %v1065 = vadd.f32 %v1061, %v1064
    %vm1066 = vweird.f32 %v1045
    %vm1067 = vweird.f32 %v1061
    %vm1068 = vmor %vm1066, %vm1067
    %v1069 = vsel %vm1068, %v1061, %v1065
    %v1070 = vand.u32 2147483647, %v1045
    %vm1071 = vcmp.eq.f32.partialorder %v1070, 8.507059e+37
    %v1072 = vand.u32 %v1045, 2147483648
    %v1073 = vor.u32 1.1754944e-38, %v1072
    %v1074 = vsel %vm1071, %v1073, %v1069
    %v1075 = vmul.f32 %v1039, %v1074
    %v1077 = vsel %vm333, %v1060, 0
    %1079 = vmatpush.msra.mxu0 0.0
    %1080 = vmatpush.msra.mxu0 0.0
    %1081 = vmatpush.msra.mxu0 0.0
    %1082 = vmatpush.msra.mxu0 0.0
    %1083 = vmatpush.msra.mxu0 0.0
    %1084 = vmatpush.msra.mxu0 0.0
    %1085 = vmatpush.msra.mxu0 0.0
    %1086 = vmatpush.msra.mxu0 0.0
    %1087 = vmatpush.msra.mxu0 0.0
    %1088 = vmatpush.msra.mxu0 0.0
    %1089 = vmatpush.msra.mxu0 0.0
    %1090 = vmatpush.msra.mxu0 0.0
    %1091 = vmatpush.msra.mxu0 0.0
    %1092 = vmatpush.msra.mxu0 0.0
    %1093 = vmatpush.msra.mxu0 0.0
    %1094 = vmatpush.msra.mxu0 %v147
    %1095 = vmatmul.f32.gmra.mxu0 %v1077
    %v1096 = vpop.f32.mrf.mxu0
    %v1097 = vadd.f32 0.0, %v1096
    %1098 = vdwg.mxu0
    %v1100 = vsel %vm333, %v1075, 0
    %1102 = vmatpush.msra.mxu0 0.0
    %1103 = vmatpush.msra.mxu0 0.0
    %1104 = vmatpush.msra.mxu0 0.0
    %1105 = vmatpush.msra.mxu0 0.0
    %1106 = vmatpush.msra.mxu0 0.0
    %1107 = vmatpush.msra.mxu0 0.0
    %1108 = vmatpush.msra.mxu0 0.0
    %1109 = vmatpush.msra.mxu0 0.0
    %1110 = vmatpush.msra.mxu0 0.0
    %1111 = vmatpush.msra.mxu0 0.0
    %1112 = vmatpush.msra.mxu0 0.0
    %1113 = vmatpush.msra.mxu0 0.0
    %1114 = vmatpush.msra.mxu0 0.0
    %1115 = vmatpush.msra.mxu0 0.0
    %1116 = vmatpush.msra.mxu0 0.0
    %1117 = vmatpush.msra.mxu0 %v148
    %1118 = vmatmul.f32.gmra.mxu0 %v1100
    %v1119 = vpop.f32.mrf.mxu0
    %v1120 = vadd.f32 0.0, %v1119
    %1121 = vdwg.mxu0
    %1122 = vrot.lane.b32.xlu0 %v975, 32
    %v1123 = vpop.permute.xlu0 %1122
    %v1124 = vsel %vm160, %v1123, 0
    %1126 = vmatpush.msra.mxu0 0.0
    %1127 = vmatpush.msra.mxu0 0.0
    %1128 = vmatpush.msra.mxu0 0.0
    %1129 = vmatpush.msra.mxu0 0.0
    %1130 = vmatpush.msra.mxu0 0.0
    %1131 = vmatpush.msra.mxu0 0.0
    %1132 = vmatpush.msra.mxu0 0.0
    %1133 = vmatpush.msra.mxu0 0.0
    %1134 = vmatpush.msra.mxu0 0.0
    %1135 = vmatpush.msra.mxu0 0.0
    %1136 = vmatpush.msra.mxu0 0.0
    %1137 = vmatpush.msra.mxu0 0.0
    %1138 = vmatpush.msra.mxu0 %v156
    %1139 = vmatpush.msra.mxu0 %v155
    %1140 = vmatpush.msra.mxu0 %v154
    %1141 = vmatpush.msra.mxu0 %v153
    %1142 = vmatmul.f32.gmra.mxu0 %v1124
    %v1143 = vpop.f32.mrf.mxu0
    %v1144 = vadd.f32 0.0, %v1143
    %1145 = vdwg.mxu0
    %v1147 = vrot.slane %v1144, 1
    %v1150 = vadd.f32 %v1097, %v1144
    %v1151 = vadd.f32 %v1120, %v1147
    %v1152 = vtanh.pop %v1150
    %v1153 = vtanh.pop %v1151
    %v1156 = vrot.slane %v1153, 7
    %v1157 = vsel %vm415, %v1156, %v1152
    %s1159 = scalar_lea.vmem [#allocation16], 6
    %1160 = vst.msk [vmem:[%s1159] sm:$0x3] %vm418, %v1157
    %s1161 = scalar_lea.vmem [#allocation4], 8
    %v1162 = vld [vmem:[%s1161] sm:$0x3]
    %v1163 = vsel %vm160, %v1157, 0
    %1165 = vmatpush.msra.mxu0 0.0
    %1166 = vmatpush.msra.mxu0 0.0
    %1167 = vmatpush.msra.mxu0 0.0
    %1168 = vmatpush.msra.mxu0 0.0
    %1169 = vmatpush.msra.mxu0 0.0
    %1170 = vmatpush.msra.mxu0 0.0
    %1171 = vmatpush.msra.mxu0 0.0
    %1172 = vmatpush.msra.mxu0 0.0
    %1173 = vmatpush.msra.mxu0 0.0
    %1174 = vmatpush.msra.mxu0 0.0
    %1175 = vmatpush.msra.mxu0 0.0
    %1176 = vmatpush.msra.mxu0 0.0
    %1177 = vmatpush.msra.mxu0 %v152
    %1178 = vmatpush.msra.mxu0 %v151
    %1179 = vmatpush.msra.mxu0 %v150
    %1180 = vmatpush.msra.mxu0 %v149
    %1181 = vmatmul.f32.gmra.mxu0 %v1163
    %v1182 = vpop.f32.mrf.mxu0
    %v1183 = vadd.f32 0.0, %v1182
    %1184 = vdwg.mxu0
    %v1185 = vadd.f32 %v1162, %v1183
    %v1186 = vxor.u32 %v1185, 2147483648
    %v1187 = vmul.f32 %v1186, 1.442695
    %v1188 = vpow.pop %v1187
    %v1189 = vadd.f32 %v1188, 1.0
    %v1190 = vrcp.pop %v1189
    %v1191 = vmul.f32 %v1189, %v1190
    %v1192 = vsub.f32 1.0, %v1191
    %v1193 = vmul.f32 %v1190, %v1192
    %v1194 = vadd.f32 %v1190, %v1193
    %vm1195 = vweird.f32 %v1189
    %vm1196 = vweird.f32 %v1190
    %vm1197 = vmor %vm1195, %vm1196
    %v1198 = vsel %vm1197, %v1190, %v1194
    %v1199 = vand.u32 2147483647, %v1189
    %vm1200 = vcmp.eq.f32.partialorder %v1199, 8.507059e+37
    %v1201 = vand.u32 %v1189, 2147483648
    %v1202 = vor.u32 1.1754944e-38, %v1201
    %v1203 = vsel %vm1200, %v1202, %v1198
    %v1204 = vmul.f32 1.0, %v1203
    %v1205 = vtanh.pop %v1185
    %v1206 = vmul.f32 %v1204, %v969
    %1208 = vrot.lane.b32.xlu0 %v1205, 64
    %v1209 = vpop.permute.xlu0 %1208
    %v1211 = vmul.f32 %v1204, %v1209
    %1213 = vrot.lane.b32.xlu0 %v1211, 32
    %v1214 = vpop.permute.xlu0 %1213
    %v1216 = vadd.f32 %v1206, %v1214
    %v1217 = vtanh.pop %v1216
    %1219 = vrot.lane.b32.xlu0 %v1217, 64
    %v1220 = vpop.permute.xlu0 %1219
    %v1222 = vmul.f32 %v1204, %v1220
    %v1224 = vrot.slane %v1222, 1
    %v1225 = vperm.slane %v1222, 0
    %1226 = vrot.lane.b32.xlu0 %v1225, 32
    %v1227 = vpop.permute.xlu0 %1226
    %v1228 = vsel %vm160, %v1227, 0
    %1230 = vmatpush.xpose.msra.mxu0 0.0
    %1231 = vmatpush.xpose.msra.mxu0 0.0
    %1232 = vmatpush.xpose.msra.mxu0 0.0
    %1233 = vmatpush.xpose.msra.mxu0 0.0
    %1234 = vmatpush.xpose.msra.mxu0 0.0
    %1235 = vmatpush.xpose.msra.mxu0 0.0
    %1236 = vmatpush.xpose.msra.mxu0 0.0
    %1237 = vmatpush.xpose.msra.mxu0 0.0
    %1238 = vmatpush.xpose.msra.mxu0 0.0
    %1239 = vmatpush.xpose.msra.mxu0 0.0
    %1240 = vmatpush.xpose.msra.mxu0 0.0
    %1241 = vmatpush.xpose.msra.mxu0 0.0
    %1242 = vmatpush.xpose.msra.mxu0 0.0
    %1243 = vmatpush.xpose.msra.mxu0 0.0
    %1244 = vmatpush.xpose.msra.mxu0 0.0
    %1245 = vmatpush.xpose.msra.mxu0 %v234
    %1246 = vmatmul.f32.gmra.mxu0 %v1228
    %v1247 = vpop.f32.mrf.mxu0
    %v1248 = vadd.f32 0.0, %v1247
    %1249 = vdwg.mxu0
    %v1250 = vperm.slane %v1224, 0
    %1251 = vrot.lane.b32.xlu0 %v1250, 32
    %v1252 = vpop.permute.xlu0 %1251
    %v1253 = vsel %vm160, %v1252, 0
    %1255 = vmatpush.xpose.msra.mxu0 0.0
    %1256 = vmatpush.xpose.msra.mxu0 0.0
    %1257 = vmatpush.xpose.msra.mxu0 0.0
    %1258 = vmatpush.xpose.msra.mxu0 0.0
    %1259 = vmatpush.xpose.msra.mxu0 0.0
    %1260 = vmatpush.xpose.msra.mxu0 0.0
    %1261 = vmatpush.xpose.msra.mxu0 0.0
    %1262 = vmatpush.xpose.msra.mxu0 0.0
    %1263 = vmatpush.xpose.msra.mxu0 0.0
    %1264 = vmatpush.xpose.msra.mxu0 0.0
    %1265 = vmatpush.xpose.msra.mxu0 0.0
    %1266 = vmatpush.xpose.msra.mxu0 0.0
    %1267 = vmatpush.xpose.msra.mxu0 0.0
    %1268 = vmatpush.xpose.msra.mxu0 0.0
    %1269 = vmatpush.xpose.msra.mxu0 0.0
    %1270 = vmatpush.xpose.msra.mxu0 %v262
    %1271 = vmatmul.f32.gmra.mxu0 %v1253
    %v1272 = vpop.f32.mrf.mxu0
    %v1273 = vadd.f32 0.0, %v1272
    %1274 = vdwg.mxu0
    %v1275 = vsel %vm284, %v1248, -inf
    %1276 = vmax.xlane.f32.xlu0 %v1275
    %v1277 = vpop.xlane.xlu0 %1276
    %v1278 = vsel %vm284, %v1273, -inf
    %1279 = vmax.xlane.f32.xlu0 %v1278
    %v1280 = vpop.xlane.xlu0 %1279
    %v1281 = vsub.f32 %v1248, %v1277
    %v1282 = vsub.f32 %v1273, %v1280
    %v1283 = vmul.f32 %v1281, 1.442695
    %v1284 = vpow.pop %v1283
    %v1285 = vmul.f32 %v1282, 1.442695
    %v1286 = vpow.pop %v1285
    %v1287 = vsel %vm284, %v1284, 0.0
    %1288 = vadd.xlane.f32.xlu0 %v1287
    %v1289 = vpop.xlane.xlu0 %1288
    %v1290 = vsel %vm284, %v1286, 0.0
    %1291 = vadd.xlane.f32.xlu0 %v1290
    %v1292 = vpop.xlane.xlu0 %1291
    %v1293 = vrcp.pop %v1289
    %v1294 = vmul.f32 %v1289, %v1293
    %v1295 = vsub.f32 1.0, %v1294
    %v1296 = vmul.f32 %v1293, %v1295
    %v1297 = vadd.f32 %v1293, %v1296
    %vm1298 = vweird.f32 %v1289
    %vm1299 = vweird.f32 %v1293
    %vm1300 = vmor %vm1298, %vm1299
    %v1301 = vsel %vm1300, %v1293, %v1297
    %v1302 = vand.u32 2147483647, %v1289
    %vm1303 = vcmp.eq.f32.partialorder %v1302, 8.507059e+37
    %v1304 = vand.u32 %v1289, 2147483648
    %v1305 = vor.u32 1.1754944e-38, %v1304
    %v1306 = vsel %vm1303, %v1305, %v1301
    %v1307 = vmul.f32 %v1284, %v1306
    %v1308 = vrcp.pop %v1292
    %v1309 = vmul.f32 %v1292, %v1308
    %v1310 = vsub.f32 1.0, %v1309
    %v1311 = vmul.f32 %v1308, %v1310
    %v1312 = vadd.f32 %v1308, %v1311
    %vm1313 = vweird.f32 %v1292
    %vm1314 = vweird.f32 %v1308
    %vm1315 = vmor %vm1313, %vm1314
    %v1316 = vsel %vm1315, %v1308, %v1312
    %v1317 = vand.u32 2147483647, %v1292
    %vm1318 = vcmp.eq.f32.partialorder %v1317, 8.507059e+37
    %v1319 = vand.u32 %v1292, 2147483648
    %v1320 = vor.u32 1.1754944e-38, %v1319
    %v1321 = vsel %vm1318, %v1320, %v1316
    %v1322 = vmul.f32 %v1286, %v1321
    %v1324 = vsel %vm333, %v1307, 0
    %1326 = vmatpush.msra.mxu0 0.0
    %1327 = vmatpush.msra.mxu0 0.0
    %1328 = vmatpush.msra.mxu0 0.0
    %1329 = vmatpush.msra.mxu0 0.0
    %1330 = vmatpush.msra.mxu0 0.0
    %1331 = vmatpush.msra.mxu0 0.0
    %1332 = vmatpush.msra.mxu0 0.0
    %1333 = vmatpush.msra.mxu0 0.0
    %1334 = vmatpush.msra.mxu0 0.0
    %1335 = vmatpush.msra.mxu0 0.0
    %1336 = vmatpush.msra.mxu0 0.0
    %1337 = vmatpush.msra.mxu0 0.0
    %1338 = vmatpush.msra.mxu0 0.0
    %1339 = vmatpush.msra.mxu0 0.0
    %1340 = vmatpush.msra.mxu0 0.0
    %1341 = vmatpush.msra.mxu0 %v147
    %1342 = vmatmul.f32.gmra.mxu0 %v1324
    %v1343 = vpop.f32.mrf.mxu0
    %v1344 = vadd.f32 0.0, %v1343
    %1345 = vdwg.mxu0
    %v1347 = vsel %vm333, %v1322, 0
    %1349 = vmatpush.msra.mxu0 0.0
    %1350 = vmatpush.msra.mxu0 0.0
    %1351 = vmatpush.msra.mxu0 0.0
    %1352 = vmatpush.msra.mxu0 0.0
    %1353 = vmatpush.msra.mxu0 0.0
    %1354 = vmatpush.msra.mxu0 0.0
    %1355 = vmatpush.msra.mxu0 0.0
    %1356 = vmatpush.msra.mxu0 0.0
    %1357 = vmatpush.msra.mxu0 0.0
    %1358 = vmatpush.msra.mxu0 0.0
    %1359 = vmatpush.msra.mxu0 0.0
    %1360 = vmatpush.msra.mxu0 0.0
    %1361 = vmatpush.msra.mxu0 0.0
    %1362 = vmatpush.msra.mxu0 0.0
    %1363 = vmatpush.msra.mxu0 0.0
    %1364 = vmatpush.msra.mxu0 %v148
    %1365 = vmatmul.f32.gmra.mxu0 %v1347
    %v1366 = vpop.f32.mrf.mxu0
    %v1367 = vadd.f32 0.0, %v1366
    %1368 = vdwg.mxu0
    %1369 = vrot.lane.b32.xlu0 %v1222, 32
    %v1370 = vpop.permute.xlu0 %1369
    %v1371 = vsel %vm160, %v1370, 0
    %1373 = vmatpush.msra.mxu0 0.0
    %1374 = vmatpush.msra.mxu0 0.0
    %1375 = vmatpush.msra.mxu0 0.0
    %1376 = vmatpush.msra.mxu0 0.0
    %1377 = vmatpush.msra.mxu0 0.0
    %1378 = vmatpush.msra.mxu0 0.0
    %1379 = vmatpush.msra.mxu0 0.0
    %1380 = vmatpush.msra.mxu0 0.0
    %1381 = vmatpush.msra.mxu0 0.0
    %1382 = vmatpush.msra.mxu0 0.0
    %1383 = vmatpush.msra.mxu0 0.0
    %1384 = vmatpush.msra.mxu0 0.0
    %1385 = vmatpush.msra.mxu0 %v156
    %1386 = vmatpush.msra.mxu0 %v155
    %1387 = vmatpush.msra.mxu0 %v154
    %1388 = vmatpush.msra.mxu0 %v153
    %1389 = vmatmul.f32.gmra.mxu0 %v1371
    %v1390 = vpop.f32.mrf.mxu0
    %v1391 = vadd.f32 0.0, %v1390
    %1392 = vdwg.mxu0
    %v1394 = vrot.slane %v1391, 1
    %v1397 = vadd.f32 %v1344, %v1391
    %v1398 = vadd.f32 %v1367, %v1394
    %v1399 = vtanh.pop %v1397
    %v1400 = vtanh.pop %v1398
    %v1403 = vrot.slane %v1400, 7
    %v1404 = vsel %vm415, %v1403, %v1399
    %s1406 = scalar_lea.vmem [#allocation16], 8
    %1407 = vst.msk [vmem:[%s1406] sm:$0x3] %vm418, %v1404
    %s1408 = scalar_lea.vmem [#allocation4], 10
    %v1409 = vld [vmem:[%s1408] sm:$0x3]
    %v1410 = vsel %vm160, %v1404, 0
    %1412 = vmatpush.msra.mxu0 0.0
    %1413 = vmatpush.msra.mxu0 0.0
    %1414 = vmatpush.msra.mxu0 0.0
    %1415 = vmatpush.msra.mxu0 0.0
    %1416 = vmatpush.msra.mxu0 0.0
    %1417 = vmatpush.msra.mxu0 0.0
    %1418 = vmatpush.msra.mxu0 0.0
    %1419 = vmatpush.msra.mxu0 0.0
    %1420 = vmatpush.msra.mxu0 0.0
    %1421 = vmatpush.msra.mxu0 0.0
    %1422 = vmatpush.msra.mxu0 0.0
    %1423 = vmatpush.msra.mxu0 0.0
    %1424 = vmatpush.msra.mxu0 %v152
    %1425 = vmatpush.msra.mxu0 %v151
    %1426 = vmatpush.msra.mxu0 %v150
    %1427 = vmatpush.msra.mxu0 %v149
    %1428 = vmatmul.f32.gmra.mxu0 %v1410
    %v1429 = vpop.f32.mrf.mxu0
    %v1430 = vadd.f32 0.0, %v1429
    %1431 = vdwg.mxu0
    %v1432 = vadd.f32 %v1409, %v1430
    %v1433 = vxor.u32 %v1432, 2147483648
    %v1434 = vmul.f32 %v1433, 1.442695
    %v1435 = vpow.pop %v1434
    %v1436 = vadd.f32 %v1435, 1.0
    %v1437 = vrcp.pop %v1436
    %v1438 = vmul.f32 %v1436, %v1437
    %v1439 = vsub.f32 1.0, %v1438
    %v1440 = vmul.f32 %v1437, %v1439
    %v1441 = vadd.f32 %v1437, %v1440
    %vm1442 = vweird.f32 %v1436
    %vm1443 = vweird.f32 %v1437
    %vm1444 = vmor %vm1442, %vm1443
    %v1445 = vsel %vm1444, %v1437, %v1441
    %v1446 = vand.u32 2147483647, %v1436
    %vm1447 = vcmp.eq.f32.partialorder %v1446, 8.507059e+37
    %v1448 = vand.u32 %v1436, 2147483648
    %v1449 = vor.u32 1.1754944e-38, %v1448
    %v1450 = vsel %vm1447, %v1449, %v1445
    %v1451 = vmul.f32 1.0, %v1450
    %v1452 = vtanh.pop %v1432
    %v1453 = vmul.f32 %v1451, %v1216
    %1455 = vrot.lane.b32.xlu0 %v1452, 64
    %v1456 = vpop.permute.xlu0 %1455
    %v1458 = vmul.f32 %v1451, %v1456
    %1460 = vrot.lane.b32.xlu0 %v1458, 32
    %v1461 = vpop.permute.xlu0 %1460
    %v1463 = vadd.f32 %v1453, %v1461
    %v1464 = vtanh.pop %v1463
    %1466 = vrot.lane.b32.xlu0 %v1464, 64
    %v1467 = vpop.permute.xlu0 %1466
    %v1469 = vmul.f32 %v1451, %v1467
    %v1471 = vrot.slane %v1469, 1
    %v1472 = vperm.slane %v1469, 0
    %1473 = vrot.lane.b32.xlu0 %v1472, 32
    %v1474 = vpop.permute.xlu0 %1473
    %v1475 = vsel %vm160, %v1474, 0
    %1477 = vmatpush.xpose.msra.mxu0 0.0
    %1478 = vmatpush.xpose.msra.mxu0 0.0
    %1479 = vmatpush.xpose.msra.mxu0 0.0
    %1480 = vmatpush.xpose.msra.mxu0 0.0
    %1481 = vmatpush.xpose.msra.mxu0 0.0
    %1482 = vmatpush.xpose.msra.mxu0 0.0
    %1483 = vmatpush.xpose.msra.mxu0 0.0
    %1484 = vmatpush.xpose.msra.mxu0 0.0
    %1485 = vmatpush.xpose.msra.mxu0 0.0
    %1486 = vmatpush.xpose.msra.mxu0 0.0
    %1487 = vmatpush.xpose.msra.mxu0 0.0
    %1488 = vmatpush.xpose.msra.mxu0 0.0
    %1489 = vmatpush.xpose.msra.mxu0 0.0
    %1490 = vmatpush.xpose.msra.mxu0 0.0
    %1491 = vmatpush.xpose.msra.mxu0 0.0
    %1492 = vmatpush.xpose.msra.mxu0 %v234
    %1493 = vmatmul.f32.gmra.mxu0 %v1475
    %v1494 = vpop.f32.mrf.mxu0
    %v1495 = vadd.f32 0.0, %v1494
    %1496 = vdwg.mxu0
    %v1497 = vperm.slane %v1471, 0
    %1498 = vrot.lane.b32.xlu0 %v1497, 32
    %v1499 = vpop.permute.xlu0 %1498
    %v1500 = vsel %vm160, %v1499, 0
    %1502 = vmatpush.xpose.msra.mxu0 0.0
    %1503 = vmatpush.xpose.msra.mxu0 0.0
    %1504 = vmatpush.xpose.msra.mxu0 0.0
    %1505 = vmatpush.xpose.msra.mxu0 0.0
    %1506 = vmatpush.xpose.msra.mxu0 0.0
    %1507 = vmatpush.xpose.msra.mxu0 0.0
    %1508 = vmatpush.xpose.msra.mxu0 0.0
    %1509 = vmatpush.xpose.msra.mxu0 0.0
    %1510 = vmatpush.xpose.msra.mxu0 0.0
    %1511 = vmatpush.xpose.msra.mxu0 0.0
    %1512 = vmatpush.xpose.msra.mxu0 0.0
    %1513 = vmatpush.xpose.msra.mxu0 0.0
    %1514 = vmatpush.xpose.msra.mxu0 0.0
    %1515 = vmatpush.xpose.msra.mxu0 0.0
    %1516 = vmatpush.xpose.msra.mxu0 0.0
    %1517 = vmatpush.xpose.msra.mxu0 %v262
    %1518 = vmatmul.f32.gmra.mxu0 %v1500
    %v1519 = vpop.f32.mrf.mxu0
    %v1520 = vadd.f32 0.0, %v1519
    %1521 = vdwg.mxu0
    %v1522 = vsel %vm284, %v1495, -inf
    %1523 = vmax.xlane.f32.xlu0 %v1522
    %v1524 = vpop.xlane.xlu0 %1523
    %v1525 = vsel %vm284, %v1520, -inf
    %1526 = vmax.xlane.f32.xlu0 %v1525
    %v1527 = vpop.xlane.xlu0 %1526
    %v1528 = vsub.f32 %v1495, %v1524
    %v1529 = vsub.f32 %v1520, %v1527
    %v1530 = vmul.f32 %v1528, 1.442695
    %v1531 = vpow.pop %v1530
    %v1532 = vmul.f32 %v1529, 1.442695
    %v1533 = vpow.pop %v1532
    %v1534 = vsel %vm284, %v1531, 0.0
    %1535 = vadd.xlane.f32.xlu0 %v1534
    %v1536 = vpop.xlane.xlu0 %1535
    %v1537 = vsel %vm284, %v1533, 0.0
    %1538 = vadd.xlane.f32.xlu0 %v1537
    %v1539 = vpop.xlane.xlu0 %1538
    %v1540 = vrcp.pop %v1536
    %v1541 = vmul.f32 %v1536, %v1540
    %v1542 = vsub.f32 1.0, %v1541
    %v1543 = vmul.f32 %v1540, %v1542
    %v1544 = vadd.f32 %v1540, %v1543
    %vm1545 = vweird.f32 %v1536
    %vm1546 = vweird.f32 %v1540
    %vm1547 = vmor %vm1545, %vm1546
    %v1548 = vsel %vm1547, %v1540, %v1544
    %v1549 = vand.u32 2147483647, %v1536
    %vm1550 = vcmp.eq.f32.partialorder %v1549, 8.507059e+37
    %v1551 = vand.u32 %v1536, 2147483648
    %v1552 = vor.u32 1.1754944e-38, %v1551
    %v1553 = vsel %vm1550, %v1552, %v1548
    %v1554 = vmul.f32 %v1531, %v1553
    %v1555 = vrcp.pop %v1539
    %v1556 = vmul.f32 %v1539, %v1555
    %v1557 = vsub.f32 1.0, %v1556
    %v1558 = vmul.f32 %v1555, %v1557
    %v1559 = vadd.f32 %v1555, %v1558
    %vm1560 = vweird.f32 %v1539
    %vm1561 = vweird.f32 %v1555
    %vm1562 = vmor %vm1560, %vm1561
    %v1563 = vsel %vm1562, %v1555, %v1559
    %v1564 = vand.u32 2147483647, %v1539
    %vm1565 = vcmp.eq.f32.partialorder %v1564, 8.507059e+37
    %v1566 = vand.u32 %v1539, 2147483648
    %v1567 = vor.u32 1.1754944e-38, %v1566
    %v1568 = vsel %vm1565, %v1567, %v1563
    %v1569 = vmul.f32 %v1533, %v1568
    %v1571 = vsel %vm333, %v1554, 0
    %1573 = vmatpush.msra.mxu0 0.0
    %1574 = vmatpush.msra.mxu0 0.0
    %1575 = vmatpush.msra.mxu0 0.0
    %1576 = vmatpush.msra.mxu0 0.0
    %1577 = vmatpush.msra.mxu0 0.0
    %1578 = vmatpush.msra.mxu0 0.0
    %1579 = vmatpush.msra.mxu0 0.0
    %1580 = vmatpush.msra.mxu0 0.0
    %1581 = vmatpush.msra.mxu0 0.0
    %1582 = vmatpush.msra.mxu0 0.0
    %1583 = vmatpush.msra.mxu0 0.0
    %1584 = vmatpush.msra.mxu0 0.0
    %1585 = vmatpush.msra.mxu0 0.0
    %1586 = vmatpush.msra.mxu0 0.0
    %1587 = vmatpush.msra.mxu0 0.0
    %1588 = vmatpush.msra.mxu0 %v147
    %1589 = vmatmul.f32.gmra.mxu0 %v1571
    %v1590 = vpop.f32.mrf.mxu0
    %v1591 = vadd.f32 0.0, %v1590
    %1592 = vdwg.mxu0
    %v1594 = vsel %vm333, %v1569, 0
    %1596 = vmatpush.msra.mxu0 0.0
    %1597 = vmatpush.msra.mxu0 0.0
    %1598 = vmatpush.msra.mxu0 0.0
    %1599 = vmatpush.msra.mxu0 0.0
    %1600 = vmatpush.msra.mxu0 0.0
    %1601 = vmatpush.msra.mxu0 0.0
    %1602 = vmatpush.msra.mxu0 0.0
    %1603 = vmatpush.msra.mxu0 0.0
    %1604 = vmatpush.msra.mxu0 0.0
    %1605 = vmatpush.msra.mxu0 0.0
    %1606 = vmatpush.msra.mxu0 0.0
    %1607 = vmatpush.msra.mxu0 0.0
    %1608 = vmatpush.msra.mxu0 0.0
    %1609 = vmatpush.msra.mxu0 0.0
    %1610 = vmatpush.msra.mxu0 0.0
    %1611 = vmatpush.msra.mxu0 %v148
    %1612 = vmatmul.f32.gmra.mxu0 %v1594
    %v1613 = vpop.f32.mrf.mxu0
    %v1614 = vadd.f32 0.0, %v1613
    %1615 = vdwg.mxu0
    %1616 = vrot.lane.b32.xlu0 %v1469, 32
    %v1617 = vpop.permute.xlu0 %1616
    %v1618 = vsel %vm160, %v1617, 0
    %1620 = vmatpush.msra.mxu0 0.0
    %1621 = vmatpush.msra.mxu0 0.0
    %1622 = vmatpush.msra.mxu0 0.0
    %1623 = vmatpush.msra.mxu0 0.0
    %1624 = vmatpush.msra.mxu0 0.0
    %1625 = vmatpush.msra.mxu0 0.0
    %1626 = vmatpush.msra.mxu0 0.0
    %1627 = vmatpush.msra.mxu0 0.0
    %1628 = vmatpush.msra.mxu0 0.0
    %1629 = vmatpush.msra.mxu0 0.0
    %1630 = vmatpush.msra.mxu0 0.0
    %1631 = vmatpush.msra.mxu0 0.0
    %1632 = vmatpush.msra.mxu0 %v156
    %1633 = vmatpush.msra.mxu0 %v155
    %1634 = vmatpush.msra.mxu0 %v154
    %1635 = vmatpush.msra.mxu0 %v153
    %1636 = vmatmul.f32.gmra.mxu0 %v1618
    %v1637 = vpop.f32.mrf.mxu0
    %v1638 = vadd.f32 0.0, %v1637
    %1639 = vdwg.mxu0
    %v1641 = vrot.slane %v1638, 1
    %v1644 = vadd.f32 %v1591, %v1638
    %v1645 = vadd.f32 %v1614, %v1641
    %v1646 = vtanh.pop %v1644
    %v1647 = vtanh.pop %v1645
    %v1650 = vrot.slane %v1647, 7
    %v1651 = vsel %vm415, %v1650, %v1646
    %s1653 = scalar_lea.vmem [#allocation16], 10
    %1654 = vst.msk [vmem:[%s1653] sm:$0x3] %vm418, %v1651
    %s1655 = scalar_lea.vmem [#allocation4], 12
    %v1656 = vld [vmem:[%s1655] sm:$0x3]
    %v1657 = vsel %vm160, %v1651, 0
    %1659 = vmatpush.msra.mxu0 0.0
    %1660 = vmatpush.msra.mxu0 0.0
    %1661 = vmatpush.msra.mxu0 0.0
    %1662 = vmatpush.msra.mxu0 0.0
    %1663 = vmatpush.msra.mxu0 0.0
    %1664 = vmatpush.msra.mxu0 0.0
    %1665 = vmatpush.msra.mxu0 0.0
    %1666 = vmatpush.msra.mxu0 0.0
    %1667 = vmatpush.msra.mxu0 0.0
    %1668 = vmatpush.msra.mxu0 0.0
    %1669 = vmatpush.msra.mxu0 0.0
    %1670 = vmatpush.msra.mxu0 0.0
    %1671 = vmatpush.msra.mxu0 %v152
    %1672 = vmatpush.msra.mxu0 %v151
    %1673 = vmatpush.msra.mxu0 %v150
    %1674 = vmatpush.msra.mxu0 %v149
    %1675 = vmatmul.f32.gmra.mxu0 %v1657
    %v1676 = vpop.f32.mrf.mxu0
    %v1677 = vadd.f32 0.0, %v1676
    %1678 = vdwg.mxu0
    %v1679 = vadd.f32 %v1656, %v1677
    %v1680 = vxor.u32 %v1679, 2147483648
    %v1681 = vmul.f32 %v1680, 1.442695
    %v1682 = vpow.pop %v1681
    %v1683 = vadd.f32 %v1682, 1.0
    %v1684 = vrcp.pop %v1683
    %v1685 = vmul.f32 %v1683, %v1684
    %v1686 = vsub.f32 1.0, %v1685
    %v1687 = vmul.f32 %v1684, %v1686
    %v1688 = vadd.f32 %v1684, %v1687
    %vm1689 = vweird.f32 %v1683
    %vm1690 = vweird.f32 %v1684
    %vm1691 = vmor %vm1689, %vm1690
    %v1692 = vsel %vm1691, %v1684, %v1688
    %v1693 = vand.u32 2147483647, %v1683
    %vm1694 = vcmp.eq.f32.partialorder %v1693, 8.507059e+37
    %v1695 = vand.u32 %v1683, 2147483648
    %v1696 = vor.u32 1.1754944e-38, %v1695
    %v1697 = vsel %vm1694, %v1696, %v1692
    %v1698 = vmul.f32 1.0, %v1697
    %v1699 = vtanh.pop %v1679
    %v1700 = vmul.f32 %v1698, %v1463
    %1702 = vrot.lane.b32.xlu0 %v1699, 64
    %v1703 = vpop.permute.xlu0 %1702
    %v1705 = vmul.f32 %v1698, %v1703
    %1707 = vrot.lane.b32.xlu0 %v1705, 32
    %v1708 = vpop.permute.xlu0 %1707
    %v1710 = vadd.f32 %v1700, %v1708
    %v1711 = vtanh.pop %v1710
    %1713 = vrot.lane.b32.xlu0 %v1711, 64
    %v1714 = vpop.permute.xlu0 %1713
    %v1716 = vmul.f32 %v1698, %v1714
    %v1718 = vrot.slane %v1716, 1
    %v1719 = vperm.slane %v1716, 0
    %1720 = vrot.lane.b32.xlu0 %v1719, 32
    %v1721 = vpop.permute.xlu0 %1720
    %v1722 = vsel %vm160, %v1721, 0
    %1724 = vmatpush.xpose.msra.mxu0 0.0
    %1725 = vmatpush.xpose.msra.mxu0 0.0
    %1726 = vmatpush.xpose.msra.mxu0 0.0
    %1727 = vmatpush.xpose.msra.mxu0 0.0
    %1728 = vmatpush.xpose.msra.mxu0 0.0
    %1729 = vmatpush.xpose.msra.mxu0 0.0
    %1730 = vmatpush.xpose.msra.mxu0 0.0
    %1731 = vmatpush.xpose.msra.mxu0 0.0
    %1732 = vmatpush.xpose.msra.mxu0 0.0
    %1733 = vmatpush.xpose.msra.mxu0 0.0
    %1734 = vmatpush.xpose.msra.mxu0 0.0
    %1735 = vmatpush.xpose.msra.mxu0 0.0
    %1736 = vmatpush.xpose.msra.mxu0 0.0
    %1737 = vmatpush.xpose.msra.mxu0 0.0
    %1738 = vmatpush.xpose.msra.mxu0 0.0
    %1739 = vmatpush.xpose.msra.mxu0 %v234
    %1740 = vmatmul.f32.gmra.mxu0 %v1722
    %v1741 = vpop.f32.mrf.mxu0
    %v1742 = vadd.f32 0.0, %v1741
    %1743 = vdwg.mxu0
    %v1744 = vperm.slane %v1718, 0
    %1745 = vrot.lane.b32.xlu0 %v1744, 32
    %v1746 = vpop.permute.xlu0 %1745
    %v1747 = vsel %vm160, %v1746, 0
    %1749 = vmatpush.xpose.msra.mxu0 0.0
    %1750 = vmatpush.xpose.msra.mxu0 0.0
    %1751 = vmatpush.xpose.msra.mxu0 0.0
    %1752 = vmatpush.xpose.msra.mxu0 0.0
    %1753 = vmatpush.xpose.msra.mxu0 0.0
    %1754 = vmatpush.xpose.msra.mxu0 0.0
    %1755 = vmatpush.xpose.msra.mxu0 0.0
    %1756 = vmatpush.xpose.msra.mxu0 0.0
    %1757 = vmatpush.xpose.msra.mxu0 0.0
    %1758 = vmatpush.xpose.msra.mxu0 0.0
    %1759 = vmatpush.xpose.msra.mxu0 0.0
    %1760 = vmatpush.xpose.msra.mxu0 0.0
    %1761 = vmatpush.xpose.msra.mxu0 0.0
    %1762 = vmatpush.xpose.msra.mxu0 0.0
    %1763 = vmatpush.xpose.msra.mxu0 0.0
    %1764 = vmatpush.xpose.msra.mxu0 %v262
    %1765 = vmatmul.f32.gmra.mxu0 %v1747
    %v1766 = vpop.f32.mrf.mxu0
    %v1767 = vadd.f32 0.0, %v1766
    %1768 = vdwg.mxu0
    %v1769 = vsel %vm284, %v1742, -inf
    %1770 = vmax.xlane.f32.xlu0 %v1769
    %v1771 = vpop.xlane.xlu0 %1770
    %v1772 = vsel %vm284, %v1767, -inf
    %1773 = vmax.xlane.f32.xlu0 %v1772
    %v1774 = vpop.xlane.xlu0 %1773
    %v1775 = vsub.f32 %v1742, %v1771
    %v1776 = vsub.f32 %v1767, %v1774
    %v1777 = vmul.f32 %v1775, 1.442695
    %v1778 = vpow.pop %v1777
    %v1779 = vmul.f32 %v1776, 1.442695
    %v1780 = vpow.pop %v1779
    %v1781 = vsel %vm284, %v1778, 0.0
    %1782 = vadd.xlane.f32.xlu0 %v1781
    %v1783 = vpop.xlane.xlu0 %1782
    %v1784 = vsel %vm284, %v1780, 0.0
    %1785 = vadd.xlane.f32.xlu0 %v1784
    %v1786 = vpop.xlane.xlu0 %1785
    %v1787 = vrcp.pop %v1783
    %v1788 = vmul.f32 %v1783, %v1787
    %v1789 = vsub.f32 1.0, %v1788
    %v1790 = vmul.f32 %v1787, %v1789
    %v1791 = vadd.f32 %v1787, %v1790
    %vm1792 = vweird.f32 %v1783
    %vm1793 = vweird.f32 %v1787
    %vm1794 = vmor %vm1792, %vm1793
    %v1795 = vsel %vm1794, %v1787, %v1791
    %v1796 = vand.u32 2147483647, %v1783
    %vm1797 = vcmp.eq.f32.partialorder %v1796, 8.507059e+37
    %v1798 = vand.u32 %v1783, 2147483648
    %v1799 = vor.u32 1.1754944e-38, %v1798
    %v1800 = vsel %vm1797, %v1799, %v1795
    %v1801 = vmul.f32 %v1778, %v1800
    %v1802 = vrcp.pop %v1786
    %v1803 = vmul.f32 %v1786, %v1802
    %v1804 = vsub.f32 1.0, %v1803
    %v1805 = vmul.f32 %v1802, %v1804
    %v1806 = vadd.f32 %v1802, %v1805
    %vm1807 = vweird.f32 %v1786
    %vm1808 = vweird.f32 %v1802
    %vm1809 = vmor %vm1807, %vm1808
    %v1810 = vsel %vm1809, %v1802, %v1806
    %v1811 = vand.u32 2147483647, %v1786
    %vm1812 = vcmp.eq.f32.partialorder %v1811, 8.507059e+37
    %v1813 = vand.u32 %v1786, 2147483648
    %v1814 = vor.u32 1.1754944e-38, %v1813
    %v1815 = vsel %vm1812, %v1814, %v1810
    %v1816 = vmul.f32 %v1780, %v1815
    %v1818 = vsel %vm333, %v1801, 0
    %1820 = vmatpush.msra.mxu0 0.0
    %1821 = vmatpush.msra.mxu0 0.0
    %1822 = vmatpush.msra.mxu0 0.0
    %1823 = vmatpush.msra.mxu0 0.0
    %1824 = vmatpush.msra.mxu0 0.0
    %1825 = vmatpush.msra.mxu0 0.0
    %1826 = vmatpush.msra.mxu0 0.0
    %1827 = vmatpush.msra.mxu0 0.0
    %1828 = vmatpush.msra.mxu0 0.0
    %1829 = vmatpush.msra.mxu0 0.0
    %1830 = vmatpush.msra.mxu0 0.0
    %1831 = vmatpush.msra.mxu0 0.0
    %1832 = vmatpush.msra.mxu0 0.0
    %1833 = vmatpush.msra.mxu0 0.0
    %1834 = vmatpush.msra.mxu0 0.0
    %1835 = vmatpush.msra.mxu0 %v147
    %1836 = vmatmul.f32.gmra.mxu0 %v1818
    %v1837 = vpop.f32.mrf.mxu0
    %v1838 = vadd.f32 0.0, %v1837
    %1839 = vdwg.mxu0
    %v1841 = vsel %vm333, %v1816, 0
    %1843 = vmatpush.msra.mxu0 0.0
    %1844 = vmatpush.msra.mxu0 0.0
    %1845 = vmatpush.msra.mxu0 0.0
    %1846 = vmatpush.msra.mxu0 0.0
    %1847 = vmatpush.msra.mxu0 0.0
    %1848 = vmatpush.msra.mxu0 0.0
    %1849 = vmatpush.msra.mxu0 0.0
    %1850 = vmatpush.msra.mxu0 0.0
    %1851 = vmatpush.msra.mxu0 0.0
    %1852 = vmatpush.msra.mxu0 0.0
    %1853 = vmatpush.msra.mxu0 0.0
    %1854 = vmatpush.msra.mxu0 0.0
    %1855 = vmatpush.msra.mxu0 0.0
    %1856 = vmatpush.msra.mxu0 0.0
    %1857 = vmatpush.msra.mxu0 0.0
    %1858 = vmatpush.msra.mxu0 %v148
    %1859 = vmatmul.f32.gmra.mxu0 %v1841
    %v1860 = vpop.f32.mrf.mxu0
    %v1861 = vadd.f32 0.0, %v1860
    %1862 = vdwg.mxu0
    %1863 = vrot.lane.b32.xlu0 %v1716, 32
    %v1864 = vpop.permute.xlu0 %1863
    %v1865 = vsel %vm160, %v1864, 0
    %1867 = vmatpush.msra.mxu0 0.0
    %1868 = vmatpush.msra.mxu0 0.0
    %1869 = vmatpush.msra.mxu0 0.0
    %1870 = vmatpush.msra.mxu0 0.0
    %1871 = vmatpush.msra.mxu0 0.0
    %1872 = vmatpush.msra.mxu0 0.0
    %1873 = vmatpush.msra.mxu0 0.0
    %1874 = vmatpush.msra.mxu0 0.0
    %1875 = vmatpush.msra.mxu0 0.0
    %1876 = vmatpush.msra.mxu0 0.0
    %1877 = vmatpush.msra.mxu0 0.0
    %1878 = vmatpush.msra.mxu0 0.0
    %1879 = vmatpush.msra.mxu0 %v156
    %1880 = vmatpush.msra.mxu0 %v155
    %1881 = vmatpush.msra.mxu0 %v154
    %1882 = vmatpush.msra.mxu0 %v153
    %1883 = vmatmul.f32.gmra.mxu0 %v1865
    %v1884 = vpop.f32.mrf.mxu0
    %v1885 = vadd.f32 0.0, %v1884
    %1886 = vdwg.mxu0
    %v1888 = vrot.slane %v1885, 1
    %v1891 = vadd.f32 %v1838, %v1885
    %v1892 = vadd.f32 %v1861, %v1888
    %v1893 = vtanh.pop %v1891
    %v1894 = vtanh.pop %v1892
    %v1897 = vrot.slane %v1894, 7
    %v1898 = vsel %vm415, %v1897, %v1893
    %s1900 = scalar_lea.vmem [#allocation16], 12
    %1901 = vst.msk [vmem:[%s1900] sm:$0x3] %vm418, %v1898
    %s1902 = scalar_lea.vmem [#allocation4], 14
    %v1903 = vld [vmem:[%s1902] sm:$0x3]
    %v1904 = vsel %vm160, %v1898, 0
    %1906 = vmatpush.msra.mxu0 0.0
    %1907 = vmatpush.msra.mxu0 0.0
    %1908 = vmatpush.msra.mxu0 0.0
    %1909 = vmatpush.msra.mxu0 0.0
    %1910 = vmatpush.msra.mxu0 0.0
    %1911 = vmatpush.msra.mxu0 0.0
    %1912 = vmatpush.msra.mxu0 0.0
    %1913 = vmatpush.msra.mxu0 0.0
    %1914 = vmatpush.msra.mxu0 0.0
    %1915 = vmatpush.msra.mxu0 0.0
    %1916 = vmatpush.msra.mxu0 0.0
    %1917 = vmatpush.msra.mxu0 0.0
    %1918 = vmatpush.msra.mxu0 %v152
    %1919 = vmatpush.msra.mxu0 %v151
    %1920 = vmatpush.msra.mxu0 %v150
    %1921 = vmatpush.msra.mxu0 %v149
    %1922 = vmatmul.f32.gmra.mxu0 %v1904
    %v1923 = vpop.f32.mrf.mxu0
    %v1924 = vadd.f32 0.0, %v1923
    %1925 = vdwg.mxu0
    %v1926 = vadd.f32 %v1903, %v1924
    %v1927 = vxor.u32 %v1926, 2147483648
    %v1928 = vmul.f32 %v1927, 1.442695
    %v1929 = vpow.pop %v1928
    %v1930 = vadd.f32 %v1929, 1.0
    %v1931 = vrcp.pop %v1930
    %v1932 = vmul.f32 %v1930, %v1931
    %v1933 = vsub.f32 1.0, %v1932
    %v1934 = vmul.f32 %v1931, %v1933
    %v1935 = vadd.f32 %v1931, %v1934
    %vm1936 = vweird.f32 %v1930
    %vm1937 = vweird.f32 %v1931
    %vm1938 = vmor %vm1936, %vm1937
    %v1939 = vsel %vm1938, %v1931, %v1935
    %v1940 = vand.u32 2147483647, %v1930
    %vm1941 = vcmp.eq.f32.partialorder %v1940, 8.507059e+37
    %v1942 = vand.u32 %v1930, 2147483648
    %v1943 = vor.u32 1.1754944e-38, %v1942
    %v1944 = vsel %vm1941, %v1943, %v1939
    %v1945 = vmul.f32 1.0, %v1944
    %v1946 = vtanh.pop %v1926
    %v1947 = vmul.f32 %v1945, %v1710
    %1949 = vrot.lane.b32.xlu0 %v1946, 64
    %v1950 = vpop.permute.xlu0 %1949
    %v1952 = vmul.f32 %v1945, %v1950
    %1954 = vrot.lane.b32.xlu0 %v1952, 32
    %v1955 = vpop.permute.xlu0 %1954
    %v1957 = vadd.f32 %v1947, %v1955
    %v1958 = vtanh.pop %v1957
    %1960 = vrot.lane.b32.xlu0 %v1958, 64
    %v1961 = vpop.permute.xlu0 %1960
    %v1963 = vmul.f32 %v1945, %v1961
    %v1965 = vrot.slane %v1963, 1
    %v1966 = vperm.slane %v1963, 0
    %1967 = vrot.lane.b32.xlu0 %v1966, 32
    %v1968 = vpop.permute.xlu0 %1967
    %v1969 = vsel %vm160, %v1968, 0
    %1971 = vmatpush.xpose.msra.mxu0 0.0
    %1972 = vmatpush.xpose.msra.mxu0 0.0
    %1973 = vmatpush.xpose.msra.mxu0 0.0
    %1974 = vmatpush.xpose.msra.mxu0 0.0
    %1975 = vmatpush.xpose.msra.mxu0 0.0
    %1976 = vmatpush.xpose.msra.mxu0 0.0
    %1977 = vmatpush.xpose.msra.mxu0 0.0
    %1978 = vmatpush.xpose.msra.mxu0 0.0
    %1979 = vmatpush.xpose.msra.mxu0 0.0
    %1980 = vmatpush.xpose.msra.mxu0 0.0
    %1981 = vmatpush.xpose.msra.mxu0 0.0
    %1982 = vmatpush.xpose.msra.mxu0 0.0
    %1983 = vmatpush.xpose.msra.mxu0 0.0
    %1984 = vmatpush.xpose.msra.mxu0 0.0
    %1985 = vmatpush.xpose.msra.mxu0 0.0
    %1986 = vmatpush.xpose.msra.mxu0 %v234
    %1987 = vmatmul.f32.gmra.mxu0 %v1969
    %v1988 = vpop.f32.mrf.mxu0
    %v1989 = vadd.f32 0.0, %v1988
    %1990 = vdwg.mxu0
    %v1991 = vperm.slane %v1965, 0
    %1992 = vrot.lane.b32.xlu0 %v1991, 32
    %v1993 = vpop.permute.xlu0 %1992
    %v1994 = vsel %vm160, %v1993, 0
    %1996 = vmatpush.xpose.msra.mxu0 0.0
    %1997 = vmatpush.xpose.msra.mxu0 0.0
    %1998 = vmatpush.xpose.msra.mxu0 0.0
    %1999 = vmatpush.xpose.msra.mxu0 0.0
    %2000 = vmatpush.xpose.msra.mxu0 0.0
    %2001 = vmatpush.xpose.msra.mxu0 0.0
    %2002 = vmatpush.xpose.msra.mxu0 0.0
    %2003 = vmatpush.xpose.msra.mxu0 0.0
    %2004 = vmatpush.xpose.msra.mxu0 0.0
    %2005 = vmatpush.xpose.msra.mxu0 0.0
    %2006 = vmatpush.xpose.msra.mxu0 0.0
    %2007 = vmatpush.xpose.msra.mxu0 0.0
    %2008 = vmatpush.xpose.msra.mxu0 0.0
    %2009 = vmatpush.xpose.msra.mxu0 0.0
    %2010 = vmatpush.xpose.msra.mxu0 0.0
    %2011 = vmatpush.xpose.msra.mxu0 %v262
    %2012 = vmatmul.f32.gmra.mxu0 %v1994
    %v2013 = vpop.f32.mrf.mxu0
    %v2014 = vadd.f32 0.0, %v2013
    %2015 = vdwg.mxu0
    %v2016 = vsel %vm284, %v1989, -inf
    %2017 = vmax.xlane.f32.xlu0 %v2016
    %v2018 = vpop.xlane.xlu0 %2017
    %v2019 = vsel %vm284, %v2014, -inf
    %2020 = vmax.xlane.f32.xlu0 %v2019
    %v2021 = vpop.xlane.xlu0 %2020
    %v2022 = vsub.f32 %v1989, %v2018
    %v2023 = vsub.f32 %v2014, %v2021
    %v2024 = vmul.f32 %v2022, 1.442695
    %v2025 = vpow.pop %v2024
    %v2026 = vmul.f32 %v2023, 1.442695
    %v2027 = vpow.pop %v2026
    %v2028 = vsel %vm284, %v2025, 0.0
    %2029 = vadd.xlane.f32.xlu0 %v2028
    %v2030 = vpop.xlane.xlu0 %2029
    %v2031 = vsel %vm284, %v2027, 0.0
    %2032 = vadd.xlane.f32.xlu0 %v2031
    %v2033 = vpop.xlane.xlu0 %2032
    %v2034 = vrcp.pop %v2030
    %v2035 = vmul.f32 %v2030, %v2034
    %v2036 = vsub.f32 1.0, %v2035
    %v2037 = vmul.f32 %v2034, %v2036
    %v2038 = vadd.f32 %v2034, %v2037
    %vm2039 = vweird.f32 %v2030
    %vm2040 = vweird.f32 %v2034
    %vm2041 = vmor %vm2039, %vm2040
    %v2042 = vsel %vm2041, %v2034, %v2038
    %v2043 = vand.u32 2147483647, %v2030
    %vm2044 = vcmp.eq.f32.partialorder %v2043, 8.507059e+37
    %v2045 = vand.u32 %v2030, 2147483648
    %v2046 = vor.u32 1.1754944e-38, %v2045
    %v2047 = vsel %vm2044, %v2046, %v2042
    %v2048 = vmul.f32 %v2025, %v2047
    %v2049 = vrcp.pop %v2033
    %v2050 = vmul.f32 %v2033, %v2049
    %v2051 = vsub.f32 1.0, %v2050
    %v2052 = vmul.f32 %v2049, %v2051
    %v2053 = vadd.f32 %v2049, %v2052
    %vm2054 = vweird.f32 %v2033
    %vm2055 = vweird.f32 %v2049
    %vm2056 = vmor %vm2054, %vm2055
    %v2057 = vsel %vm2056, %v2049, %v2053
    %v2058 = vand.u32 2147483647, %v2033
    %vm2059 = vcmp.eq.f32.partialorder %v2058, 8.507059e+37
    %v2060 = vand.u32 %v2033, 2147483648
    %v2061 = vor.u32 1.1754944e-38, %v2060
    %v2062 = vsel %vm2059, %v2061, %v2057
    %v2063 = vmul.f32 %v2027, %v2062
    %v2065 = vsel %vm333, %v2048, 0
    %2067 = vmatpush.msra.mxu0 0.0
    %2068 = vmatpush.msra.mxu0 0.0
    %2069 = vmatpush.msra.mxu0 0.0
    %2070 = vmatpush.msra.mxu0 0.0
    %2071 = vmatpush.msra.mxu0 0.0
    %2072 = vmatpush.msra.mxu0 0.0
    %2073 = vmatpush.msra.mxu0 0.0
    %2074 = vmatpush.msra.mxu0 0.0
    %2075 = vmatpush.msra.mxu0 0.0
    %2076 = vmatpush.msra.mxu0 0.0
    %2077 = vmatpush.msra.mxu0 0.0
    %2078 = vmatpush.msra.mxu0 0.0
    %2079 = vmatpush.msra.mxu0 0.0
    %2080 = vmatpush.msra.mxu0 0.0
    %2081 = vmatpush.msra.mxu0 0.0
    %2082 = vmatpush.msra.mxu0 %v147
    %2083 = vmatmul.f32.gmra.mxu0 %v2065
    %v2084 = vpop.f32.mrf.mxu0
    %v2085 = vadd.f32 0.0, %v2084
    %2086 = vdwg.mxu0
    %v2088 = vsel %vm333, %v2063, 0
    %2090 = vmatpush.msra.mxu0 0.0
    %2091 = vmatpush.msra.mxu0 0.0
    %2092 = vmatpush.msra.mxu0 0.0
    %2093 = vmatpush.msra.mxu0 0.0
    %2094 = vmatpush.msra.mxu0 0.0
    %2095 = vmatpush.msra.mxu0 0.0
    %2096 = vmatpush.msra.mxu0 0.0
    %2097 = vmatpush.msra.mxu0 0.0
    %2098 = vmatpush.msra.mxu0 0.0
    %2099 = vmatpush.msra.mxu0 0.0
    %2100 = vmatpush.msra.mxu0 0.0
    %2101 = vmatpush.msra.mxu0 0.0
    %2102 = vmatpush.msra.mxu0 0.0
    %2103 = vmatpush.msra.mxu0 0.0
    %2104 = vmatpush.msra.mxu0 0.0
    %2105 = vmatpush.msra.mxu0 %v148
    %2106 = vmatmul.f32.gmra.mxu0 %v2088
    %v2107 = vpop.f32.mrf.mxu0
    %v2108 = vadd.f32 0.0, %v2107
    %2109 = vdwg.mxu0
    %2110 = vrot.lane.b32.xlu0 %v1963, 32
    %v2111 = vpop.permute.xlu0 %2110
    %v2112 = vsel %vm160, %v2111, 0
    %2114 = vmatpush.msra.mxu0 0.0
    %2115 = vmatpush.msra.mxu0 0.0
    %2116 = vmatpush.msra.mxu0 0.0
    %2117 = vmatpush.msra.mxu0 0.0
    %2118 = vmatpush.msra.mxu0 0.0
    %2119 = vmatpush.msra.mxu0 0.0
    %2120 = vmatpush.msra.mxu0 0.0
    %2121 = vmatpush.msra.mxu0 0.0
    %2122 = vmatpush.msra.mxu0 0.0
    %2123 = vmatpush.msra.mxu0 0.0
    %2124 = vmatpush.msra.mxu0 0.0
    %2125 = vmatpush.msra.mxu0 0.0
    %2126 = vmatpush.msra.mxu0 %v156
    %2127 = vmatpush.msra.mxu0 %v155
    %2128 = vmatpush.msra.mxu0 %v154
    %2129 = vmatpush.msra.mxu0 %v153
    %2130 = vmatmul.f32.gmra.mxu0 %v2112
    %v2131 = vpop.f32.mrf.mxu0
    %v2132 = vadd.f32 0.0, %v2131
    %2133 = vdwg.mxu0
    %v2135 = vrot.slane %v2132, 1
    %v2138 = vadd.f32 %v2085, %v2132
    %v2139 = vadd.f32 %v2108, %v2135
    %v2140 = vtanh.pop %v2138
    %v2141 = vtanh.pop %v2139
    %v2144 = vrot.slane %v2141, 7
    %v2145 = vsel %vm415, %v2144, %v2140
    %s2147 = scalar_lea.vmem [#allocation16], 14
    %2148 = vst.msk [vmem:[%s2147] sm:$0x3] %vm418, %v2145
    %2149 = vst.msk [vmem:[#allocation2] sm:$0x3] %vm418, %v2145
    %2151 = vrot.lane.b32.xlu0 %v1957, 96
    %v2152 = vpop.permute.xlu0 %2151
    %2154 = vst.msk [vmem:[#allocation3] sm:$0x3] %vm418, %v2152
    // Predicated region
    $region62: #{tpu_custom_call.1} parent=1 // pred_check
      %p2155 = pneg %p136
    $region63: #{tpu_custom_call.1} parent=1 // pred_check_branch
      %2157 = sbr.rel (%p2155) target = $region65
    $region64: #{tpu_custom_call.1} parent=1 // pred_region
      %2158 = vst.msk [vmem:[#allocation17] sm:$0x3] %vm418, %v2145
      %2159 = vst.msk [vmem:[#allocation19] sm:$0x3] %vm418, %v2152
    $region65: #{tpu_custom_call.1} parent=1 // pred_fallthru
      _
    // Predicated region
    $region66: #{tpu_custom_call.1} parent=1 // pred_check
      _
    $region67: #{tpu_custom_call.1} parent=1 // pred_check_branch
      %2161 = sbr.rel (0) target = $region69
    $region68: #{tpu_custom_call.1} parent=1 // pred_region
      %2163 = vsyncadd [#allocation6], 0
      %s2164 = sshll.u32 [#allocation16], 4
      %s2165 = int_to_ptr.vmem [resolvable:$true] %s2164
      %s2166 = sshll.u32 %s7, 4
      %s2167 = int_to_ptr.hbm [resolvable:$true] %s2166
      %2172 = dma.vmem_to_hbm [thread:$0]  %s2165, 256, %s2167, [#allocation6], 32, 32, 2
    $region69: #{tpu_custom_call.1} parent=1 // pred_fallthru
      _
    // Predicated region
    $region70: #{tpu_custom_call.1} parent=1 // pred_check
      _
    $region71: #{tpu_custom_call.1} parent=1 // pred_check_branch
      %2174 = sbr.rel (0) target = $region73
    $region72: #{tpu_custom_call.1} parent=1 // pred_region
      %2176 = vsyncadd [#allocation18], 0
      %s2178 = sshll.u32 [#allocation17], 4
      %s2179 = int_to_ptr.vmem [resolvable:$true] %s2178
      %s2180 = sshll.u32 %s8, 4
      %s2181 = int_to_ptr.hbm [resolvable:$true] %s2180
      %2183 = dma.vmem_to_hbm [thread:$0]  %s2179, 32, %s2181, [#allocation18]
    $region73: #{tpu_custom_call.1} parent=1 // pred_fallthru
      _
    // Predicated region
    $region74: #{tpu_custom_call.1} parent=1 // pred_check
      _
    $region75: #{tpu_custom_call.1} parent=1 // pred_check_branch
      %2185 = sbr.rel (0) target = $region77
    $region76: #{tpu_custom_call.1} parent=1 // pred_region
      %2187 = vsyncadd [#allocation18], 0
      %s2189 = sshll.u32 [#allocation19], 4
      %s2190 = int_to_ptr.vmem [resolvable:$true] %s2189
      %s2191 = sshll.u32 %s9, 4
      %s2192 = int_to_ptr.hbm [resolvable:$true] %s2191
      %2194 = dma.vmem_to_hbm [thread:$0]  %s2190, 32, %s2192, [#allocation18]
    $region77: #{tpu_custom_call.1} parent=1 // pred_fallthru
      _
    // Predicated region
    $region78: #{tpu_custom_call.1} parent=1 // pred_check
      _
    $region79: #{tpu_custom_call.1} parent=1 // pred_check_branch
      %2196 = sbr.rel (0) target = $region81
    $region80: #{tpu_custom_call.1} parent=1 // pred_region
      %2198 = dma.done [#allocation6], 256
    $region81: #{tpu_custom_call.1} parent=1 // pred_fallthru
      _
    // Predicated region
    $region82: #{tpu_custom_call.1} parent=1 // pred_check
      _
    $region83: #{tpu_custom_call.1} parent=1 // pred_check_branch
      %2200 = sbr.rel (0) target = $region85
    $region84: #{tpu_custom_call.1} parent=1 // pred_region
      %2202 = dma.done [#allocation18], 32
    $region85: #{tpu_custom_call.1} parent=1 // pred_fallthru
      _
    // Predicated region
    $region86: #{tpu_custom_call.1} parent=1 // pred_check
      _
    $region87: #{tpu_custom_call.1} parent=1 // pred_check_branch
      %2204 = sbr.rel (0) target = $region89
    $region88: #{tpu_custom_call.1} parent=1 // pred_region
      %2206 = dma.done [#allocation18], 32
    $region89: #{tpu_custom_call.1} parent=1 // pred_fallthru
      _
    %2207 = vsyncpa [#allocation5], 1
    %2208 = vsyncpa [#allocation8], 1
    %2209 = vsyncpa [#allocation11], 1
    %2210 = vsyncpa [#allocation14], 1
    %2211 = vsyncpa [#allocation6], 1
    %2212 = vsyncpa [#allocation18], 1

</llo_original>
